<compile_context>
chip_gen: v5e
topology: v5e:2x2
jax: 0.10.0
libtpu: 0.0.40
codegen_flags: <defaults>
</compile_context>

<pallas_src>
import functools
import math

import jax
import jax.numpy as jnp
import numpy as np
from jax import lax
from jax.experimental import pallas as pl
from jax.experimental.pallas import tpu as pltpu

LN_EPS = 1e-5


def _layernorm_1pass(x, w, b, inv_c):
    """One-pass LayerNorm over the last (channel) axis, f32."""
    mu = jnp.sum(x, axis=-1, keepdims=True) * inv_c
    ex2 = jnp.sum(x * x, axis=-1, keepdims=True) * inv_c
    var = ex2 - mu * mu
    return (x - mu) * lax.rsqrt(var + LN_EPS) * w + b


def _triangle_kernel(pair_ref, mask_ref,
                     ln1_w_ref, ln1_b_ref,
                     w_fused_ref,
                     ln2_w_ref, ln2_b_ref,
                     outp_w_ref,
                     out_ref,
                     a_sc, b_sc, gsig_sc,
                     *, n_tok: int, c_pair: int, block_i: int, row_tile: int):
    N, C = n_tok, c_pair
    NN = N * N
    inv_c = 1.0 / C
    TR = row_tile
    block_rows = block_i * N

    ln1_w = ln1_w_ref[...]
    ln1_b = ln1_b_ref[...]

    # ---- phase 1: LayerNorm1 + fused (proj | gate | gating_linear) matmul --
    # w_fused columns: [0,C)=proj_a, [C,2C)=proj_b, [2C,3C)=gate_a,
    #                  [3C,4C)=gate_b, [4C,5C)=gating_linear.
    n_row_tiles = NN // TR

    @pl.loop(0, n_row_tiles)
    def _(t):
        r0 = t * TR
        if TR % 8 == 0:
            r0 = pl.multiple_of(r0, 8)
        x_t = pair_ref[pl.ds(r0, TR), :]                       # [TR, C] f32
        nrm = _layernorm_1pass(x_t, ln1_w, ln1_b, inv_c).astype(jnp.bfloat16)
        fused = jnp.dot(nrm, w_fused_ref[...],
                        preferred_element_type=jnp.float32)    # [TR, 5C] f32
        m_t = mask_ref[pl.ds(r0, TR), :]                       # [TR, 1]
        a_sc[pl.ds(r0, TR), :] = (fused[:, 0 * C:1 * C] * m_t
                                  * jax.nn.sigmoid(fused[:, 2 * C:3 * C]))
        b_sc[pl.ds(r0, TR), :] = (fused[:, 1 * C:2 * C] * m_t
                                  * jax.nn.sigmoid(fused[:, 3 * C:4 * C]))
        gsig_sc[pl.ds(r0, TR), :] = jax.nn.sigmoid(fused[:, 4 * C:])

    # ---- phase 2: triangle einsum + center LN + output proj + gating -------
    # out[i, j, c] = sum_k a[(k, j), c] * b[(k, i), c]
    ln2_w = ln2_w_ref[...]
    ln2_b = ln2_b_ref[...]
    n_i_blocks = N // block_i

    @pl.loop(0, n_i_blocks)
    def _(ib):
        i0 = ib * block_i

        def k_step(k, acc):
            r = k * N
            if N % 8 == 0:
                r = pl.multiple_of(r, 8)
            a_k = a_sc[pl.ds(r, N), :]                         # [N, C]
            rb = r + i0
            if (N % 8 == 0) and (block_i % 8 == 0):
                rb = pl.multiple_of(rb, 8)
            b_k = b_sc[pl.ds(rb, block_i), :]                  # [block_i, C]
            return acc + b_k[:, None, :] * a_k[None, :, :]     # [block_i,N,C]

        acc = lax.fori_loop(0, N, k_step,
                            jnp.zeros((block_i, N, C), jnp.float32),
                            unroll=True)
        tri = acc.reshape(block_rows, C)                       # rows = (i, j)
        trin = _layernorm_1pass(tri, ln2_w, ln2_b, inv_c)
        out = jnp.dot(trin.astype(jnp.bfloat16), outp_w_ref[...],
                      preferred_element_type=jnp.float32)      # [block_rows,C]

        o0 = ib * block_rows
        if block_rows % 8 == 0:
            o0 = pl.multiple_of(o0, 8)
        out = out * gsig_sc[pl.ds(o0, block_rows), :]
        out_ref[pl.ds(o0, block_rows), :] = out.astype(out_ref.dtype)


def _pick_block_i(n, c):
    """Largest divisor of n whose [block_i, n, c] f32 accumulator <= 64 KiB
    (16 vregs) and whose output block rows are sublane-aligned."""
    cands = [bi for bi in range(1, n + 1)
             if n % bi == 0 and (bi * n) % 8 == 0
             and bi * n * c * 4 <= 64 * 1024]
    return max(cands) if cands else n


def _pick_row_tile(nn, five_c):
    """Largest 8-aligned divisor of nn whose [tile, 5C] f32 matmul output
    stays within ~48 vregs (avoids spilling the fused projection output)."""
    if nn % 8 != 0:
        return nn
    best = 8
    for tr in range(8, nn + 1, 8):
        if nn % tr == 0 and tr * five_c * 4 <= 192 * 1024:
            best = tr
    return best


def triangle_multiplication(pair, mask, params):
    """pair: [N, N, C], mask: [N, N]  ->  [N, N, C]"""
    N1, N2, C = pair.shape
    assert N1 == N2, "kernel assumes S == T (dp_size = 1)"
    N = N1
    NN = N * N

    block_i = _pick_block_i(N, C)
    row_tile = _pick_row_tile(NN, 5 * C)

    pair2 = pair.reshape(NN, C).astype(jnp.float32)
    mask2 = mask.reshape(NN, 1).astype(jnp.float32)

    # De-interleave the torch Linear(C, 2C) weights: after permute(2,0,1) +
    # reshape(C, 2, S, T) + chunk, `a` takes output rows 0::2, `b` rows 1::2.
    def split_w(w):                                            # [2C,C] -> [C,2C]
        return jnp.concatenate([w[0::2].T, w[1::2].T], axis=-1)

    w_fused = jnp.concatenate(
        [split_w(params["projection_w"]),                      # proj a | b
         split_w(params["gate_w"]),                            # gate a | b
         params["gating_linear_w"].T],                         # gating_linear
        axis=-1).astype(jnp.bfloat16)                          # [C, 5C]
    outp_w = params["output_projection_w"].T.astype(jnp.bfloat16)   # [C, C]
    ln1_w = params["ln1_w"].reshape(1, C).astype(jnp.float32)
    ln1_b = params["ln1_b"].reshape(1, C).astype(jnp.float32)
    ln2_w = params["ln2_w"].reshape(1, C).astype(jnp.float32)
    ln2_b = params["ln2_b"].reshape(1, C).astype(jnp.float32)

    def full(shape):
        return pl.BlockSpec(shape, lambda g: (0,) * len(shape))

    kernel = functools.partial(_triangle_kernel, n_tok=N, c_pair=C,
                               block_i=block_i, row_tile=row_tile)
    out = pl.pallas_call(
        kernel,
        out_shape=jax.ShapeDtypeStruct((NN, C), jnp.float32),
        grid=(1,),
        in_specs=[
            full((NN, C)),                         # pair (flattened)
            full((NN, 1)),                         # mask
            full((1, C)), full((1, C)),            # left_norm_input w, b
            full((C, 5 * C)),                      # fused proj|gate|gating_lin
            full((1, C)), full((1, C)),            # center_norm w, b
            full((C, C)),                          # output_projection
        ],
        out_specs=pl.BlockSpec((NN, C), lambda g: (0, 0)),
        scratch_shapes=[
            pltpu.VMEM((NN, C), jnp.float32),      # a  [(k, j), c]
            pltpu.VMEM((NN, C), jnp.float32),      # b  [(k, i), c]
            pltpu.VMEM((NN, C), jnp.float32),      # sigmoid(gating logits)
        ],
        compiler_params=pltpu.CompilerParams(
            dimension_semantics=("arbitrary",)),
    )(pair2, mask2, ln1_w, ln1_b, w_fused, ln2_w, ln2_b, outp_w)
    return out.reshape(N, N, C)


def triangle_ref(pair, mask, params):
    """Pure-JAX reference mirroring the PyTorch forward exactly (f32)."""
    C = pair.shape[-1]

    def ln(x, w, b):
        mu = jnp.mean(x, -1, keepdims=True)
        var = jnp.mean(jnp.square(x - mu), -1, keepdims=True)
        return (x - mu) / jnp.sqrt(var + LN_EPS) * w + b

    x = ln(pair, params["ln1_w"], params["ln1_b"])
    input_pair = x
    proj = jnp.transpose(x @ params["projection_w"].T, (2, 0, 1))   # [2C,S,T]
    proj = proj * mask[None, ...]
    gate = jnp.transpose(x @ params["gate_w"].T, (2, 0, 1))
    proj = proj * jax.nn.sigmoid(gate)
    proj = proj.reshape(C, 2, *proj.shape[1:])
    a, b = proj[:, 0], proj[:, 1]
    out = jnp.einsum('ckj,cki->cij', a, b)
    out = jnp.transpose(out, (1, 2, 0))
    out = ln(out, params["ln2_w"], params["ln2_b"])
    out = out @ params["output_projection_w"].T
    gate_out = input_pair @ params["gating_linear_w"].T
    return out * jax.nn.sigmoid(gate_out)


if __name__ == "__main__":
    N, C = 16, 128                     # N_token = 16, c_pair = 128 (default)
    key = jax.random.PRNGKey(0)
    ks = jax.random.split(key, 10)
    scale = 1.0 / math.sqrt(C)
    params = {
        "ln1_w": 1.0 + 0.1 * jax.random.normal(ks[0], (C,), jnp.float32),
        "ln1_b": 0.1 * jax.random.normal(ks[1], (C,), jnp.float32),
        "projection_w": scale * jax.random.normal(ks[2], (2 * C, C), jnp.float32),
        "gate_w": scale * jax.random.normal(ks[3], (2 * C, C), jnp.float32),
        "ln2_w": 1.0 + 0.1 * jax.random.normal(ks[4], (C,), jnp.float32),
        "ln2_b": 0.1 * jax.random.normal(ks[5], (C,), jnp.float32),
        "output_projection_w": scale * jax.random.normal(ks[6], (C, C), jnp.float32),
        "gating_linear_w": scale * jax.random.normal(ks[7], (C, C), jnp.float32),
    }
    pair = jax.random.normal(ks[8], (N, N, C), jnp.float32)
    mask = jax.random.uniform(ks[9], (N, N), jnp.float32)

    out = triangle_multiplication(pair, mask, params)
    out = jax.block_until_ready(out)

    ref = triangle_ref(pair, mask, params)
    np.testing.assert_allclose(np.asarray(out), np.asarray(ref),
                               rtol=5e-2, atol=5e-2)
    print("KERNEL_OK")
</pallas_src>

<mosaic_0001>
module attributes {stable_mosaic.version = 11 : i64} {
  func.func @_triangle_kernel(%arg0: i32, %arg1: memref<256x128xf32, #tpu.memory_space<vmem>>, %arg2: memref<256x1xf32, #tpu.memory_space<vmem>>, %arg3: memref<1x128xf32, #tpu.memory_space<vmem>>, %arg4: memref<1x128xf32, #tpu.memory_space<vmem>>, %arg5: memref<128x640xbf16, #tpu.memory_space<vmem>>, %arg6: memref<1x128xf32, #tpu.memory_space<vmem>>, %arg7: memref<1x128xf32, #tpu.memory_space<vmem>>, %arg8: memref<128x128xbf16, #tpu.memory_space<vmem>>, %arg9: memref<256x128xf32, #tpu.memory_space<vmem>>, %arg10: memref<256x128xf32, #tpu.memory_space<vmem>>, %arg11: memref<256x128xf32, #tpu.memory_space<vmem>>, %arg12: memref<256x128xf32, #tpu.memory_space<vmem>>) attributes {dimension_semantics = [#tpu.dimension_semantics<arbitrary>], iteration_bounds = array<i64: 1>, scalar_prefetch = 0 : i64, scratch_operands = 3 : i64, tpu.core_type = #tpu.core_type<tc>, window_params = [{pipeline_mode = #tpu.pipeline_mode<synchronous>, transform_indices = @transform_0, window_bounds = array<i64: 256, 128>}, {pipeline_mode = #tpu.pipeline_mode<synchronous>, transform_indices = @transform_1, window_bounds = array<i64: 256, 1>}, {pipeline_mode = #tpu.pipeline_mode<synchronous>, transform_indices = @transform_2, window_bounds = array<i64: 1, 128>}, {pipeline_mode = #tpu.pipeline_mode<synchronous>, transform_indices = @transform_3, window_bounds = array<i64: 1, 128>}, {pipeline_mode = #tpu.pipeline_mode<synchronous>, transform_indices = @transform_4, window_bounds = array<i64: 128, 640>}, {pipeline_mode = #tpu.pipeline_mode<synchronous>, transform_indices = @transform_5, window_bounds = array<i64: 1, 128>}, {pipeline_mode = #tpu.pipeline_mode<synchronous>, transform_indices = @transform_6, window_bounds = array<i64: 1, 128>}, {pipeline_mode = #tpu.pipeline_mode<synchronous>, transform_indices = @transform_7, window_bounds = array<i64: 128, 128>}, {pipeline_mode = #tpu.pipeline_mode<synchronous>, transform_indices = @transform_8, window_bounds = array<i64: 256, 128>}]} {
    %c0 = arith.constant 0 : index
    %c0_0 = arith.constant 0 : index
    %0 = vector.load %arg3[%c0, %c0_0] : memref<1x128xf32, #tpu.memory_space<vmem>>, vector<1x128xf32>
    %c0_1 = arith.constant 0 : index
    %c0_2 = arith.constant 0 : index
    %1 = vector.load %arg4[%c0_1, %c0_2] : memref<1x128xf32, #tpu.memory_space<vmem>>, vector<1x128xf32>
    %c0_i32 = arith.constant 0 : i32
    %c4_i32 = arith.constant 4 : i32
    %2 = arith.addi %c0_i32, %c4_i32 : i32
    %c1_i32 = arith.constant 1 : i32
    scf.for %arg13 = %c0_i32 to %2 step %c1_i32  : i32 {
      %c1_i32_11 = arith.constant 1 : i32
      %6 = arith.muli %arg13, %c1_i32_11 : i32
      %c0_i32_12 = arith.constant 0 : i32
      %7 = arith.addi %c0_i32_12, %6 : i32
      %c64_i32 = arith.constant 64 : i32
      %8 = arith.muli %7, %c64_i32 : i32
      %9 = tpu.assume_multiple %8, 8 : i32
      %10 = arith.index_cast %9 : i32 to index
      %c0_13 = arith.constant 0 : index
      %11 = vector.load %arg1[%10, %c0_13] : memref<256x128xf32, #tpu.memory_space<vmem>>, vector<64x128xf32>
      %cst = arith.constant dense<0.000000e+00> : vector<64xf32>
      %12 = vector.multi_reduction <add>, %11, %cst [1] : vector<64x128xf32> to vector<64xf32>
      %13 = vector.shape_cast %12 : vector<64xf32> to vector<64x1xf32>
      %cst_14 = arith.constant 7.812500e-03 : f32
      %14 = vector.broadcast %cst_14 : f32 to vector<64x1xf32>
      %15 = arith.mulf %13, %14 : vector<64x1xf32>
      %16 = arith.mulf %11, %11 : vector<64x128xf32>
      %cst_15 = arith.constant dense<0.000000e+00> : vector<64xf32>
      %17 = vector.multi_reduction <add>, %16, %cst_15 [1] : vector<64x128xf32> to vector<64xf32>
      %18 = vector.shape_cast %17 : vector<64xf32> to vector<64x1xf32>
      %cst_16 = arith.constant 7.812500e-03 : f32
      %19 = vector.broadcast %cst_16 : f32 to vector<64x1xf32>
      %20 = arith.mulf %18, %19 : vector<64x1xf32>
      %21 = arith.mulf %15, %15 : vector<64x1xf32>
      %22 = arith.subf %20, %21 : vector<64x1xf32>
      %23 = vector.broadcast %15 : vector<64x1xf32> to vector<64x128xf32>
      %24 = arith.subf %11, %23 : vector<64x128xf32>
      %cst_17 = arith.constant 9.99999974E-6 : f32
      %25 = vector.broadcast %cst_17 : f32 to vector<64x1xf32>
      %26 = arith.addf %22, %25 : vector<64x1xf32>
      %27 = math.rsqrt %26 : vector<64x1xf32>
      %28 = vector.broadcast %27 : vector<64x1xf32> to vector<64x128xf32>
      %29 = arith.mulf %24, %28 : vector<64x128xf32>
      %30 = vector.broadcast %0 : vector<1x128xf32> to vector<64x128xf32>
      %31 = arith.mulf %29, %30 : vector<64x128xf32>
      %32 = vector.broadcast %1 : vector<1x128xf32> to vector<64x128xf32>
      %33 = arith.addf %31, %32 : vector<64x128xf32>
      %34 = arith.truncf %33 : vector<64x128xf32> to vector<64x128xbf16>
      %c0_18 = arith.constant 0 : index
      %c0_19 = arith.constant 0 : index
      %35 = vector.load %arg5[%c0_18, %c0_19] : memref<128x640xbf16, #tpu.memory_space<vmem>>, vector<128x640xbf16>
      %cst_20 = arith.constant dense<0.000000e+00> : vector<64x640xf32>
      %36 = tpu.matmul %34, %35, %cst_20 {dimension_numbers = #tpu.dot_dimension_numbers<[1], [0], [0], [1], [0, 0, 1, 1], [], []>} : vector<64x128xbf16>, vector<128x640xbf16>, vector<64x640xf32> -> vector<64x640xf32>
      %37 = arith.index_cast %9 : i32 to index
      %c0_21 = arith.constant 0 : index
      %38 = vector.load %arg2[%37, %c0_21] : memref<256x1xf32, #tpu.memory_space<vmem>>, vector<64x1xf32>
      %39 = vector.extract_strided_slice %36 {offsets = [0, 0], sizes = [64, 128], strides = [1, 1]} : vector<64x640xf32> to vector<64x128xf32>
      %40 = vector.broadcast %38 : vector<64x1xf32> to vector<64x128xf32>
      %41 = arith.mulf %39, %40 : vector<64x128xf32>
      %42 = vector.extract_strided_slice %36 {offsets = [0, 256], sizes = [64, 128], strides = [1, 1]} : vector<64x640xf32> to vector<64x128xf32>
      %43 = arith.negf %42 : vector<64x128xf32>
      %44 = math.exp %43 : vector<64x128xf32>
      %cst_22 = arith.constant 1.000000e+00 : f32
      %45 = vector.broadcast %cst_22 : f32 to vector<64x128xf32>
      %46 = arith.addf %45, %44 : vector<64x128xf32>
      %47 = arith.divf %45, %46 : vector<64x128xf32>
      %48 = arith.mulf %41, %47 : vector<64x128xf32>
      %49 = arith.index_cast %9 : i32 to index
      %c0_23 = arith.constant 0 : index
      %50 = vector.load %arg10[%49, %c0_23] : memref<256x128xf32, #tpu.memory_space<vmem>>, vector<64x128xf32>
      tpu.vector_store %arg10[%49, %c0_23], %48 {strides = array<i32>} : memref<256x128xf32, #tpu.memory_space<vmem>>, vector<64x128xf32>,
      %51 = vector.extract_strided_slice %36 {offsets = [0, 128], sizes = [64, 128], strides = [1, 1]} : vector<64x640xf32> to vector<64x128xf32>
      %52 = vector.broadcast %38 : vector<64x1xf32> to vector<64x128xf32>
      %53 = arith.mulf %51, %52 : vector<64x128xf32>
      %54 = vector.extract_strided_slice %36 {offsets = [0, 384], sizes = [64, 128], strides = [1, 1]} : vector<64x640xf32> to vector<64x128xf32>
      %55 = arith.negf %54 : vector<64x128xf32>
      %56 = math.exp %55 : vector<64x128xf32>
      %cst_24 = arith.constant 1.000000e+00 : f32
      %57 = vector.broadcast %cst_24 : f32 to vector<64x128xf32>
      %58 = arith.addf %57, %56 : vector<64x128xf32>
      %59 = arith.divf %57, %58 : vector<64x128xf32>
      %60 = arith.mulf %53, %59 : vector<64x128xf32>
      %61 = arith.index_cast %9 : i32 to index
      %c0_25 = arith.constant 0 : index
      %62 = vector.load %arg11[%61, %c0_25] : memref<256x128xf32, #tpu.memory_space<vmem>>, vector<64x128xf32>
      tpu.vector_store %arg11[%61, %c0_25], %60 {strides = array<i32>} : memref<256x128xf32, #tpu.memory_space<vmem>>, vector<64x128xf32>,
      %63 = vector.extract_strided_slice %36 {offsets = [0, 512], sizes = [64, 128], strides = [1, 1]} : vector<64x640xf32> to vector<64x128xf32>
      %64 = arith.negf %63 : vector<64x128xf32>
      %65 = math.exp %64 : vector<64x128xf32>
      %cst_26 = arith.constant 1.000000e+00 : f32
      %66 = vector.broadcast %cst_26 : f32 to vector<64x128xf32>
      %67 = arith.addf %66, %65 : vector<64x128xf32>
      %68 = arith.divf %66, %67 : vector<64x128xf32>
      %69 = arith.index_cast %9 : i32 to index
      %c0_27 = arith.constant 0 : index
      %70 = vector.load %arg12[%69, %c0_27] : memref<256x128xf32, #tpu.memory_space<vmem>>, vector<64x128xf32>
      tpu.vector_store %arg12[%69, %c0_27], %68 {strides = array<i32>} : memref<256x128xf32, #tpu.memory_space<vmem>>, vector<64x128xf32>,
    }
    %c4_i32_3 = arith.constant 4 : i32
    %c0_4 = arith.constant 0 : index
    %c0_5 = arith.constant 0 : index
    %3 = vector.load %arg6[%c0_4, %c0_5] : memref<1x128xf32, #tpu.memory_space<vmem>>, vector<1x128xf32>
    %c0_6 = arith.constant 0 : index
    %c0_7 = arith.constant 0 : index
    %4 = vector.load %arg7[%c0_6, %c0_7] : memref<1x128xf32, #tpu.memory_space<vmem>>, vector<1x128xf32>
    %c0_i32_8 = arith.constant 0 : i32
    %c2_i32 = arith.constant 2 : i32
    %5 = arith.addi %c0_i32_8, %c2_i32 : i32
    %c1_i32_9 = arith.constant 1 : i32
    scf.for %arg13 = %c0_i32_8 to %5 step %c1_i32_9  : i32 {
      %c1_i32_11 = arith.constant 1 : i32
      %6 = arith.muli %arg13, %c1_i32_11 : i32
      %c0_i32_12 = arith.constant 0 : i32
      %7 = arith.addi %c0_i32_12, %6 : i32
      %c8_i32 = arith.constant 8 : i32
      %8 = arith.muli %7, %c8_i32 : i32
      %cst = arith.constant 0.000000e+00 : f32
      %9 = vector.broadcast %cst : f32 to vector<8x16x128xf32>
      %c0_i32_13 = arith.constant 0 : i32
      %c16_i32 = arith.constant 16 : i32
      %10 = arith.muli %c0_i32_13, %c16_i32 : i32
      %11 = tpu.assume_multiple %10, 8 : i32
      %12 = arith.index_cast %11 : i32 to index
      %c0_14 = arith.constant 0 : index
      %13 = vector.load %arg10[%12, %c0_14] : memref<256x128xf32, #tpu.memory_space<vmem>>, vector<16x128xf32>
      %14 = arith.addi %11, %8 : i32
      %15 = tpu.assume_multiple %14, 8 : i32
      %16 = arith.index_cast %15 : i32 to index
      %c0_15 = arith.constant 0 : index
      %17 = vector.load %arg11[%16, %c0_15] : memref<256x128xf32, #tpu.memory_space<vmem>>, vector<8x128xf32>
      %18 = vector.shape_cast %17 : vector<8x128xf32> to vector<8x1x128xf32>
      %19 = vector.shape_cast %13 : vector<16x128xf32> to vector<1x16x128xf32>
      %20 = vector.broadcast %18 : vector<8x1x128xf32> to vector<8x16x128xf32>
      %21 = vector.broadcast %19 : vector<1x16x128xf32> to vector<8x16x128xf32>
      %22 = arith.mulf %20, %21 : vector<8x16x128xf32>
      %23 = arith.addf %9, %22 : vector<8x16x128xf32>
      %c1_i32_16 = arith.constant 1 : i32
      %c16_i32_17 = arith.constant 16 : i32
      %24 = arith.muli %c1_i32_16, %c16_i32_17 : i32
      %25 = tpu.assume_multiple %24, 8 : i32
      %26 = arith.index_cast %25 : i32 to index
      %c0_18 = arith.constant 0 : index
      %27 = vector.load %arg10[%26, %c0_18] : memref<256x128xf32, #tpu.memory_space<vmem>>, vector<16x128xf32>
      %28 = arith.addi %25, %8 : i32
      %29 = tpu.assume_multiple %28, 8 : i32
      %30 = arith.index_cast %29 : i32 to index
      %c0_19 = arith.constant 0 : index
      %31 = vector.load %arg11[%30, %c0_19] : memref<256x128xf32, #tpu.memory_space<vmem>>, vector<8x128xf32>
      %32 = vector.shape_cast %31 : vector<8x128xf32> to vector<8x1x128xf32>
      %33 = vector.shape_cast %27 : vector<16x128xf32> to vector<1x16x128xf32>
      %34 = vector.broadcast %32 : vector<8x1x128xf32> to vector<8x16x128xf32>
      %35 = vector.broadcast %33 : vector<1x16x128xf32> to vector<8x16x128xf32>
      %36 = arith.mulf %34, %35 : vector<8x16x128xf32>
      %37 = arith.addf %23, %36 : vector<8x16x128xf32>
      %c2_i32_20 = arith.constant 2 : i32
      %c16_i32_21 = arith.constant 16 : i32
      %38 = arith.muli %c2_i32_20, %c16_i32_21 : i32
      %39 = tpu.assume_multiple %38, 8 : i32
      %40 = arith.index_cast %39 : i32 to index
      %c0_22 = arith.constant 0 : index
      %41 = vector.load %arg10[%40, %c0_22] : memref<256x128xf32, #tpu.memory_space<vmem>>, vector<16x128xf32>
      %42 = arith.addi %39, %8 : i32
      %43 = tpu.assume_multiple %42, 8 : i32
      %44 = arith.index_cast %43 : i32 to index
      %c0_23 = arith.constant 0 : index
      %45 = vector.load %arg11[%44, %c0_23] : memref<256x128xf32, #tpu.memory_space<vmem>>, vector<8x128xf32>
      %46 = vector.shape_cast %45 : vector<8x128xf32> to vector<8x1x128xf32>
      %47 = vector.shape_cast %41 : vector<16x128xf32> to vector<1x16x128xf32>
      %48 = vector.broadcast %46 : vector<8x1x128xf32> to vector<8x16x128xf32>
      %49 = vector.broadcast %47 : vector<1x16x128xf32> to vector<8x16x128xf32>
      %50 = arith.mulf %48, %49 : vector<8x16x128xf32>
      %51 = arith.addf %37, %50 : vector<8x16x128xf32>
      %c3_i32 = arith.constant 3 : i32
      %c16_i32_24 = arith.constant 16 : i32
      %52 = arith.muli %c3_i32, %c16_i32_24 : i32
      %53 = tpu.assume_multiple %52, 8 : i32
      %54 = arith.index_cast %53 : i32 to index
      %c0_25 = arith.constant 0 : index
      %55 = vector.load %arg10[%54, %c0_25] : memref<256x128xf32, #tpu.memory_space<vmem>>, vector<16x128xf32>
      %56 = arith.addi %53, %8 : i32
      %57 = tpu.assume_multiple %56, 8 : i32
      %58 = arith.index_cast %57 : i32 to index
      %c0_26 = arith.constant 0 : index
      %59 = vector.load %arg11[%58, %c0_26] : memref<256x128xf32, #tpu.memory_space<vmem>>, vector<8x128xf32>
      %60 = vector.shape_cast %59 : vector<8x128xf32> to vector<8x1x128xf32>
      %61 = vector.shape_cast %55 : vector<16x128xf32> to vector<1x16x128xf32>
      %62 = vector.broadcast %60 : vector<8x1x128xf32> to vector<8x16x128xf32>
      %63 = vector.broadcast %61 : vector<1x16x128xf32> to vector<8x16x128xf32>
      %64 = arith.mulf %62, %63 : vector<8x16x128xf32>
      %65 = arith.addf %51, %64 : vector<8x16x128xf32>
      %c4_i32_27 = arith.constant 4 : i32
      %c16_i32_28 = arith.constant 16 : i32
      %66 = arith.muli %c4_i32_27, %c16_i32_28 : i32
      %67 = tpu.assume_multiple %66, 8 : i32
      %68 = arith.index_cast %67 : i32 to index
      %c0_29 = arith.constant 0 : index
      %69 = vector.load %arg10[%68, %c0_29] : memref<256x128xf32, #tpu.memory_space<vmem>>, vector<16x128xf32>
      %70 = arith.addi %67, %8 : i32
      %71 = tpu.assume_multiple %70, 8 : i32
      %72 = arith.index_cast %71 : i32 to index
      %c0_30 = arith.constant 0 : index
      %73 = vector.load %arg11[%72, %c0_30] : memref<256x128xf32, #tpu.memory_space<vmem>>, vector<8x128xf32>
      %74 = vector.shape_cast %73 : vector<8x128xf32> to vector<8x1x128xf32>
      %75 = vector.shape_cast %69 : vector<16x128xf32> to vector<1x16x128xf32>
      %76 = vector.broadcast %74 : vector<8x1x128xf32> to vector<8x16x128xf32>
      %77 = vector.broadcast %75 : vector<1x16x128xf32> to vector<8x16x128xf32>
      %78 = arith.mulf %76, %77 : vector<8x16x128xf32>
      %79 = arith.addf %65, %78 : vector<8x16x128xf32>
      %c5_i32 = arith.constant 5 : i32
      %c16_i32_31 = arith.constant 16 : i32
      %80 = arith.muli %c5_i32, %c16_i32_31 : i32
      %81 = tpu.assume_multiple %80, 8 : i32
      %82 = arith.index_cast %81 : i32 to index
      %c0_32 = arith.constant 0 : index
      %83 = vector.load %arg10[%82, %c0_32] : memref<256x128xf32, #tpu.memory_space<vmem>>, vector<16x128xf32>
      %84 = arith.addi %81, %8 : i32
      %85 = tpu.assume_multiple %84, 8 : i32
      %86 = arith.index_cast %85 : i32 to index
      %c0_33 = arith.constant 0 : index
      %87 = vector.load %arg11[%86, %c0_33] : memref<256x128xf32, #tpu.memory_space<vmem>>, vector<8x128xf32>
      %88 = vector.shape_cast %87 : vector<8x128xf32> to vector<8x1x128xf32>
      %89 = vector.shape_cast %83 : vector<16x128xf32> to vector<1x16x128xf32>
      %90 = vector.broadcast %88 : vector<8x1x128xf32> to vector<8x16x128xf32>
      %91 = vector.broadcast %89 : vector<1x16x128xf32> to vector<8x16x128xf32>
      %92 = arith.mulf %90, %91 : vector<8x16x128xf32>
      %93 = arith.addf %79, %92 : vector<8x16x128xf32>
      %c6_i32 = arith.constant 6 : i32
      %c16_i32_34 = arith.constant 16 : i32
      %94 = arith.muli %c6_i32, %c16_i32_34 : i32
      %95 = tpu.assume_multiple %94, 8 : i32
      %96 = arith.index_cast %95 : i32 to index
      %c0_35 = arith.constant 0 : index
      %97 = vector.load %arg10[%96, %c0_35] : memref<256x128xf32, #tpu.memory_space<vmem>>, vector<16x128xf32>
      %98 = arith.addi %95, %8 : i32
      %99 = tpu.assume_multiple %98, 8 : i32
      %100 = arith.index_cast %99 : i32 to index
      %c0_36 = arith.constant 0 : index
      %101 = vector.load %arg11[%100, %c0_36] : memref<256x128xf32, #tpu.memory_space<vmem>>, vector<8x128xf32>
      %102 = vector.shape_cast %101 : vector<8x128xf32> to vector<8x1x128xf32>
      %103 = vector.shape_cast %97 : vector<16x128xf32> to vector<1x16x128xf32>
      %104 = vector.broadcast %102 : vector<8x1x128xf32> to vector<8x16x128xf32>
      %105 = vector.broadcast %103 : vector<1x16x128xf32> to vector<8x16x128xf32>
      %106 = arith.mulf %104, %105 : vector<8x16x128xf32>
      %107 = arith.addf %93, %106 : vector<8x16x128xf32>
      %c7_i32 = arith.constant 7 : i32
      %c16_i32_37 = arith.constant 16 : i32
      %108 = arith.muli %c7_i32, %c16_i32_37 : i32
      %109 = tpu.assume_multiple %108, 8 : i32
      %110 = arith.index_cast %109 : i32 to index
      %c0_38 = arith.constant 0 : index
      %111 = vector.load %arg10[%110, %c0_38] : memref<256x128xf32, #tpu.memory_space<vmem>>, vector<16x128xf32>
      %112 = arith.addi %109, %8 : i32
      %113 = tpu.assume_multiple %112, 8 : i32
      %114 = arith.index_cast %113 : i32 to index
      %c0_39 = arith.constant 0 : index
      %115 = vector.load %arg11[%114, %c0_39] : memref<256x128xf32, #tpu.memory_space<vmem>>, vector<8x128xf32>
      %116 = vector.shape_cast %115 : vector<8x128xf32> to vector<8x1x128xf32>
      %117 = vector.shape_cast %111 : vector<16x128xf32> to vector<1x16x128xf32>
      %118 = vector.broadcast %116 : vector<8x1x128xf32> to vector<8x16x128xf32>
      %119 = vector.broadcast %117 : vector<1x16x128xf32> to vector<8x16x128xf32>
      %120 = arith.mulf %118, %119 : vector<8x16x128xf32>
      %121 = arith.addf %107, %120 : vector<8x16x128xf32>
      %c8_i32_40 = arith.constant 8 : i32
      %c16_i32_41 = arith.constant 16 : i32
      %122 = arith.muli %c8_i32_40, %c16_i32_41 : i32
      %123 = tpu.assume_multiple %122, 8 : i32
      %124 = arith.index_cast %123 : i32 to index
      %c0_42 = arith.constant 0 : index
      %125 = vector.load %arg10[%124, %c0_42] : memref<256x128xf32, #tpu.memory_space<vmem>>, vector<16x128xf32>
      %126 = arith.addi %123, %8 : i32
      %127 = tpu.assume_multiple %126, 8 : i32
      %128 = arith.index_cast %127 : i32 to index
      %c0_43 = arith.constant 0 : index
      %129 = vector.load %arg11[%128, %c0_43] : memref<256x128xf32, #tpu.memory_space<vmem>>, vector<8x128xf32>
      %130 = vector.shape_cast %129 : vector<8x128xf32> to vector<8x1x128xf32>
      %131 = vector.shape_cast %125 : vector<16x128xf32> to vector<1x16x128xf32>
      %132 = vector.broadcast %130 : vector<8x1x128xf32> to vector<8x16x128xf32>
      %133 = vector.broadcast %131 : vector<1x16x128xf32> to vector<8x16x128xf32>
      %134 = arith.mulf %132, %133 : vector<8x16x128xf32>
      %135 = arith.addf %121, %134 : vector<8x16x128xf32>
      %c9_i32 = arith.constant 9 : i32
      %c16_i32_44 = arith.constant 16 : i32
      %136 = arith.muli %c9_i32, %c16_i32_44 : i32
      %137 = tpu.assume_multiple %136, 8 : i32
      %138 = arith.index_cast %137 : i32 to index
      %c0_45 = arith.constant 0 : index
      %139 = vector.load %arg10[%138, %c0_45] : memref<256x128xf32, #tpu.memory_space<vmem>>, vector<16x128xf32>
      %140 = arith.addi %137, %8 : i32
      %141 = tpu.assume_multiple %140, 8 : i32
      %142 = arith.index_cast %141 : i32 to index
      %c0_46 = arith.constant 0 : index
      %143 = vector.load %arg11[%142, %c0_46] : memref<256x128xf32, #tpu.memory_space<vmem>>, vector<8x128xf32>
      %144 = vector.shape_cast %143 : vector<8x128xf32> to vector<8x1x128xf32>
      %145 = vector.shape_cast %139 : vector<16x128xf32> to vector<1x16x128xf32>
      %146 = vector.broadcast %144 : vector<8x1x128xf32> to vector<8x16x128xf32>
      %147 = vector.broadcast %145 : vector<1x16x128xf32> to vector<8x16x128xf32>
      %148 = arith.mulf %146, %147 : vector<8x16x128xf32>
      %149 = arith.addf %135, %148 : vector<8x16x128xf32>
      %c10_i32 = arith.constant 10 : i32
      %c16_i32_47 = arith.constant 16 : i32
      %150 = arith.muli %c10_i32, %c16_i32_47 : i32
      %151 = tpu.assume_multiple %150, 8 : i32
      %152 = arith.index_cast %151 : i32 to index
      %c0_48 = arith.constant 0 : index
      %153 = vector.load %arg10[%152, %c0_48] : memref<256x128xf32, #tpu.memory_space<vmem>>, vector<16x128xf32>
      %154 = arith.addi %151, %8 : i32
      %155 = tpu.assume_multiple %154, 8 : i32
      %156 = arith.index_cast %155 : i32 to index
      %c0_49 = arith.constant 0 : index
      %157 = vector.load %arg11[%156, %c0_49] : memref<256x128xf32, #tpu.memory_space<vmem>>, vector<8x128xf32>
      %158 = vector.shape_cast %157 : vector<8x128xf32> to vector<8x1x128xf32>
      %159 = vector.shape_cast %153 : vector<16x128xf32> to vector<1x16x128xf32>
      %160 = vector.broadcast %158 : vector<8x1x128xf32> to vector<8x16x128xf32>
      %161 = vector.broadcast %159 : vector<1x16x128xf32> to vector<8x16x128xf32>
      %162 = arith.mulf %160, %161 : vector<8x16x128xf32>
      %163 = arith.addf %149, %162 : vector<8x16x128xf32>
      %c11_i32 = arith.constant 11 : i32
      %c16_i32_50 = arith.constant 16 : i32
      %164 = arith.muli %c11_i32, %c16_i32_50 : i32
      %165 = tpu.assume_multiple %164, 8 : i32
      %166 = arith.index_cast %165 : i32 to index
      %c0_51 = arith.constant 0 : index
      %167 = vector.load %arg10[%166, %c0_51] : memref<256x128xf32, #tpu.memory_space<vmem>>, vector<16x128xf32>
      %168 = arith.addi %165, %8 : i32
      %169 = tpu.assume_multiple %168, 8 : i32
      %170 = arith.index_cast %169 : i32 to index
      %c0_52 = arith.constant 0 : index
      %171 = vector.load %arg11[%170, %c0_52] : memref<256x128xf32, #tpu.memory_space<vmem>>, vector<8x128xf32>
      %172 = vector.shape_cast %171 : vector<8x128xf32> to vector<8x1x128xf32>
      %173 = vector.shape_cast %167 : vector<16x128xf32> to vector<1x16x128xf32>
      %174 = vector.broadcast %172 : vector<8x1x128xf32> to vector<8x16x128xf32>
      %175 = vector.broadcast %173 : vector<1x16x128xf32> to vector<8x16x128xf32>
      %176 = arith.mulf %174, %175 : vector<8x16x128xf32>
      %177 = arith.addf %163, %176 : vector<8x16x128xf32>
      %c12_i32 = arith.constant 12 : i32
      %c16_i32_53 = arith.constant 16 : i32
      %178 = arith.muli %c12_i32, %c16_i32_53 : i32
      %179 = tpu.assume_multiple %178, 8 : i32
      %180 = arith.index_cast %179 : i32 to index
      %c0_54 = arith.constant 0 : index
      %181 = vector.load %arg10[%180, %c0_54] : memref<256x128xf32, #tpu.memory_space<vmem>>, vector<16x128xf32>
      %182 = arith.addi %179, %8 : i32
      %183 = tpu.assume_multiple %182, 8 : i32
      %184 = arith.index_cast %183 : i32 to index
      %c0_55 = arith.constant 0 : index
      %185 = vector.load %arg11[%184, %c0_55] : memref<256x128xf32, #tpu.memory_space<vmem>>, vector<8x128xf32>
      %186 = vector.shape_cast %185 : vector<8x128xf32> to vector<8x1x128xf32>
      %187 = vector.shape_cast %181 : vector<16x128xf32> to vector<1x16x128xf32>
      %188 = vector.broadcast %186 : vector<8x1x128xf32> to vector<8x16x128xf32>
      %189 = vector.broadcast %187 : vector<1x16x128xf32> to vector<8x16x128xf32>
      %190 = arith.mulf %188, %189 : vector<8x16x128xf32>
      %191 = arith.addf %177, %190 : vector<8x16x128xf32>
      %c13_i32 = arith.constant 13 : i32
      %c16_i32_56 = arith.constant 16 : i32
      %192 = arith.muli %c13_i32, %c16_i32_56 : i32
      %193 = tpu.assume_multiple %192, 8 : i32
      %194 = arith.index_cast %193 : i32 to index
      %c0_57 = arith.constant 0 : index
      %195 = vector.load %arg10[%194, %c0_57] : memref<256x128xf32, #tpu.memory_space<vmem>>, vector<16x128xf32>
      %196 = arith.addi %193, %8 : i32
      %197 = tpu.assume_multiple %196, 8 : i32
      %198 = arith.index_cast %197 : i32 to index
      %c0_58 = arith.constant 0 : index
      %199 = vector.load %arg11[%198, %c0_58] : memref<256x128xf32, #tpu.memory_space<vmem>>, vector<8x128xf32>
      %200 = vector.shape_cast %199 : vector<8x128xf32> to vector<8x1x128xf32>
      %201 = vector.shape_cast %195 : vector<16x128xf32> to vector<1x16x128xf32>
      %202 = vector.broadcast %200 : vector<8x1x128xf32> to vector<8x16x128xf32>
      %203 = vector.broadcast %201 : vector<1x16x128xf32> to vector<8x16x128xf32>
      %204 = arith.mulf %202, %203 : vector<8x16x128xf32>
      %205 = arith.addf %191, %204 : vector<8x16x128xf32>
      %c14_i32 = arith.constant 14 : i32
      %c16_i32_59 = arith.constant 16 : i32
      %206 = arith.muli %c14_i32, %c16_i32_59 : i32
      %207 = tpu.assume_multiple %206, 8 : i32
      %208 = arith.index_cast %207 : i32 to index
      %c0_60 = arith.constant 0 : index
      %209 = vector.load %arg10[%208, %c0_60] : memref<256x128xf32, #tpu.memory_space<vmem>>, vector<16x128xf32>
      %210 = arith.addi %207, %8 : i32
      %211 = tpu.assume_multiple %210, 8 : i32
      %212 = arith.index_cast %211 : i32 to index
      %c0_61 = arith.constant 0 : index
      %213 = vector.load %arg11[%212, %c0_61] : memref<256x128xf32, #tpu.memory_space<vmem>>, vector<8x128xf32>
      %214 = vector.shape_cast %213 : vector<8x128xf32> to vector<8x1x128xf32>
      %215 = vector.shape_cast %209 : vector<16x128xf32> to vector<1x16x128xf32>
      %216 = vector.broadcast %214 : vector<8x1x128xf32> to vector<8x16x128xf32>
      %217 = vector.broadcast %215 : vector<1x16x128xf32> to vector<8x16x128xf32>
      %218 = arith.mulf %216, %217 : vector<8x16x128xf32>
      %219 = arith.addf %205, %218 : vector<8x16x128xf32>
      %c15_i32 = arith.constant 15 : i32
      %c16_i32_62 = arith.constant 16 : i32
      %220 = arith.muli %c15_i32, %c16_i32_62 : i32
      %221 = tpu.assume_multiple %220, 8 : i32
      %222 = arith.index_cast %221 : i32 to index
      %c0_63 = arith.constant 0 : index
      %223 = vector.load %arg10[%222, %c0_63] : memref<256x128xf32, #tpu.memory_space<vmem>>, vector<16x128xf32>
      %224 = arith.addi %221, %8 : i32
      %225 = tpu.assume_multiple %224, 8 : i32
      %226 = arith.index_cast %225 : i32 to index
      %c0_64 = arith.constant 0 : index
      %227 = vector.load %arg11[%226, %c0_64] : memref<256x128xf32, #tpu.memory_space<vmem>>, vector<8x128xf32>
      %228 = vector.shape_cast %227 : vector<8x128xf32> to vector<8x1x128xf32>
      %229 = vector.shape_cast %223 : vector<16x128xf32> to vector<1x16x128xf32>
      %230 = vector.broadcast %228 : vector<8x1x128xf32> to vector<8x16x128xf32>
      %231 = vector.broadcast %229 : vector<1x16x128xf32> to vector<8x16x128xf32>
      %232 = arith.mulf %230, %231 : vector<8x16x128xf32>
      %233 = arith.addf %219, %232 : vector<8x16x128xf32>
      %c16_i32_65 = arith.constant 16 : i32
      %234 = vector.shape_cast %233 : vector<8x16x128xf32> to vector<128x128xf32>
      %cst_66 = arith.constant dense<0.000000e+00> : vector<128xf32>
      %235 = vector.multi_reduction <add>, %234, %cst_66 [1] : vector<128x128xf32> to vector<128xf32>
      %236 = vector.shape_cast %235 : vector<128xf32> to vector<128x1xf32>
      %cst_67 = arith.constant 7.812500e-03 : f32
      %237 = vector.broadcast %cst_67 : f32 to vector<128x1xf32>
      %238 = arith.mulf %236, %237 : vector<128x1xf32>
      %239 = arith.mulf %234, %234 : vector<128x128xf32>
      %cst_68 = arith.constant dense<0.000000e+00> : vector<128xf32>
      %240 = vector.multi_reduction <add>, %239, %cst_68 [1] : vector<128x128xf32> to vector<128xf32>
      %241 = vector.shape_cast %240 : vector<128xf32> to vector<128x1xf32>
      %cst_69 = arith.constant 7.812500e-03 : f32
      %242 = vector.broadcast %cst_69 : f32 to vector<128x1xf32>
      %243 = arith.mulf %241, %242 : vector<128x1xf32>
      %244 = arith.mulf %238, %238 : vector<128x1xf32>
      %245 = arith.subf %243, %244 : vector<128x1xf32>
      %246 = vector.broadcast %238 : vector<128x1xf32> to vector<128x128xf32>
      %247 = arith.subf %234, %246 : vector<128x128xf32>
      %cst_70 = arith.constant 9.99999974E-6 : f32
      %248 = vector.broadcast %cst_70 : f32 to vector<128x1xf32>
      %249 = arith.addf %245, %248 : vector<128x1xf32>
      %250 = math.rsqrt %249 : vector<128x1xf32>
      %251 = vector.broadcast %250 : vector<128x1xf32> to vector<128x128xf32>
      %252 = arith.mulf %247, %251 : vector<128x128xf32>
      %253 = vector.broadcast %3 : vector<1x128xf32> to vector<128x128xf32>
      %254 = arith.mulf %252, %253 : vector<128x128xf32>
      %255 = vector.broadcast %4 : vector<1x128xf32> to vector<128x128xf32>
      %256 = arith.addf %254, %255 : vector<128x128xf32>
      %257 = arith.truncf %256 : vector<128x128xf32> to vector<128x128xbf16>
      %c0_71 = arith.constant 0 : index
      %c0_72 = arith.constant 0 : index
      %258 = vector.load %arg8[%c0_71, %c0_72] : memref<128x128xbf16, #tpu.memory_space<vmem>>, vector<128x128xbf16>
      %cst_73 = arith.constant dense<0.000000e+00> : vector<128x128xf32>
      %259 = tpu.matmul %257, %258, %cst_73 {dimension_numbers = #tpu.dot_dimension_numbers<[1], [0], [0], [1], [0, 0, 1, 1], [], []>} : vector<128x128xbf16>, vector<128x128xbf16>, vector<128x128xf32> -> vector<128x128xf32>
      %c128_i32 = arith.constant 128 : i32
      %260 = arith.muli %7, %c128_i32 : i32
      %261 = tpu.assume_multiple %260, 8 : i32
      %262 = arith.index_cast %261 : i32 to index
      %c0_74 = arith.constant 0 : index
      %263 = vector.load %arg12[%262, %c0_74] : memref<256x128xf32, #tpu.memory_space<vmem>>, vector<128x128xf32>
      %264 = arith.mulf %259, %263 : vector<128x128xf32>
      %265 = arith.index_cast %261 : i32 to index
      %c0_75 = arith.constant 0 : index
      %266 = vector.load %arg9[%265, %c0_75] : memref<256x128xf32, #tpu.memory_space<vmem>>, vector<128x128xf32>
      tpu.vector_store %arg9[%265, %c0_75], %264 {strides = array<i32>} : memref<256x128xf32, #tpu.memory_space<vmem>>, vector<128x128xf32>,
    }
    %c2_i32_10 = arith.constant 2 : i32
    return
  }
  func.func @transform_0(%arg0: i32) -> (i32, i32) {
    %c0_i32 = arith.constant 0 : i32
    %c0_i32_0 = arith.constant 0 : i32
    %c0_i32_1 = arith.constant 0 : i32
    return %c0_i32, %c0_i32_0 : i32, i32
  }
  func.func @transform_1(%arg0: i32) -> (i32, i32) {
    %c0_i32 = arith.constant 0 : i32
    %c0_i32_0 = arith.constant 0 : i32
    %c0_i32_1 = arith.constant 0 : i32
    return %c0_i32, %c0_i32_0 : i32, i32
  }
  func.func @transform_2(%arg0: i32) -> (i32, i32) {
    %c0_i32 = arith.constant 0 : i32
    %c0_i32_0 = arith.constant 0 : i32
    %c0_i32_1 = arith.constant 0 : i32
    return %c0_i32, %c0_i32_0 : i32, i32
  }
  func.func @transform_3(%arg0: i32) -> (i32, i32) {
    %c0_i32 = arith.constant 0 : i32
    %c0_i32_0 = arith.constant 0 : i32
    %c0_i32_1 = arith.constant 0 : i32
    return %c0_i32, %c0_i32_0 : i32, i32
  }
  func.func @transform_4(%arg0: i32) -> (i32, i32) {
    %c0_i32 = arith.constant 0 : i32
    %c0_i32_0 = arith.constant 0 : i32
    %c0_i32_1 = arith.constant 0 : i32
    return %c0_i32, %c0_i32_0 : i32, i32
  }
  func.func @transform_5(%arg0: i32) -> (i32, i32) {
    %c0_i32 = arith.constant 0 : i32
    %c0_i32_0 = arith.constant 0 : i32
    %c0_i32_1 = arith.constant 0 : i32
    return %c0_i32, %c0_i32_0 : i32, i32
  }
  func.func @transform_6(%arg0: i32) -> (i32, i32) {
    %c0_i32 = arith.constant 0 : i32
    %c0_i32_0 = arith.constant 0 : i32
    %c0_i32_1 = arith.constant 0 : i32
    return %c0_i32, %c0_i32_0 : i32, i32
  }
  func.func @transform_7(%arg0: i32) -> (i32, i32) {
    %c0_i32 = arith.constant 0 : i32
    %c0_i32_0 = arith.constant 0 : i32
    %c0_i32_1 = arith.constant 0 : i32
    return %c0_i32, %c0_i32_0 : i32, i32
  }
  func.func @transform_8(%arg0: i32) -> (i32, i32) {
    %c0_i32 = arith.constant 0 : i32
    %c0_i32_0 = arith.constant 0 : i32
    %c0_i32_1 = arith.constant 0 : i32
    return %c0_i32, %c0_i32_0 : i32, i32
  }
}

</mosaic_0001>

<llo_original>
// kernel: tpu_custom_call.1
$region0: #{tpu_custom_call.1}
  #allocation0 [shape = 'u32[]', space=smem, size = 0x4, offset = 0x4, fixed_abs, tag = 'smem constant byte address 0x4 - core index']
  #allocation1 [shape = 'u32[72,128]{1,0:T(1,128)}', space=vmem, size = 0x9000, scoped, tag = 'internal scratch']
  #allocation2 [shape = 'f32[256,128]{1,0:T(8,128)}', space=vmem, size = 0x20000, scoped, tag = 'scratch operand']
  #allocation3 [shape = 'f32[256,128]{1,0:T(8,128)}', space=vmem, size = 0x20000, scoped, tag = 'scratch operand']
  #allocation4 [shape = 'f32[256,128]{1,0:T(8,128)}', space=vmem, size = 0x20000, scoped, tag = 'scratch operand']
  %s0 = inlined_call_operand.vmem [shape: f32[256,128], index: 0, kind: input, shape index: {}]
  %s1 = inlined_call_operand.vmem [shape: f32[256,1], index: 1, kind: input, shape index: {}]
  %s2 = inlined_call_operand.vmem [shape: f32[1,128], index: 2, kind: input, shape index: {}]
  %s3 = inlined_call_operand.vmem [shape: f32[1,128], index: 3, kind: input, shape index: {}]
  %s4 = inlined_call_operand.hbm [shape: bf16[128,640], index: 4, kind: input, shape index: {}]
  %s5 = inlined_call_operand.vmem [shape: f32[1,128], index: 5, kind: input, shape index: {}]
  %s6 = inlined_call_operand.vmem [shape: f32[1,128], index: 6, kind: input, shape index: {}]
  %s7 = inlined_call_operand.hbm [shape: bf16[128,128], index: 7, kind: input, shape index: {}]
  %s8 = inlined_call_operand.hbm [shape: f32[256,128], index: 8, kind: output, shape index: {}]
  %s9 = sld [smem:[#allocation0]]
  $region64: #{tpu_custom_call.1} parent=0
    _
  %s11 = ssub.s32 1, %s9
  %s12 = scalar_select 0, %s11, %s9
  $region1: #{tpu_custom_call.1} parent=0
    #allocation5 [shape = 'u8[163840]{0}', space=vmem, size = 0x28000, scoped, tag = 'input window, operand 4, single buffered']
    #allocation6 [shape = 's32[1]{0}', space=sflag, size = 0x4, scoped, tag = 'scoped memory for tpu_custom_call.1']
    #allocation7 [shape = 's32[1]{0}', space=sflag, size = 0x4, scoped, tag = 'scoped memory for tpu_custom_call.1']
    #allocation8 [shape = 'u8[32768]{0}', space=vmem, size = 0x8000, scoped, tag = 'input window, operand 7, single buffered']
    #allocation9 [shape = 's32[1]{0}', space=sflag, size = 0x4, scoped, tag = 'scoped memory for tpu_custom_call.1']
    #allocation10 [shape = 'u8[131072]{0}', space=vmem, size = 0x20000, scoped, tag = 'output window, operand 0, single buffered']
    %13 = vsyncpa [#allocation6], 0
    %14 = vsyncpa [#allocation9], 0
    %15 = vsyncpa [#allocation7], 0
    // Predicated region
    $region2: #{tpu_custom_call.1} parent=1 // pred_check
      _
    $region3: #{tpu_custom_call.1} parent=1 // pred_check_branch
      %17 = sbr.rel (0) target = $region5
    $region4: #{tpu_custom_call.1} parent=1 // pred_region
      _
    $region5: #{tpu_custom_call.1} parent=1 // pred_fallthru
      _
    // Predicated region
    $region6: #{tpu_custom_call.1} parent=1 // pred_check
      _
    $region7: #{tpu_custom_call.1} parent=1 // pred_check_branch
      %19 = sbr.rel (0) target = $region9
    $region8: #{tpu_custom_call.1} parent=1 // pred_region
      _
    $region9: #{tpu_custom_call.1} parent=1 // pred_fallthru
      _
    // Predicated region
    $region10: #{tpu_custom_call.1} parent=1 // pred_check
      _
    $region11: #{tpu_custom_call.1} parent=1 // pred_check_branch
      %21 = sbr.rel (0) target = $region13
    $region12: #{tpu_custom_call.1} parent=1 // pred_region
      _
    $region13: #{tpu_custom_call.1} parent=1 // pred_fallthru
      _
    // Predicated region
    $region14: #{tpu_custom_call.1} parent=1 // pred_check
      _
    $region15: #{tpu_custom_call.1} parent=1 // pred_check_branch
      %23 = sbr.rel (0) target = $region17
    $region16: #{tpu_custom_call.1} parent=1 // pred_region
      _
    $region17: #{tpu_custom_call.1} parent=1 // pred_fallthru
      _
    // Predicated region
    $region18: #{tpu_custom_call.1} parent=1 // pred_check
      _
    $region19: #{tpu_custom_call.1} parent=1 // pred_check_branch
      %25 = sbr.rel (0) target = $region21
    $region20: #{tpu_custom_call.1} parent=1 // pred_region
      %27 = vsyncadd [#allocation6], 0
      %s28 = sshll.u32 %s4, 4
      %s29 = int_to_ptr.hbm [resolvable:$true] %s28
      %s30 = sshll.u32 [#allocation5], 4
      %s31 = int_to_ptr.vmem [resolvable:$true] %s30
      %36 = dma.hbm_to_vmem [thread:$0]  %s29, 5120, %s31, [#allocation6], 320, 320, 20
    $region21: #{tpu_custom_call.1} parent=1 // pred_fallthru
      _
    // Predicated region
    $region22: #{tpu_custom_call.1} parent=1 // pred_check
      _
    $region23: #{tpu_custom_call.1} parent=1 // pred_check_branch
      %38 = sbr.rel (0) target = $region25
    $region24: #{tpu_custom_call.1} parent=1 // pred_region
      _
    $region25: #{tpu_custom_call.1} parent=1 // pred_fallthru
      _
    // Predicated region
    $region26: #{tpu_custom_call.1} parent=1 // pred_check
      _
    $region27: #{tpu_custom_call.1} parent=1 // pred_check_branch
      %40 = sbr.rel (0) target = $region29
    $region28: #{tpu_custom_call.1} parent=1 // pred_region
      _
    $region29: #{tpu_custom_call.1} parent=1 // pred_fallthru
      _
    // Predicated region
    $region30: #{tpu_custom_call.1} parent=1 // pred_check
      _
    $region31: #{tpu_custom_call.1} parent=1 // pred_check_branch
      %42 = sbr.rel (0) target = $region33
    $region32: #{tpu_custom_call.1} parent=1 // pred_region
      %44 = vsyncadd [#allocation9], 0
      %s45 = sshll.u32 %s7, 4
      %s46 = int_to_ptr.hbm [resolvable:$true] %s45
      %s47 = sshll.u32 [#allocation8], 4
      %s48 = int_to_ptr.vmem [resolvable:$true] %s47
      %53 = dma.hbm_to_vmem [thread:$0]  %s46, 1024, %s48, [#allocation9], 64, 64, 4
    $region33: #{tpu_custom_call.1} parent=1 // pred_fallthru
      _
    // Predicated region
    $region34: #{tpu_custom_call.1} parent=1 // pred_check
      _
    $region35: #{tpu_custom_call.1} parent=1 // pred_check_branch
      %55 = sbr.rel (0) target = $region37
    $region36: #{tpu_custom_call.1} parent=1 // pred_region
      %57 = dma.done [#allocation6], 5120
    $region37: #{tpu_custom_call.1} parent=1 // pred_fallthru
      _
    // Predicated region
    $region38: #{tpu_custom_call.1} parent=1 // pred_check
      _
    $region39: #{tpu_custom_call.1} parent=1 // pred_check_branch
      %59 = sbr.rel (0) target = $region41
    $region40: #{tpu_custom_call.1} parent=1 // pred_region
      %61 = dma.done [#allocation9], 1024
    $region41: #{tpu_custom_call.1} parent=1 // pred_fallthru
      _
    %v62 = vld [vmem:[%s2] sm:$0x1]
    %v63 = vld [vmem:[%s3] sm:$0x1]
    loop: start=0, step=1, limit=4
    $region42: #{tpu_custom_call.1} parent=1 // loop_pre_header
      _
    $region43: #{tpu_custom_call.1} parent=1 // loop_header
      %s65 = sphi 0, %s69
      %p66 = scmp.ge.s32.totalorder %s65, 4
    $region44: #{tpu_custom_call.1} parent=1 // loop_header_branch
      %68 = sbr.rel (%p66) target = $region48
    $region45: #{tpu_custom_call.1} parent=1 // loop_body
      %s70 = smul.u32 %s65, 64
      %s71 = scalar_lea.vmem %s0, %s70
      %v72 = vld [vmem:[%s71] sm:$0xff]
      %v73 = vld [vmem:[%s71 + $0x8] sm:$0xff]
      %v74 = vld [vmem:[%s71 + $0x10] sm:$0xff]
      %v75 = vld [vmem:[%s71 + $0x18] sm:$0xff]
      %v76 = vld [vmem:[%s71 + $0x20] sm:$0xff]
      %v77 = vld [vmem:[%s71 + $0x28] sm:$0xff]
      %v78 = vld [vmem:[%s71 + $0x30] sm:$0xff]
      %v79 = vld [vmem:[%s71 + $0x38] sm:$0xff]
      %80 = vadd.xlane.f32.xlu0 %v72
      %v81 = vpop.xlane.xlu0 %80
      %82 = vadd.xlane.f32.xlu0 %v73
      %v83 = vpop.xlane.xlu0 %82
      %84 = vadd.xlane.f32.xlu0 %v74
      %v85 = vpop.xlane.xlu0 %84
      %86 = vadd.xlane.f32.xlu0 %v75
      %v87 = vpop.xlane.xlu0 %86
      %88 = vadd.xlane.f32.xlu0 %v76
      %v89 = vpop.xlane.xlu0 %88
      %90 = vadd.xlane.f32.xlu0 %v77
      %v91 = vpop.xlane.xlu0 %90
      %92 = vadd.xlane.f32.xlu0 %v78
      %v93 = vpop.xlane.xlu0 %92
      %94 = vadd.xlane.f32.xlu0 %v79
      %v95 = vpop.xlane.xlu0 %94
      %v96 = vmul.f32 %v81, 0.0078125
      %v97 = vmul.f32 %v83, 0.0078125
      %v98 = vmul.f32 %v85, 0.0078125
      %v99 = vmul.f32 %v87, 0.0078125
      %v100 = vmul.f32 %v89, 0.0078125
      %v101 = vmul.f32 %v91, 0.0078125
      %v102 = vmul.f32 %v93, 0.0078125
      %v103 = vmul.f32 %v95, 0.0078125
      %v104 = vmul.f32 %v72, %v72
      %v105 = vmul.f32 %v73, %v73
      %v106 = vmul.f32 %v74, %v74
      %v107 = vmul.f32 %v75, %v75
      %v108 = vmul.f32 %v76, %v76
      %v109 = vmul.f32 %v77, %v77
      %v110 = vmul.f32 %v78, %v78
      %v111 = vmul.f32 %v79, %v79
      %112 = vadd.xlane.f32.xlu0 %v104
      %v113 = vpop.xlane.xlu0 %112
      %114 = vadd.xlane.f32.xlu0 %v105
      %v115 = vpop.xlane.xlu0 %114
      %116 = vadd.xlane.f32.xlu0 %v106
      %v117 = vpop.xlane.xlu0 %116
      %118 = vadd.xlane.f32.xlu0 %v107
      %v119 = vpop.xlane.xlu0 %118
      %120 = vadd.xlane.f32.xlu0 %v108
      %v121 = vpop.xlane.xlu0 %120
      %122 = vadd.xlane.f32.xlu0 %v109
      %v123 = vpop.xlane.xlu0 %122
      %124 = vadd.xlane.f32.xlu0 %v110
      %v125 = vpop.xlane.xlu0 %124
      %126 = vadd.xlane.f32.xlu0 %v111
      %v127 = vpop.xlane.xlu0 %126
      %v128 = vmul.f32 %v113, 0.0078125
      %v129 = vmul.f32 %v115, 0.0078125
      %v130 = vmul.f32 %v117, 0.0078125
      %v131 = vmul.f32 %v119, 0.0078125
      %v132 = vmul.f32 %v121, 0.0078125
      %v133 = vmul.f32 %v123, 0.0078125
      %v134 = vmul.f32 %v125, 0.0078125
      %v135 = vmul.f32 %v127, 0.0078125
      %v136 = vmul.f32 %v96, %v96
      %v137 = vmul.f32 %v97, %v97
      %v138 = vmul.f32 %v98, %v98
      %v139 = vmul.f32 %v99, %v99
      %v140 = vmul.f32 %v100, %v100
      %v141 = vmul.f32 %v101, %v101
      %v142 = vmul.f32 %v102, %v102
      %v143 = vmul.f32 %v103, %v103
      %v144 = vsub.f32 %v128, %v136
      %v145 = vsub.f32 %v129, %v137
      %v146 = vsub.f32 %v130, %v138
      %v147 = vsub.f32 %v131, %v139
      %v148 = vsub.f32 %v132, %v140
      %v149 = vsub.f32 %v133, %v141
      %v150 = vsub.f32 %v134, %v142
      %v151 = vsub.f32 %v135, %v143
      %v152 = vsub.f32 %v72, %v96
      %v153 = vsub.f32 %v73, %v97
      %v154 = vsub.f32 %v74, %v98
      %v155 = vsub.f32 %v75, %v99
      %v156 = vsub.f32 %v76, %v100
      %v157 = vsub.f32 %v77, %v101
      %v158 = vsub.f32 %v78, %v102
      %v159 = vsub.f32 %v79, %v103
      %v160 = vadd.f32 %v144, 1e-05
      %v161 = vadd.f32 %v145, 1e-05
      %v162 = vadd.f32 %v146, 1e-05
      %v163 = vadd.f32 %v147, 1e-05
      %v164 = vadd.f32 %v148, 1e-05
      %v165 = vadd.f32 %v149, 1e-05
      %v166 = vadd.f32 %v150, 1e-05
      %v167 = vadd.f32 %v151, 1e-05
      %v168 = vrsqrt.pop %v160
      %v169 = vmul.f32 %v168, %v160
      %v170 = vmul.f32 %v169, %v168
      %v171 = vmul.f32 0.5, %v170
      %v172 = vsub.f32 1.5, %v171
      %v173 = vmul.f32 %v168, %v172
      %vm174 = vweird.f32 %v160
      %vm175 = vweird.f32 %v168
      %vm176 = vmor %vm174, %vm175
      %v177 = vsel %vm176, %v168, %v173
      %v178 = vrsqrt.pop %v161
      %v179 = vmul.f32 %v178, %v161
      %v180 = vmul.f32 %v179, %v178
      %v181 = vmul.f32 0.5, %v180
      %v182 = vsub.f32 1.5, %v181
      %v183 = vmul.f32 %v178, %v182
      %vm184 = vweird.f32 %v161
      %vm185 = vweird.f32 %v178
      %vm186 = vmor %vm184, %vm185
      %v187 = vsel %vm186, %v178, %v183
      %v188 = vrsqrt.pop %v162
      %v189 = vmul.f32 %v188, %v162
      %v190 = vmul.f32 %v189, %v188
      %v191 = vmul.f32 0.5, %v190
      %v192 = vsub.f32 1.5, %v191
      %v193 = vmul.f32 %v188, %v192
      %vm194 = vweird.f32 %v162
      %vm195 = vweird.f32 %v188
      %vm196 = vmor %vm194, %vm195
      %v197 = vsel %vm196, %v188, %v193
      %v198 = vrsqrt.pop %v163
      %v199 = vmul.f32 %v198, %v163
      %v200 = vmul.f32 %v199, %v198
      %v201 = vmul.f32 0.5, %v200
      %v202 = vsub.f32 1.5, %v201
      %v203 = vmul.f32 %v198, %v202
      %vm204 = vweird.f32 %v163
      %vm205 = vweird.f32 %v198
      %vm206 = vmor %vm204, %vm205
      %v207 = vsel %vm206, %v198, %v203
      %v208 = vrsqrt.pop %v164
      %v209 = vmul.f32 %v208, %v164
      %v210 = vmul.f32 %v209, %v208
      %v211 = vmul.f32 0.5, %v210
      %v212 = vsub.f32 1.5, %v211
      %v213 = vmul.f32 %v208, %v212
      %vm214 = vweird.f32 %v164
      %vm215 = vweird.f32 %v208
      %vm216 = vmor %vm214, %vm215
      %v217 = vsel %vm216, %v208, %v213
      %v218 = vrsqrt.pop %v165
      %v219 = vmul.f32 %v218, %v165
      %v220 = vmul.f32 %v219, %v218
      %v221 = vmul.f32 0.5, %v220
      %v222 = vsub.f32 1.5, %v221
      %v223 = vmul.f32 %v218, %v222
      %vm224 = vweird.f32 %v165
      %vm225 = vweird.f32 %v218
      %vm226 = vmor %vm224, %vm225
      %v227 = vsel %vm226, %v218, %v223
      %v228 = vrsqrt.pop %v166
      %v229 = vmul.f32 %v228, %v166
      %v230 = vmul.f32 %v229, %v228
      %v231 = vmul.f32 0.5, %v230
      %v232 = vsub.f32 1.5, %v231
      %v233 = vmul.f32 %v228, %v232
      %vm234 = vweird.f32 %v166
      %vm235 = vweird.f32 %v228
      %vm236 = vmor %vm234, %vm235
      %v237 = vsel %vm236, %v228, %v233
      %v238 = vrsqrt.pop %v167
      %v239 = vmul.f32 %v238, %v167
      %v240 = vmul.f32 %v239, %v238
      %v241 = vmul.f32 0.5, %v240
      %v242 = vsub.f32 1.5, %v241
      %v243 = vmul.f32 %v238, %v242
      %vm244 = vweird.f32 %v167
      %vm245 = vweird.f32 %v238
      %vm246 = vmor %vm244, %vm245
      %v247 = vsel %vm246, %v238, %v243
      %v248 = vmul.f32 %v152, %v177
      %v249 = vmul.f32 %v153, %v187
      %v250 = vmul.f32 %v154, %v197
      %v251 = vmul.f32 %v155, %v207
      %v252 = vmul.f32 %v156, %v217
      %v253 = vmul.f32 %v157, %v227
      %v254 = vmul.f32 %v158, %v237
      %v255 = vmul.f32 %v159, %v247
      %v257 = vperm.slane %v62, 0
      %v259 = vmul.f32 %v248, %v257
      %v260 = vmul.f32 %v249, %v257
      %v261 = vmul.f32 %v250, %v257
      %v262 = vmul.f32 %v251, %v257
      %v263 = vmul.f32 %v252, %v257
      %v264 = vmul.f32 %v253, %v257
      %v265 = vmul.f32 %v254, %v257
      %v266 = vmul.f32 %v255, %v257
      %v268 = vperm.slane %v63, 0
      %v270 = vadd.f32 %v259, %v268
      %v271 = vadd.f32 %v260, %v268
      %v272 = vadd.f32 %v261, %v268
      %v273 = vadd.f32 %v262, %v268
      %v274 = vadd.f32 %v263, %v268
      %v275 = vadd.f32 %v264, %v268
      %v276 = vadd.f32 %v265, %v268
      %v277 = vadd.f32 %v266, %v268
      %v278 = vpack.c.bf16 %v271, %v270
      %v279 = vpack.c.bf16 %v273, %v272
      %v280 = vpack.c.bf16 %v275, %v274
      %v281 = vpack.c.bf16 %v277, %v276
      %v282 = vld [vmem:[#allocation5] sm:$0xff]
      %v283 = vld [vmem:[#allocation5 + $0x8] sm:$0xff]
      %v284 = vld [vmem:[#allocation5 + $0x10] sm:$0xf]
      %v285 = vld [vmem:[#allocation5 + $0x14] sm:$0xff]
      %v286 = vld [vmem:[#allocation5 + $0x1c] sm:$0xff]
      %v287 = vld [vmem:[#allocation5 + $0x24] sm:$0xf]
      %v288 = vld [vmem:[#allocation5 + $0x28] sm:$0xff]
      %v289 = vld [vmem:[#allocation5 + $0x30] sm:$0xff]
      %v290 = vld [vmem:[#allocation5 + $0x38] sm:$0xf]
      %v291 = vld [vmem:[#allocation5 + $0x3c] sm:$0xff]
      %v292 = vld [vmem:[#allocation5 + $0x44] sm:$0xff]
      %v293 = vld [vmem:[#allocation5 + $0x4c] sm:$0xf]
      %v294 = vld [vmem:[#allocation5 + $0x50] sm:$0xff]
      %v295 = vld [vmem:[#allocation5 + $0x58] sm:$0xff]
      %v296 = vld [vmem:[#allocation5 + $0x60] sm:$0xf]
      %v297 = vld [vmem:[#allocation5 + $0x64] sm:$0xff]
      %v298 = vld [vmem:[#allocation5 + $0x6c] sm:$0xff]
      %v299 = vld [vmem:[#allocation5 + $0x74] sm:$0xf]
      %v300 = vld [vmem:[#allocation5 + $0x78] sm:$0xff]
      %v301 = vld [vmem:[#allocation5 + $0x80] sm:$0xff]
      %v302 = vld [vmem:[#allocation5 + $0x88] sm:$0xf]
      %v303 = vld [vmem:[#allocation5 + $0x8c] sm:$0xff]
      %v304 = vld [vmem:[#allocation5 + $0x94] sm:$0xff]
      %v305 = vld [vmem:[#allocation5 + $0x9c] sm:$0xf]
      %v306 = vld [vmem:[#allocation5 + $0xa0] sm:$0xff]
      %v307 = vld [vmem:[#allocation5 + $0xa8] sm:$0xff]
      %v308 = vld [vmem:[#allocation5 + $0xb0] sm:$0xf]
      %v309 = vld [vmem:[#allocation5 + $0xb4] sm:$0xff]
      %v310 = vld [vmem:[#allocation5 + $0xbc] sm:$0xff]
      %v311 = vld [vmem:[#allocation5 + $0xc4] sm:$0xf]
      %v312 = vld [vmem:[#allocation5 + $0xc8] sm:$0xff]
      %v313 = vld [vmem:[#allocation5 + $0xd0] sm:$0xff]
      %v314 = vld [vmem:[#allocation5 + $0xd8] sm:$0xf]
      %v315 = vld [vmem:[#allocation5 + $0xdc] sm:$0xff]
      %v316 = vld [vmem:[#allocation5 + $0xe4] sm:$0xff]
      %v317 = vld [vmem:[#allocation5 + $0xec] sm:$0xf]
      %v318 = vld [vmem:[#allocation5 + $0xf0] sm:$0xff]
      %v319 = vld [vmem:[#allocation5 + $0xf8] sm:$0xff]
      %v320 = vld [vmem:[#allocation5 + $0x100] sm:$0xf]
      %v321 = vld [vmem:[#allocation5 + $0x104] sm:$0xff]
      %v322 = vld [vmem:[#allocation5 + $0x10c] sm:$0xff]
      %v323 = vld [vmem:[#allocation5 + $0x114] sm:$0xf]
      %v324 = vld [vmem:[#allocation5 + $0x118] sm:$0xff]
      %v325 = vld [vmem:[#allocation5 + $0x120] sm:$0xff]
      %v326 = vld [vmem:[#allocation5 + $0x128] sm:$0xf]
      %v327 = vld [vmem:[#allocation5 + $0x12c] sm:$0xff]
      %v328 = vld [vmem:[#allocation5 + $0x134] sm:$0xff]
      %v329 = vld [vmem:[#allocation5 + $0x13c] sm:$0xf]
      %v378 = vunpack.c.l.b16 %v282
      %v379 = vunpack.c.h.b16 %v282
      %v380 = vunpack.c.l.b16 %v283
      %v381 = vunpack.c.h.b16 %v283
      %v382 = vunpack.c.l.b16 %v284
      %v383 = vunpack.c.l.b16 %v285
      %v384 = vunpack.c.h.b16 %v285
      %v385 = vunpack.c.l.b16 %v286
      %v386 = vunpack.c.h.b16 %v286
      %v387 = vunpack.c.l.b16 %v287
      %v388 = vunpack.c.l.b16 %v288
      %v389 = vunpack.c.h.b16 %v288
      %v390 = vunpack.c.l.b16 %v289
      %v391 = vunpack.c.h.b16 %v289
      %v392 = vunpack.c.l.b16 %v290
      %v393 = vunpack.c.l.b16 %v291
      %v394 = vunpack.c.h.b16 %v291
      %v395 = vunpack.c.l.b16 %v292
      %v396 = vunpack.c.h.b16 %v292
      %v397 = vunpack.c.l.b16 %v293
      %v398 = vunpack.c.l.b16 %v294
      %v399 = vunpack.c.h.b16 %v294
      %v400 = vunpack.c.l.b16 %v295
      %v401 = vunpack.c.h.b16 %v295
      %v402 = vunpack.c.l.b16 %v296
      %v403 = vunpack.c.l.b16 %v297
      %v404 = vunpack.c.h.b16 %v297
      %v405 = vunpack.c.l.b16 %v298
      %v406 = vunpack.c.h.b16 %v298
      %v407 = vunpack.c.l.b16 %v299
      %v408 = vunpack.c.l.b16 %v300
      %v409 = vunpack.c.h.b16 %v300
      %v410 = vunpack.c.l.b16 %v301
      %v411 = vunpack.c.h.b16 %v301
      %v412 = vunpack.c.l.b16 %v302
      %v413 = vunpack.c.l.b16 %v303
      %v414 = vunpack.c.h.b16 %v303
      %v415 = vunpack.c.l.b16 %v304
      %v416 = vunpack.c.h.b16 %v304
      %v417 = vunpack.c.l.b16 %v305
      %v418 = vunpack.c.l.b16 %v306
      %v419 = vunpack.c.h.b16 %v306
      %v420 = vunpack.c.l.b16 %v307
      %v421 = vunpack.c.h.b16 %v307
      %v422 = vunpack.c.l.b16 %v308
      %v423 = vunpack.c.l.b16 %v309
      %v424 = vunpack.c.h.b16 %v309
      %v425 = vunpack.c.l.b16 %v310
      %v426 = vunpack.c.h.b16 %v310
      %v427 = vunpack.c.l.b16 %v311
      %v428 = vunpack.c.l.b16 %v312
      %v429 = vunpack.c.h.b16 %v312
      %v430 = vunpack.c.l.b16 %v313
      %v431 = vunpack.c.h.b16 %v313
      %v432 = vunpack.c.l.b16 %v314
      %v433 = vunpack.c.l.b16 %v315
      %v434 = vunpack.c.h.b16 %v315
      %v435 = vunpack.c.l.b16 %v316
      %v436 = vunpack.c.h.b16 %v316
      %v437 = vunpack.c.l.b16 %v317
      %v438 = vunpack.c.l.b16 %v318
      %v439 = vunpack.c.h.b16 %v318
      %v440 = vunpack.c.l.b16 %v319
      %v441 = vunpack.c.h.b16 %v319
      %v442 = vunpack.c.l.b16 %v320
      %v443 = vunpack.c.l.b16 %v321
      %v444 = vunpack.c.h.b16 %v321
      %v445 = vunpack.c.l.b16 %v322
      %v446 = vunpack.c.h.b16 %v322
      %v447 = vunpack.c.l.b16 %v323
      %v448 = vunpack.c.l.b16 %v324
      %v449 = vunpack.c.h.b16 %v324
      %v450 = vunpack.c.l.b16 %v325
      %v451 = vunpack.c.h.b16 %v325
      %v452 = vunpack.c.l.b16 %v326
      %v453 = vunpack.c.l.b16 %v327
      %v454 = vunpack.c.h.b16 %v327
      %v455 = vunpack.c.l.b16 %v328
      %v456 = vunpack.c.h.b16 %v328
      %v457 = vunpack.c.l.b16 %v329
      %v458 = vpack.c.b16 %v383, %v378
      %v459 = vpack.c.b16 %v384, %v379
      %v460 = vpack.c.b16 %v385, %v380
      %v461 = vpack.c.b16 %v386, %v381
      %v462 = vpack.c.b16 %v387, %v382
      %v463 = vpack.c.b16 %v393, %v388
      %v464 = vpack.c.b16 %v394, %v389
      %v465 = vpack.c.b16 %v395, %v390
      %v466 = vpack.c.b16 %v396, %v391
      %v467 = vpack.c.b16 %v397, %v392
      %v468 = vpack.c.b16 %v403, %v398
      %v469 = vpack.c.b16 %v404, %v399
      %v470 = vpack.c.b16 %v405, %v400
      %v471 = vpack.c.b16 %v406, %v401
      %v472 = vpack.c.b16 %v407, %v402
      %v473 = vpack.c.b16 %v413, %v408
      %v474 = vpack.c.b16 %v414, %v409
      %v475 = vpack.c.b16 %v415, %v410
      %v476 = vpack.c.b16 %v416, %v411
      %v477 = vpack.c.b16 %v417, %v412
      %v478 = vpack.c.b16 %v423, %v418
      %v479 = vpack.c.b16 %v424, %v419
      %v480 = vpack.c.b16 %v425, %v420
      %v481 = vpack.c.b16 %v426, %v421
      %v482 = vpack.c.b16 %v427, %v422
      %v483 = vpack.c.b16 %v433, %v428
      %v484 = vpack.c.b16 %v434, %v429
      %v485 = vpack.c.b16 %v435, %v430
      %v486 = vpack.c.b16 %v436, %v431
      %v487 = vpack.c.b16 %v437, %v432
      %v488 = vpack.c.b16 %v443, %v438
      %v489 = vpack.c.b16 %v444, %v439
      %v490 = vpack.c.b16 %v445, %v440
      %v491 = vpack.c.b16 %v446, %v441
      %v492 = vpack.c.b16 %v447, %v442
      %v493 = vpack.c.b16 %v453, %v448
      %v494 = vpack.c.b16 %v454, %v449
      %v495 = vpack.c.b16 %v455, %v450
      %v496 = vpack.c.b16 %v456, %v451
      %v497 = vpack.c.b16 %v457, %v452
      %538 = vmatpush.bf16.msra.mxu0 %v493
      %539 = vmatpush.bf16.msra.mxu0 %v488
      %540 = vmatpush.bf16.msra.mxu0 %v483
      %541 = vmatpush.bf16.msra.mxu0 %v478
      %542 = vmatpush.bf16.msra.mxu0 %v473
      %543 = vmatpush.bf16.msra.mxu0 %v468
      %544 = vmatpush.bf16.msra.mxu0 %v463
      %545 = vmatpush.bf16.msra.mxu0 %v458
      %546 = vmatmul.bf16.gmra.mxu0 %v278
      %v547 = vpop.f32.mrf.mxu0
      %v548 = vadd.f32 0.0, %v547
      %v549 = vpop.f32.mrf.mxu0
      %v550 = vadd.f32 0.0, %v549
      %551 = vmatmul.bf16.gmra.mxu0 %v279
      %v552 = vpop.f32.mrf.mxu0
      %v553 = vadd.f32 0.0, %v552
      %v554 = vpop.f32.mrf.mxu0
      %v555 = vadd.f32 0.0, %v554
      %556 = vmatmul.bf16.gmra.mxu0 %v280
      %v557 = vpop.f32.mrf.mxu0
      %v558 = vadd.f32 0.0, %v557
      %v559 = vpop.f32.mrf.mxu0
      %v560 = vadd.f32 0.0, %v559
      %561 = vmatmul.bf16.gmra.mxu0 %v281
      %v562 = vpop.f32.mrf.mxu0
      %v563 = vadd.f32 0.0, %v562
      %v564 = vpop.f32.mrf.mxu0
      %v565 = vadd.f32 0.0, %v564
      %566 = vdwg.mxu0
      %567 = vmatpush.bf16.msra.mxu0 %v494
      %568 = vmatpush.bf16.msra.mxu0 %v489
      %569 = vmatpush.bf16.msra.mxu0 %v484
      %570 = vmatpush.bf16.msra.mxu0 %v479
      %571 = vmatpush.bf16.msra.mxu0 %v474
      %572 = vmatpush.bf16.msra.mxu0 %v469
      %573 = vmatpush.bf16.msra.mxu0 %v464
      %574 = vmatpush.bf16.msra.mxu0 %v459
      %575 = vmatmul.bf16.gmra.mxu0 %v278
      %v576 = vpop.f32.mrf.mxu0
      %v577 = vadd.f32 0.0, %v576
      %v578 = vpop.f32.mrf.mxu0
      %v579 = vadd.f32 0.0, %v578
      %580 = vmatmul.bf16.gmra.mxu0 %v279
      %v581 = vpop.f32.mrf.mxu0
      %v582 = vadd.f32 0.0, %v581
      %v583 = vpop.f32.mrf.mxu0
      %v584 = vadd.f32 0.0, %v583
      %585 = vmatmul.bf16.gmra.mxu0 %v280
      %v586 = vpop.f32.mrf.mxu0
      %v587 = vadd.f32 0.0, %v586
      %v588 = vpop.f32.mrf.mxu0
      %v589 = vadd.f32 0.0, %v588
      %590 = vmatmul.bf16.gmra.mxu0 %v281
      %v591 = vpop.f32.mrf.mxu0
      %v592 = vadd.f32 0.0, %v591
      %v593 = vpop.f32.mrf.mxu0
      %v594 = vadd.f32 0.0, %v593
      %595 = vdwg.mxu0
      %596 = vmatpush.bf16.msra.mxu0 %v495
      %597 = vmatpush.bf16.msra.mxu0 %v490
      %598 = vmatpush.bf16.msra.mxu0 %v485
      %599 = vmatpush.bf16.msra.mxu0 %v480
      %600 = vmatpush.bf16.msra.mxu0 %v475
      %601 = vmatpush.bf16.msra.mxu0 %v470
      %602 = vmatpush.bf16.msra.mxu0 %v465
      %603 = vmatpush.bf16.msra.mxu0 %v460
      %604 = vmatmul.bf16.gmra.mxu0 %v278
      %v605 = vpop.f32.mrf.mxu0
      %v606 = vadd.f32 0.0, %v605
      %v607 = vpop.f32.mrf.mxu0
      %v608 = vadd.f32 0.0, %v607
      %609 = vmatmul.bf16.gmra.mxu0 %v279
      %v610 = vpop.f32.mrf.mxu0
      %v611 = vadd.f32 0.0, %v610
      %v612 = vpop.f32.mrf.mxu0
      %v613 = vadd.f32 0.0, %v612
      %614 = vmatmul.bf16.gmra.mxu0 %v280
      %v615 = vpop.f32.mrf.mxu0
      %v616 = vadd.f32 0.0, %v615
      %v617 = vpop.f32.mrf.mxu0
      %v618 = vadd.f32 0.0, %v617
      %619 = vmatmul.bf16.gmra.mxu0 %v281
      %v620 = vpop.f32.mrf.mxu0
      %v621 = vadd.f32 0.0, %v620
      %v622 = vpop.f32.mrf.mxu0
      %v623 = vadd.f32 0.0, %v622
      %624 = vdwg.mxu0
      %625 = vmatpush.bf16.msra.mxu0 %v496
      %626 = vmatpush.bf16.msra.mxu0 %v491
      %627 = vmatpush.bf16.msra.mxu0 %v486
      %628 = vmatpush.bf16.msra.mxu0 %v481
      %629 = vmatpush.bf16.msra.mxu0 %v476
      %630 = vmatpush.bf16.msra.mxu0 %v471
      %631 = vmatpush.bf16.msra.mxu0 %v466
      %632 = vmatpush.bf16.msra.mxu0 %v461
      %633 = vmatmul.bf16.gmra.mxu0 %v278
      %v634 = vpop.f32.mrf.mxu0
      %v635 = vadd.f32 0.0, %v634
      %v636 = vpop.f32.mrf.mxu0
      %v637 = vadd.f32 0.0, %v636
      %638 = vmatmul.bf16.gmra.mxu0 %v279
      %v639 = vpop.f32.mrf.mxu0
      %v640 = vadd.f32 0.0, %v639
      %v641 = vpop.f32.mrf.mxu0
      %v642 = vadd.f32 0.0, %v641
      %643 = vmatmul.bf16.gmra.mxu0 %v280
      %v644 = vpop.f32.mrf.mxu0
      %v645 = vadd.f32 0.0, %v644
      %v646 = vpop.f32.mrf.mxu0
      %v647 = vadd.f32 0.0, %v646
      %648 = vmatmul.bf16.gmra.mxu0 %v281
      %v649 = vpop.f32.mrf.mxu0
      %v650 = vadd.f32 0.0, %v649
      %v651 = vpop.f32.mrf.mxu0
      %v652 = vadd.f32 0.0, %v651
      %653 = vdwg.mxu0
      %654 = vmatpush.bf16.msra.mxu0 %v497
      %655 = vmatpush.bf16.msra.mxu0 %v492
      %656 = vmatpush.bf16.msra.mxu0 %v487
      %657 = vmatpush.bf16.msra.mxu0 %v482
      %658 = vmatpush.bf16.msra.mxu0 %v477
      %659 = vmatpush.bf16.msra.mxu0 %v472
      %660 = vmatpush.bf16.msra.mxu0 %v467
      %661 = vmatpush.bf16.msra.mxu0 %v462
      %662 = vmatmul.bf16.gmra.mxu0 %v278
      %v663 = vpop.f32.mrf.mxu0
      %v664 = vadd.f32 0.0, %v663
      %v665 = vpop.f32.mrf.mxu0
      %v666 = vadd.f32 0.0, %v665
      %667 = vmatmul.bf16.gmra.mxu0 %v279
      %v668 = vpop.f32.mrf.mxu0
      %v669 = vadd.f32 0.0, %v668
      %v670 = vpop.f32.mrf.mxu0
      %v671 = vadd.f32 0.0, %v670
      %672 = vmatmul.bf16.gmra.mxu0 %v280
      %v673 = vpop.f32.mrf.mxu0
      %v674 = vadd.f32 0.0, %v673
      %v675 = vpop.f32.mrf.mxu0
      %v676 = vadd.f32 0.0, %v675
      %677 = vmatmul.bf16.gmra.mxu0 %v281
      %v678 = vpop.f32.mrf.mxu0
      %v679 = vadd.f32 0.0, %v678
      %v680 = vpop.f32.mrf.mxu0
      %v681 = vadd.f32 0.0, %v680
      %682 = vdwg.mxu0
      %s683 = scalar_lea.vmem %s1, %s70
      %v684 = vld [vmem:[%s683] sm:$0xff]
      %v685 = vld [vmem:[%s683 + $0x8] sm:$0xff]
      %v686 = vld [vmem:[%s683 + $0x10] sm:$0xff]
      %v687 = vld [vmem:[%s683 + $0x18] sm:$0xff]
      %v688 = vld [vmem:[%s683 + $0x20] sm:$0xff]
      %v689 = vld [vmem:[%s683 + $0x28] sm:$0xff]
      %v690 = vld [vmem:[%s683 + $0x30] sm:$0xff]
      %v691 = vld [vmem:[%s683 + $0x38] sm:$0xff]
      %693 = vset.pattern.permute.xlu0 0
      %694 = vperm.xlu0 %693, %v684
      %v695 = vpop.permute.xlu0 %694
      %698 = vset.pattern.permute.xlu0 0
      %699 = vperm.xlu0 %698, %v685
      %v700 = vpop.permute.xlu0 %699
      %703 = vset.pattern.permute.xlu0 0
      %704 = vperm.xlu0 %703, %v686
      %v705 = vpop.permute.xlu0 %704
      %708 = vset.pattern.permute.xlu0 0
      %709 = vperm.xlu0 %708, %v687
      %v710 = vpop.permute.xlu0 %709
      %713 = vset.pattern.permute.xlu0 0
      %714 = vperm.xlu0 %713, %v688
      %v715 = vpop.permute.xlu0 %714
      %718 = vset.pattern.permute.xlu0 0
      %719 = vperm.xlu0 %718, %v689
      %v720 = vpop.permute.xlu0 %719
      %723 = vset.pattern.permute.xlu0 0
      %724 = vperm.xlu0 %723, %v690
      %v725 = vpop.permute.xlu0 %724
      %728 = vset.pattern.permute.xlu0 0
      %729 = vperm.xlu0 %728, %v691
      %v730 = vpop.permute.xlu0 %729
      %v732 = vmul.f32 %v548, %v695
      %v733 = vmul.f32 %v550, %v700
      %v734 = vmul.f32 %v553, %v705
      %v735 = vmul.f32 %v555, %v710
      %v736 = vmul.f32 %v558, %v715
      %v737 = vmul.f32 %v560, %v720
      %v738 = vmul.f32 %v563, %v725
      %v739 = vmul.f32 %v565, %v730
      %v740 = vxor.u32 %v606, 2147483648
      %v741 = vxor.u32 %v608, 2147483648
      %v742 = vxor.u32 %v611, 2147483648
      %v743 = vxor.u32 %v613, 2147483648
      %v744 = vxor.u32 %v616, 2147483648
      %v745 = vxor.u32 %v618, 2147483648
      %v746 = vxor.u32 %v621, 2147483648
      %v747 = vxor.u32 %v623, 2147483648
      %v748 = vmul.f32 %v740, 1.442695
      %v749 = vpow.pop %v748
      %v750 = vmul.f32 %v741, 1.442695
      %v751 = vpow.pop %v750
      %v752 = vmul.f32 %v742, 1.442695
      %v753 = vpow.pop %v752
      %v754 = vmul.f32 %v743, 1.442695
      %v755 = vpow.pop %v754
      %v756 = vmul.f32 %v744, 1.442695
      %v757 = vpow.pop %v756
      %v758 = vmul.f32 %v745, 1.442695
      %v759 = vpow.pop %v758
      %v760 = vmul.f32 %v746, 1.442695
      %v761 = vpow.pop %v760
      %v762 = vmul.f32 %v747, 1.442695
      %v763 = vpow.pop %v762
      %v764 = vadd.f32 %v749, 1.0
      %v765 = vadd.f32 %v751, 1.0
      %v766 = vadd.f32 %v753, 1.0
      %v767 = vadd.f32 %v755, 1.0
      %v768 = vadd.f32 %v757, 1.0
      %v769 = vadd.f32 %v759, 1.0
      %v770 = vadd.f32 %v761, 1.0
      %v771 = vadd.f32 %v763, 1.0
      %v772 = vrcp.pop %v764
      %v773 = vmul.f32 %v764, %v772
      %v774 = vsub.f32 1.0, %v773
      %v775 = vmul.f32 %v772, %v774
      %v776 = vadd.f32 %v772, %v775
      %vm777 = vweird.f32 %v764
      %vm778 = vweird.f32 %v772
      %vm779 = vmor %vm777, %vm778
      %v780 = vsel %vm779, %v772, %v776
      %v781 = vand.u32 2147483647, %v764
      %vm782 = vcmp.eq.f32.partialorder %v781, 8.507059e+37
      %v783 = vand.u32 %v764, 2147483648
      %v784 = vor.u32 1.1754944e-38, %v783
      %v785 = vsel %vm782, %v784, %v780
      %v786 = vmul.f32 1.0, %v785
      %v787 = vrcp.pop %v765
      %v788 = vmul.f32 %v765, %v787
      %v789 = vsub.f32 1.0, %v788
      %v790 = vmul.f32 %v787, %v789
      %v791 = vadd.f32 %v787, %v790
      %vm792 = vweird.f32 %v765
      %vm793 = vweird.f32 %v787
      %vm794 = vmor %vm792, %vm793
      %v795 = vsel %vm794, %v787, %v791
      %v796 = vand.u32 2147483647, %v765
      %vm797 = vcmp.eq.f32.partialorder %v796, 8.507059e+37
      %v798 = vand.u32 %v765, 2147483648
      %v799 = vor.u32 1.1754944e-38, %v798
      %v800 = vsel %vm797, %v799, %v795
      %v801 = vmul.f32 1.0, %v800
      %v802 = vrcp.pop %v766
      %v803 = vmul.f32 %v766, %v802
      %v804 = vsub.f32 1.0, %v803
      %v805 = vmul.f32 %v802, %v804
      %v806 = vadd.f32 %v802, %v805
      %vm807 = vweird.f32 %v766
      %vm808 = vweird.f32 %v802
      %vm809 = vmor %vm807, %vm808
      %v810 = vsel %vm809, %v802, %v806
      %v811 = vand.u32 2147483647, %v766
      %vm812 = vcmp.eq.f32.partialorder %v811, 8.507059e+37
      %v813 = vand.u32 %v766, 2147483648
      %v814 = vor.u32 1.1754944e-38, %v813
      %v815 = vsel %vm812, %v814, %v810
      %v816 = vmul.f32 1.0, %v815
      %v817 = vrcp.pop %v767
      %v818 = vmul.f32 %v767, %v817
      %v819 = vsub.f32 1.0, %v818
      %v820 = vmul.f32 %v817, %v819
      %v821 = vadd.f32 %v817, %v820
      %vm822 = vweird.f32 %v767
      %vm823 = vweird.f32 %v817
      %vm824 = vmor %vm822, %vm823
      %v825 = vsel %vm824, %v817, %v821
      %v826 = vand.u32 2147483647, %v767
      %vm827 = vcmp.eq.f32.partialorder %v826, 8.507059e+37
      %v828 = vand.u32 %v767, 2147483648
      %v829 = vor.u32 1.1754944e-38, %v828
      %v830 = vsel %vm827, %v829, %v825
      %v831 = vmul.f32 1.0, %v830
      %v832 = vrcp.pop %v768
      %v833 = vmul.f32 %v768, %v832
      %v834 = vsub.f32 1.0, %v833
      %v835 = vmul.f32 %v832, %v834
      %v836 = vadd.f32 %v832, %v835
      %vm837 = vweird.f32 %v768
      %vm838 = vweird.f32 %v832
      %vm839 = vmor %vm837, %vm838
      %v840 = vsel %vm839, %v832, %v836
      %v841 = vand.u32 2147483647, %v768
      %vm842 = vcmp.eq.f32.partialorder %v841, 8.507059e+37
      %v843 = vand.u32 %v768, 2147483648
      %v844 = vor.u32 1.1754944e-38, %v843
      %v845 = vsel %vm842, %v844, %v840
      %v846 = vmul.f32 1.0, %v845
      %v847 = vrcp.pop %v769
      %v848 = vmul.f32 %v769, %v847
      %v849 = vsub.f32 1.0, %v848
      %v850 = vmul.f32 %v847, %v849
      %v851 = vadd.f32 %v847, %v850
      %vm852 = vweird.f32 %v769
      %vm853 = vweird.f32 %v847
      %vm854 = vmor %vm852, %vm853
      %v855 = vsel %vm854, %v847, %v851
      %v856 = vand.u32 2147483647, %v769
      %vm857 = vcmp.eq.f32.partialorder %v856, 8.507059e+37
      %v858 = vand.u32 %v769, 2147483648
      %v859 = vor.u32 1.1754944e-38, %v858
      %v860 = vsel %vm857, %v859, %v855
      %v861 = vmul.f32 1.0, %v860
      %v862 = vrcp.pop %v770
      %v863 = vmul.f32 %v770, %v862
      %v864 = vsub.f32 1.0, %v863
      %v865 = vmul.f32 %v862, %v864
      %v866 = vadd.f32 %v862, %v865
      %vm867 = vweird.f32 %v770
      %vm868 = vweird.f32 %v862
      %vm869 = vmor %vm867, %vm868
      %v870 = vsel %vm869, %v862, %v866
      %v871 = vand.u32 2147483647, %v770
      %vm872 = vcmp.eq.f32.partialorder %v871, 8.507059e+37
      %v873 = vand.u32 %v770, 2147483648
      %v874 = vor.u32 1.1754944e-38, %v873
      %v875 = vsel %vm872, %v874, %v870
      %v876 = vmul.f32 1.0, %v875
      %v877 = vrcp.pop %v771
      %v878 = vmul.f32 %v771, %v877
      %v879 = vsub.f32 1.0, %v878
      %v880 = vmul.f32 %v877, %v879
      %v881 = vadd.f32 %v877, %v880
      %vm882 = vweird.f32 %v771
      %vm883 = vweird.f32 %v877
      %vm884 = vmor %vm882, %vm883
      %v885 = vsel %vm884, %v877, %v881
      %v886 = vand.u32 2147483647, %v771
      %vm887 = vcmp.eq.f32.partialorder %v886, 8.507059e+37
      %v888 = vand.u32 %v771, 2147483648
      %v889 = vor.u32 1.1754944e-38, %v888
      %v890 = vsel %vm887, %v889, %v885
      %v891 = vmul.f32 1.0, %v890
      %v892 = vmul.f32 %v732, %v786
      %v893 = vmul.f32 %v733, %v801
      %v894 = vmul.f32 %v734, %v816
      %v895 = vmul.f32 %v735, %v831
      %v896 = vmul.f32 %v736, %v846
      %v897 = vmul.f32 %v737, %v861
      %v898 = vmul.f32 %v738, %v876
      %v899 = vmul.f32 %v739, %v891
      %s900 = scalar_lea.vmem [#allocation2], %s70
      %901 = vst [vmem:[%s900] sm:$0xff] %v892
      %902 = vst [vmem:[%s900 + $0x8] sm:$0xff] %v893
      %903 = vst [vmem:[%s900 + $0x10] sm:$0xff] %v894
      %904 = vst [vmem:[%s900 + $0x18] sm:$0xff] %v895
      %905 = vst [vmem:[%s900 + $0x20] sm:$0xff] %v896
      %906 = vst [vmem:[%s900 + $0x28] sm:$0xff] %v897
      %907 = vst [vmem:[%s900 + $0x30] sm:$0xff] %v898
      %908 = vst [vmem:[%s900 + $0x38] sm:$0xff] %v899
      %v909 = vmul.f32 %v577, %v695
      %v910 = vmul.f32 %v579, %v700
      %v911 = vmul.f32 %v582, %v705
      %v912 = vmul.f32 %v584, %v710
      %v913 = vmul.f32 %v587, %v715
      %v914 = vmul.f32 %v589, %v720
      %v915 = vmul.f32 %v592, %v725
      %v916 = vmul.f32 %v594, %v730
      %v917 = vxor.u32 %v635, 2147483648
      %v918 = vxor.u32 %v637, 2147483648
      %v919 = vxor.u32 %v640, 2147483648
      %v920 = vxor.u32 %v642, 2147483648
      %v921 = vxor.u32 %v645, 2147483648
      %v922 = vxor.u32 %v647, 2147483648
      %v923 = vxor.u32 %v650, 2147483648
      %v924 = vxor.u32 %v652, 2147483648
      %v925 = vmul.f32 %v917, 1.442695
      %v926 = vpow.pop %v925
      %v927 = vmul.f32 %v918, 1.442695
      %v928 = vpow.pop %v927
      %v929 = vmul.f32 %v919, 1.442695
      %v930 = vpow.pop %v929
      %v931 = vmul.f32 %v920, 1.442695
      %v932 = vpow.pop %v931
      %v933 = vmul.f32 %v921, 1.442695
      %v934 = vpow.pop %v933
      %v935 = vmul.f32 %v922, 1.442695
      %v936 = vpow.pop %v935
      %v937 = vmul.f32 %v923, 1.442695
      %v938 = vpow.pop %v937
      %v939 = vmul.f32 %v924, 1.442695
      %v940 = vpow.pop %v939
      %v941 = vadd.f32 %v926, 1.0
      %v942 = vadd.f32 %v928, 1.0
      %v943 = vadd.f32 %v930, 1.0
      %v944 = vadd.f32 %v932, 1.0
      %v945 = vadd.f32 %v934, 1.0
      %v946 = vadd.f32 %v936, 1.0
      %v947 = vadd.f32 %v938, 1.0
      %v948 = vadd.f32 %v940, 1.0
      %v949 = vrcp.pop %v941
      %v950 = vmul.f32 %v941, %v949
      %v951 = vsub.f32 1.0, %v950
      %v952 = vmul.f32 %v949, %v951
      %v953 = vadd.f32 %v949, %v952
      %vm954 = vweird.f32 %v941
      %vm955 = vweird.f32 %v949
      %vm956 = vmor %vm954, %vm955
      %v957 = vsel %vm956, %v949, %v953
      %v958 = vand.u32 2147483647, %v941
      %vm959 = vcmp.eq.f32.partialorder %v958, 8.507059e+37
      %v960 = vand.u32 %v941, 2147483648
      %v961 = vor.u32 1.1754944e-38, %v960
      %v962 = vsel %vm959, %v961, %v957
      %v963 = vmul.f32 1.0, %v962
      %v964 = vrcp.pop %v942
      %v965 = vmul.f32 %v942, %v964
      %v966 = vsub.f32 1.0, %v965
      %v967 = vmul.f32 %v964, %v966
      %v968 = vadd.f32 %v964, %v967
      %vm969 = vweird.f32 %v942
      %vm970 = vweird.f32 %v964
      %vm971 = vmor %vm969, %vm970
      %v972 = vsel %vm971, %v964, %v968
      %v973 = vand.u32 2147483647, %v942
      %vm974 = vcmp.eq.f32.partialorder %v973, 8.507059e+37
      %v975 = vand.u32 %v942, 2147483648
      %v976 = vor.u32 1.1754944e-38, %v975
      %v977 = vsel %vm974, %v976, %v972
      %v978 = vmul.f32 1.0, %v977
      %v979 = vrcp.pop %v943
      %v980 = vmul.f32 %v943, %v979
      %v981 = vsub.f32 1.0, %v980
      %v982 = vmul.f32 %v979, %v981
      %v983 = vadd.f32 %v979, %v982
      %vm984 = vweird.f32 %v943
      %vm985 = vweird.f32 %v979
      %vm986 = vmor %vm984, %vm985
      %v987 = vsel %vm986, %v979, %v983
      %v988 = vand.u32 2147483647, %v943
      %vm989 = vcmp.eq.f32.partialorder %v988, 8.507059e+37
      %v990 = vand.u32 %v943, 2147483648
      %v991 = vor.u32 1.1754944e-38, %v990
      %v992 = vsel %vm989, %v991, %v987
      %v993 = vmul.f32 1.0, %v992
      %v994 = vrcp.pop %v944
      %v995 = vmul.f32 %v944, %v994
      %v996 = vsub.f32 1.0, %v995
      %v997 = vmul.f32 %v994, %v996
      %v998 = vadd.f32 %v994, %v997
      %vm999 = vweird.f32 %v944
      %vm1000 = vweird.f32 %v994
      %vm1001 = vmor %vm999, %vm1000
      %v1002 = vsel %vm1001, %v994, %v998
      %v1003 = vand.u32 2147483647, %v944
      %vm1004 = vcmp.eq.f32.partialorder %v1003, 8.507059e+37
      %v1005 = vand.u32 %v944, 2147483648
      %v1006 = vor.u32 1.1754944e-38, %v1005
      %v1007 = vsel %vm1004, %v1006, %v1002
      %v1008 = vmul.f32 1.0, %v1007
      %v1009 = vrcp.pop %v945
      %v1010 = vmul.f32 %v945, %v1009
      %v1011 = vsub.f32 1.0, %v1010
      %v1012 = vmul.f32 %v1009, %v1011
      %v1013 = vadd.f32 %v1009, %v1012
      %vm1014 = vweird.f32 %v945
      %vm1015 = vweird.f32 %v1009
      %vm1016 = vmor %vm1014, %vm1015
      %v1017 = vsel %vm1016, %v1009, %v1013
      %v1018 = vand.u32 2147483647, %v945
      %vm1019 = vcmp.eq.f32.partialorder %v1018, 8.507059e+37
      %v1020 = vand.u32 %v945, 2147483648
      %v1021 = vor.u32 1.1754944e-38, %v1020
      %v1022 = vsel %vm1019, %v1021, %v1017
      %v1023 = vmul.f32 1.0, %v1022
      %v1024 = vrcp.pop %v946
      %v1025 = vmul.f32 %v946, %v1024
      %v1026 = vsub.f32 1.0, %v1025
      %v1027 = vmul.f32 %v1024, %v1026
      %v1028 = vadd.f32 %v1024, %v1027
      %vm1029 = vweird.f32 %v946
      %vm1030 = vweird.f32 %v1024
      %vm1031 = vmor %vm1029, %vm1030
      %v1032 = vsel %vm1031, %v1024, %v1028
      %v1033 = vand.u32 2147483647, %v946
      %vm1034 = vcmp.eq.f32.partialorder %v1033, 8.507059e+37
      %v1035 = vand.u32 %v946, 2147483648
      %v1036 = vor.u32 1.1754944e-38, %v1035
      %v1037 = vsel %vm1034, %v1036, %v1032
      %v1038 = vmul.f32 1.0, %v1037
      %v1039 = vrcp.pop %v947
      %v1040 = vmul.f32 %v947, %v1039
      %v1041 = vsub.f32 1.0, %v1040
      %v1042 = vmul.f32 %v1039, %v1041
      %v1043 = vadd.f32 %v1039, %v1042
      %vm1044 = vweird.f32 %v947
      %vm1045 = vweird.f32 %v1039
      %vm1046 = vmor %vm1044, %vm1045
      %v1047 = vsel %vm1046, %v1039, %v1043
      %v1048 = vand.u32 2147483647, %v947
      %vm1049 = vcmp.eq.f32.partialorder %v1048, 8.507059e+37
      %v1050 = vand.u32 %v947, 2147483648
      %v1051 = vor.u32 1.1754944e-38, %v1050
      %v1052 = vsel %vm1049, %v1051, %v1047
      %v1053 = vmul.f32 1.0, %v1052
      %v1054 = vrcp.pop %v948
      %v1055 = vmul.f32 %v948, %v1054
      %v1056 = vsub.f32 1.0, %v1055
      %v1057 = vmul.f32 %v1054, %v1056
      %v1058 = vadd.f32 %v1054, %v1057
      %vm1059 = vweird.f32 %v948
      %vm1060 = vweird.f32 %v1054
      %vm1061 = vmor %vm1059, %vm1060
      %v1062 = vsel %vm1061, %v1054, %v1058
      %v1063 = vand.u32 2147483647, %v948
      %vm1064 = vcmp.eq.f32.partialorder %v1063, 8.507059e+37
      %v1065 = vand.u32 %v948, 2147483648
      %v1066 = vor.u32 1.1754944e-38, %v1065
      %v1067 = vsel %vm1064, %v1066, %v1062
      %v1068 = vmul.f32 1.0, %v1067
      %v1069 = vmul.f32 %v909, %v963
      %v1070 = vmul.f32 %v910, %v978
      %v1071 = vmul.f32 %v911, %v993
      %v1072 = vmul.f32 %v912, %v1008
      %v1073 = vmul.f32 %v913, %v1023
      %v1074 = vmul.f32 %v914, %v1038
      %v1075 = vmul.f32 %v915, %v1053
      %v1076 = vmul.f32 %v916, %v1068
      %s1077 = scalar_lea.vmem [#allocation3], %s70
      %1078 = vst [vmem:[%s1077] sm:$0xff] %v1069
      %1079 = vst [vmem:[%s1077 + $0x8] sm:$0xff] %v1070
      %1080 = vst [vmem:[%s1077 + $0x10] sm:$0xff] %v1071
      %1081 = vst [vmem:[%s1077 + $0x18] sm:$0xff] %v1072
      %1082 = vst [vmem:[%s1077 + $0x20] sm:$0xff] %v1073
      %1083 = vst [vmem:[%s1077 + $0x28] sm:$0xff] %v1074
      %1084 = vst [vmem:[%s1077 + $0x30] sm:$0xff] %v1075
      %1085 = vst [vmem:[%s1077 + $0x38] sm:$0xff] %v1076
      %v1086 = vxor.u32 %v664, 2147483648
      %v1087 = vxor.u32 %v666, 2147483648
      %v1088 = vxor.u32 %v669, 2147483648
      %v1089 = vxor.u32 %v671, 2147483648
      %v1090 = vxor.u32 %v674, 2147483648
      %v1091 = vxor.u32 %v676, 2147483648
      %v1092 = vxor.u32 %v679, 2147483648
      %v1093 = vxor.u32 %v681, 2147483648
      %v1094 = vmul.f32 %v1086, 1.442695
      %v1095 = vpow.pop %v1094
      %v1096 = vmul.f32 %v1087, 1.442695
      %v1097 = vpow.pop %v1096
      %v1098 = vmul.f32 %v1088, 1.442695
      %v1099 = vpow.pop %v1098
      %v1100 = vmul.f32 %v1089, 1.442695
      %v1101 = vpow.pop %v1100
      %v1102 = vmul.f32 %v1090, 1.442695
      %v1103 = vpow.pop %v1102
      %v1104 = vmul.f32 %v1091, 1.442695
      %v1105 = vpow.pop %v1104
      %v1106 = vmul.f32 %v1092, 1.442695
      %v1107 = vpow.pop %v1106
      %v1108 = vmul.f32 %v1093, 1.442695
      %v1109 = vpow.pop %v1108
      %v1110 = vadd.f32 %v1095, 1.0
      %v1111 = vadd.f32 %v1097, 1.0
      %v1112 = vadd.f32 %v1099, 1.0
      %v1113 = vadd.f32 %v1101, 1.0
      %v1114 = vadd.f32 %v1103, 1.0
      %v1115 = vadd.f32 %v1105, 1.0
      %v1116 = vadd.f32 %v1107, 1.0
      %v1117 = vadd.f32 %v1109, 1.0
      %v1118 = vrcp.pop %v1110
      %v1119 = vmul.f32 %v1110, %v1118
      %v1120 = vsub.f32 1.0, %v1119
      %v1121 = vmul.f32 %v1118, %v1120
      %v1122 = vadd.f32 %v1118, %v1121
      %vm1123 = vweird.f32 %v1110
      %vm1124 = vweird.f32 %v1118
      %vm1125 = vmor %vm1123, %vm1124
      %v1126 = vsel %vm1125, %v1118, %v1122
      %v1127 = vand.u32 2147483647, %v1110
      %vm1128 = vcmp.eq.f32.partialorder %v1127, 8.507059e+37
      %v1129 = vand.u32 %v1110, 2147483648
      %v1130 = vor.u32 1.1754944e-38, %v1129
      %v1131 = vsel %vm1128, %v1130, %v1126
      %v1132 = vmul.f32 1.0, %v1131
      %v1133 = vrcp.pop %v1111
      %v1134 = vmul.f32 %v1111, %v1133
      %v1135 = vsub.f32 1.0, %v1134
      %v1136 = vmul.f32 %v1133, %v1135
      %v1137 = vadd.f32 %v1133, %v1136
      %vm1138 = vweird.f32 %v1111
      %vm1139 = vweird.f32 %v1133
      %vm1140 = vmor %vm1138, %vm1139
      %v1141 = vsel %vm1140, %v1133, %v1137
      %v1142 = vand.u32 2147483647, %v1111
      %vm1143 = vcmp.eq.f32.partialorder %v1142, 8.507059e+37
      %v1144 = vand.u32 %v1111, 2147483648
      %v1145 = vor.u32 1.1754944e-38, %v1144
      %v1146 = vsel %vm1143, %v1145, %v1141
      %v1147 = vmul.f32 1.0, %v1146
      %v1148 = vrcp.pop %v1112
      %v1149 = vmul.f32 %v1112, %v1148
      %v1150 = vsub.f32 1.0, %v1149
      %v1151 = vmul.f32 %v1148, %v1150
      %v1152 = vadd.f32 %v1148, %v1151
      %vm1153 = vweird.f32 %v1112
      %vm1154 = vweird.f32 %v1148
      %vm1155 = vmor %vm1153, %vm1154
      %v1156 = vsel %vm1155, %v1148, %v1152
      %v1157 = vand.u32 2147483647, %v1112
      %vm1158 = vcmp.eq.f32.partialorder %v1157, 8.507059e+37
      %v1159 = vand.u32 %v1112, 2147483648
      %v1160 = vor.u32 1.1754944e-38, %v1159
      %v1161 = vsel %vm1158, %v1160, %v1156
      %v1162 = vmul.f32 1.0, %v1161
      %v1163 = vrcp.pop %v1113
      %v1164 = vmul.f32 %v1113, %v1163
      %v1165 = vsub.f32 1.0, %v1164
      %v1166 = vmul.f32 %v1163, %v1165
      %v1167 = vadd.f32 %v1163, %v1166
      %vm1168 = vweird.f32 %v1113
      %vm1169 = vweird.f32 %v1163
      %vm1170 = vmor %vm1168, %vm1169
      %v1171 = vsel %vm1170, %v1163, %v1167
      %v1172 = vand.u32 2147483647, %v1113
      %vm1173 = vcmp.eq.f32.partialorder %v1172, 8.507059e+37
      %v1174 = vand.u32 %v1113, 2147483648
      %v1175 = vor.u32 1.1754944e-38, %v1174
      %v1176 = vsel %vm1173, %v1175, %v1171
      %v1177 = vmul.f32 1.0, %v1176
      %v1178 = vrcp.pop %v1114
      %v1179 = vmul.f32 %v1114, %v1178
      %v1180 = vsub.f32 1.0, %v1179
      %v1181 = vmul.f32 %v1178, %v1180
      %v1182 = vadd.f32 %v1178, %v1181
      %vm1183 = vweird.f32 %v1114
      %vm1184 = vweird.f32 %v1178
      %vm1185 = vmor %vm1183, %vm1184
      %v1186 = vsel %vm1185, %v1178, %v1182
      %v1187 = vand.u32 2147483647, %v1114
      %vm1188 = vcmp.eq.f32.partialorder %v1187, 8.507059e+37
      %v1189 = vand.u32 %v1114, 2147483648
      %v1190 = vor.u32 1.1754944e-38, %v1189
      %v1191 = vsel %vm1188, %v1190, %v1186
      %v1192 = vmul.f32 1.0, %v1191
      %v1193 = vrcp.pop %v1115
      %v1194 = vmul.f32 %v1115, %v1193
      %v1195 = vsub.f32 1.0, %v1194
      %v1196 = vmul.f32 %v1193, %v1195
      %v1197 = vadd.f32 %v1193, %v1196
      %vm1198 = vweird.f32 %v1115
      %vm1199 = vweird.f32 %v1193
      %vm1200 = vmor %vm1198, %vm1199
      %v1201 = vsel %vm1200, %v1193, %v1197
      %v1202 = vand.u32 2147483647, %v1115
      %vm1203 = vcmp.eq.f32.partialorder %v1202, 8.507059e+37
      %v1204 = vand.u32 %v1115, 2147483648
      %v1205 = vor.u32 1.1754944e-38, %v1204
      %v1206 = vsel %vm1203, %v1205, %v1201
      %v1207 = vmul.f32 1.0, %v1206
      %v1208 = vrcp.pop %v1116
      %v1209 = vmul.f32 %v1116, %v1208
      %v1210 = vsub.f32 1.0, %v1209
      %v1211 = vmul.f32 %v1208, %v1210
      %v1212 = vadd.f32 %v1208, %v1211
      %vm1213 = vweird.f32 %v1116
      %vm1214 = vweird.f32 %v1208
      %vm1215 = vmor %vm1213, %vm1214
      %v1216 = vsel %vm1215, %v1208, %v1212
      %v1217 = vand.u32 2147483647, %v1116
      %vm1218 = vcmp.eq.f32.partialorder %v1217, 8.507059e+37
      %v1219 = vand.u32 %v1116, 2147483648
      %v1220 = vor.u32 1.1754944e-38, %v1219
      %v1221 = vsel %vm1218, %v1220, %v1216
      %v1222 = vmul.f32 1.0, %v1221
      %v1223 = vrcp.pop %v1117
      %v1224 = vmul.f32 %v1117, %v1223
      %v1225 = vsub.f32 1.0, %v1224
      %v1226 = vmul.f32 %v1223, %v1225
      %v1227 = vadd.f32 %v1223, %v1226
      %vm1228 = vweird.f32 %v1117
      %vm1229 = vweird.f32 %v1223
      %vm1230 = vmor %vm1228, %vm1229
      %v1231 = vsel %vm1230, %v1223, %v1227
      %v1232 = vand.u32 2147483647, %v1117
      %vm1233 = vcmp.eq.f32.partialorder %v1232, 8.507059e+37
      %v1234 = vand.u32 %v1117, 2147483648
      %v1235 = vor.u32 1.1754944e-38, %v1234
      %v1236 = vsel %vm1233, %v1235, %v1231
      %v1237 = vmul.f32 1.0, %v1236
      %s1238 = scalar_lea.vmem [#allocation4], %s70
      %1239 = vst [vmem:[%s1238] sm:$0xff] %v1132
      %1240 = vst [vmem:[%s1238 + $0x8] sm:$0xff] %v1147
      %1241 = vst [vmem:[%s1238 + $0x10] sm:$0xff] %v1162
      %1242 = vst [vmem:[%s1238 + $0x18] sm:$0xff] %v1177
      %1243 = vst [vmem:[%s1238 + $0x20] sm:$0xff] %v1192
      %1244 = vst [vmem:[%s1238 + $0x28] sm:$0xff] %v1207
      %1245 = vst [vmem:[%s1238 + $0x30] sm:$0xff] %v1222
      %1246 = vst [vmem:[%s1238 + $0x38] sm:$0xff] %v1237
    $region46: #{tpu_custom_call.1} parent=1 // loop_footer
      %s69 = sadd.s32 1, %s65
    $region47: #{tpu_custom_call.1} parent=1 // loop_footer_branch
      %64 = sbr.rel target = $region43
    $region48: #{tpu_custom_call.1} parent=1 // loop_exit
      _
    %v1247 = vld [vmem:[%s5] sm:$0x1]
    %v1248 = vld [vmem:[%s6] sm:$0x1]
    loop: start=0, step=1, limit=2
    $region49: #{tpu_custom_call.1} parent=1 // loop_pre_header
      _
    $region50: #{tpu_custom_call.1} parent=1 // loop_header
      %s1250 = sphi 0, %s1254
      %p1251 = scmp.ge.s32.totalorder %s1250, 2
    $region51: #{tpu_custom_call.1} parent=1 // loop_header_branch
      %1253 = sbr.rel (%p1251) target = $region55
    $region52: #{tpu_custom_call.1} parent=1 // loop_body
      %s1255 = smul.u32 %s1250, 8
      %v1256 = vld [vmem:[#allocation2] sm:$0xff]
      %v1257 = vld [vmem:[#allocation2 + $0x8] sm:$0xff]
      %s1258 = sadd.s32 0, %s1255
      %s1259 = scalar_lea.vmem [#allocation3], %s1258
      %v1260 = vld [vmem:[%s1259] sm:$0xff]
      %v1262 = vrot.slane %v1260, 1
      %v1263 = vrot.slane %v1260, 2
      %v1264 = vrot.slane %v1260, 3
      %v1265 = vrot.slane %v1260, 4
      %v1266 = vrot.slane %v1260, 5
      %v1267 = vrot.slane %v1260, 6
      %v1268 = vrot.slane %v1260, 7
      %v1269 = vperm.slane %v1260, 0
      %v1270 = vperm.slane %v1262, 0
      %v1271 = vperm.slane %v1263, 0
      %v1272 = vperm.slane %v1264, 0
      %v1273 = vperm.slane %v1265, 0
      %v1274 = vperm.slane %v1266, 0
      %v1275 = vperm.slane %v1267, 0
      %v1276 = vperm.slane %v1268, 0
      %v1285 = vmul.f32 %v1269, %v1256
      %v1286 = vmul.f32 %v1269, %v1257
      %v1287 = vmul.f32 %v1270, %v1256
      %v1288 = vmul.f32 %v1270, %v1257
      %v1289 = vmul.f32 %v1271, %v1256
      %v1290 = vmul.f32 %v1271, %v1257
      %v1291 = vmul.f32 %v1272, %v1256
      %v1292 = vmul.f32 %v1272, %v1257
      %v1293 = vmul.f32 %v1273, %v1256
      %v1294 = vmul.f32 %v1273, %v1257
      %v1295 = vmul.f32 %v1274, %v1256
      %v1296 = vmul.f32 %v1274, %v1257
      %v1297 = vmul.f32 %v1275, %v1256
      %v1298 = vmul.f32 %v1275, %v1257
      %v1299 = vmul.f32 %v1276, %v1256
      %v1300 = vmul.f32 %v1276, %v1257
      %v1301 = vadd.f32 %v1285, 0.0
      %v1302 = vadd.f32 %v1286, 0.0
      %v1303 = vadd.f32 %v1287, 0.0
      %v1304 = vadd.f32 %v1288, 0.0
      %v1305 = vadd.f32 %v1289, 0.0
      %v1306 = vadd.f32 %v1290, 0.0
      %v1307 = vadd.f32 %v1291, 0.0
      %v1308 = vadd.f32 %v1292, 0.0
      %v1309 = vadd.f32 %v1293, 0.0
      %v1310 = vadd.f32 %v1294, 0.0
      %v1311 = vadd.f32 %v1295, 0.0
      %v1312 = vadd.f32 %v1296, 0.0
      %v1313 = vadd.f32 %v1297, 0.0
      %v1314 = vadd.f32 %v1298, 0.0
      %v1315 = vadd.f32 %v1299, 0.0
      %v1316 = vadd.f32 %v1300, 0.0
      %s1317 = scalar_lea.vmem [#allocation2], 16
      %v1318 = vld [vmem:[%s1317] sm:$0xff]
      %v1319 = vld [vmem:[%s1317 + $0x8] sm:$0xff]
      %s1320 = sadd.s32 16, %s1255
      %s1321 = scalar_lea.vmem [#allocation3], %s1320
      %v1322 = vld [vmem:[%s1321] sm:$0xff]
      %v1324 = vrot.slane %v1322, 1
      %v1325 = vrot.slane %v1322, 2
      %v1326 = vrot.slane %v1322, 3
      %v1327 = vrot.slane %v1322, 4
      %v1328 = vrot.slane %v1322, 5
      %v1329 = vrot.slane %v1322, 6
      %v1330 = vrot.slane %v1322, 7
      %v1331 = vperm.slane %v1322, 0
      %v1332 = vperm.slane %v1324, 0
      %v1333 = vperm.slane %v1325, 0
      %v1334 = vperm.slane %v1326, 0
      %v1335 = vperm.slane %v1327, 0
      %v1336 = vperm.slane %v1328, 0
      %v1337 = vperm.slane %v1329, 0
      %v1338 = vperm.slane %v1330, 0
      %v1347 = vmul.f32 %v1331, %v1318
      %v1348 = vmul.f32 %v1331, %v1319
      %v1349 = vmul.f32 %v1332, %v1318
      %v1350 = vmul.f32 %v1332, %v1319
      %v1351 = vmul.f32 %v1333, %v1318
      %v1352 = vmul.f32 %v1333, %v1319
      %v1353 = vmul.f32 %v1334, %v1318
      %v1354 = vmul.f32 %v1334, %v1319
      %v1355 = vmul.f32 %v1335, %v1318
      %v1356 = vmul.f32 %v1335, %v1319
      %v1357 = vmul.f32 %v1336, %v1318
      %v1358 = vmul.f32 %v1336, %v1319
      %v1359 = vmul.f32 %v1337, %v1318
      %v1360 = vmul.f32 %v1337, %v1319
      %v1361 = vmul.f32 %v1338, %v1318
      %v1362 = vmul.f32 %v1338, %v1319
      %v1363 = vadd.f32 %v1301, %v1347
      %v1364 = vadd.f32 %v1302, %v1348
      %v1365 = vadd.f32 %v1303, %v1349
      %v1366 = vadd.f32 %v1304, %v1350
      %v1367 = vadd.f32 %v1305, %v1351
      %v1368 = vadd.f32 %v1306, %v1352
      %v1369 = vadd.f32 %v1307, %v1353
      %v1370 = vadd.f32 %v1308, %v1354
      %v1371 = vadd.f32 %v1309, %v1355
      %v1372 = vadd.f32 %v1310, %v1356
      %v1373 = vadd.f32 %v1311, %v1357
      %v1374 = vadd.f32 %v1312, %v1358
      %v1375 = vadd.f32 %v1313, %v1359
      %v1376 = vadd.f32 %v1314, %v1360
      %v1377 = vadd.f32 %v1315, %v1361
      %v1378 = vadd.f32 %v1316, %v1362
      %s1379 = scalar_lea.vmem [#allocation2], 32
      %v1380 = vld [vmem:[%s1379] sm:$0xff]
      %v1381 = vld [vmem:[%s1379 + $0x8] sm:$0xff]
      %s1382 = sadd.s32 32, %s1255
      %s1383 = scalar_lea.vmem [#allocation3], %s1382
      %v1384 = vld [vmem:[%s1383] sm:$0xff]
      %v1386 = vrot.slane %v1384, 1
      %v1387 = vrot.slane %v1384, 2
      %v1388 = vrot.slane %v1384, 3
      %v1389 = vrot.slane %v1384, 4
      %v1390 = vrot.slane %v1384, 5
      %v1391 = vrot.slane %v1384, 6
      %v1392 = vrot.slane %v1384, 7
      %v1393 = vperm.slane %v1384, 0
      %v1394 = vperm.slane %v1386, 0
      %v1395 = vperm.slane %v1387, 0
      %v1396 = vperm.slane %v1388, 0
      %v1397 = vperm.slane %v1389, 0
      %v1398 = vperm.slane %v1390, 0
      %v1399 = vperm.slane %v1391, 0
      %v1400 = vperm.slane %v1392, 0
      %v1409 = vmul.f32 %v1393, %v1380
      %v1410 = vmul.f32 %v1393, %v1381
      %v1411 = vmul.f32 %v1394, %v1380
      %v1412 = vmul.f32 %v1394, %v1381
      %v1413 = vmul.f32 %v1395, %v1380
      %v1414 = vmul.f32 %v1395, %v1381
      %v1415 = vmul.f32 %v1396, %v1380
      %v1416 = vmul.f32 %v1396, %v1381
      %v1417 = vmul.f32 %v1397, %v1380
      %v1418 = vmul.f32 %v1397, %v1381
      %v1419 = vmul.f32 %v1398, %v1380
      %v1420 = vmul.f32 %v1398, %v1381
      %v1421 = vmul.f32 %v1399, %v1380
      %v1422 = vmul.f32 %v1399, %v1381
      %v1423 = vmul.f32 %v1400, %v1380
      %v1424 = vmul.f32 %v1400, %v1381
      %v1425 = vadd.f32 %v1363, %v1409
      %v1426 = vadd.f32 %v1364, %v1410
      %v1427 = vadd.f32 %v1365, %v1411
      %v1428 = vadd.f32 %v1366, %v1412
      %v1429 = vadd.f32 %v1367, %v1413
      %v1430 = vadd.f32 %v1368, %v1414
      %v1431 = vadd.f32 %v1369, %v1415
      %v1432 = vadd.f32 %v1370, %v1416
      %v1433 = vadd.f32 %v1371, %v1417
      %v1434 = vadd.f32 %v1372, %v1418
      %v1435 = vadd.f32 %v1373, %v1419
      %v1436 = vadd.f32 %v1374, %v1420
      %v1437 = vadd.f32 %v1375, %v1421
      %v1438 = vadd.f32 %v1376, %v1422
      %v1439 = vadd.f32 %v1377, %v1423
      %v1440 = vadd.f32 %v1378, %v1424
      %s1441 = scalar_lea.vmem [#allocation2], 48
      %v1442 = vld [vmem:[%s1441] sm:$0xff]
      %v1443 = vld [vmem:[%s1441 + $0x8] sm:$0xff]
      %s1444 = sadd.s32 48, %s1255
      %s1445 = scalar_lea.vmem [#allocation3], %s1444
      %v1446 = vld [vmem:[%s1445] sm:$0xff]
      %v1448 = vrot.slane %v1446, 1
      %v1449 = vrot.slane %v1446, 2
      %v1450 = vrot.slane %v1446, 3
      %v1451 = vrot.slane %v1446, 4
      %v1452 = vrot.slane %v1446, 5
      %v1453 = vrot.slane %v1446, 6
      %v1454 = vrot.slane %v1446, 7
      %v1455 = vperm.slane %v1446, 0
      %v1456 = vperm.slane %v1448, 0
      %v1457 = vperm.slane %v1449, 0
      %v1458 = vperm.slane %v1450, 0
      %v1459 = vperm.slane %v1451, 0
      %v1460 = vperm.slane %v1452, 0
      %v1461 = vperm.slane %v1453, 0
      %v1462 = vperm.slane %v1454, 0
      %v1471 = vmul.f32 %v1455, %v1442
      %v1472 = vmul.f32 %v1455, %v1443
      %v1473 = vmul.f32 %v1456, %v1442
      %v1474 = vmul.f32 %v1456, %v1443
      %v1475 = vmul.f32 %v1457, %v1442
      %v1476 = vmul.f32 %v1457, %v1443
      %v1477 = vmul.f32 %v1458, %v1442
      %v1478 = vmul.f32 %v1458, %v1443
      %v1479 = vmul.f32 %v1459, %v1442
      %v1480 = vmul.f32 %v1459, %v1443
      %v1481 = vmul.f32 %v1460, %v1442
      %v1482 = vmul.f32 %v1460, %v1443
      %v1483 = vmul.f32 %v1461, %v1442
      %v1484 = vmul.f32 %v1461, %v1443
      %v1485 = vmul.f32 %v1462, %v1442
      %v1486 = vmul.f32 %v1462, %v1443
      %v1487 = vadd.f32 %v1425, %v1471
      %v1488 = vadd.f32 %v1426, %v1472
      %v1489 = vadd.f32 %v1427, %v1473
      %v1490 = vadd.f32 %v1428, %v1474
      %v1491 = vadd.f32 %v1429, %v1475
      %v1492 = vadd.f32 %v1430, %v1476
      %v1493 = vadd.f32 %v1431, %v1477
      %v1494 = vadd.f32 %v1432, %v1478
      %v1495 = vadd.f32 %v1433, %v1479
      %v1496 = vadd.f32 %v1434, %v1480
      %v1497 = vadd.f32 %v1435, %v1481
      %v1498 = vadd.f32 %v1436, %v1482
      %v1499 = vadd.f32 %v1437, %v1483
      %v1500 = vadd.f32 %v1438, %v1484
      %v1501 = vadd.f32 %v1439, %v1485
      %v1502 = vadd.f32 %v1440, %v1486
      %s1503 = scalar_lea.vmem [#allocation2], 64
      %v1504 = vld [vmem:[%s1503] sm:$0xff]
      %v1505 = vld [vmem:[%s1503 + $0x8] sm:$0xff]
      %s1506 = sadd.s32 64, %s1255
      %s1507 = scalar_lea.vmem [#allocation3], %s1506
      %v1508 = vld [vmem:[%s1507] sm:$0xff]
      %v1510 = vrot.slane %v1508, 1
      %v1511 = vrot.slane %v1508, 2
      %v1512 = vrot.slane %v1508, 3
      %v1513 = vrot.slane %v1508, 4
      %v1514 = vrot.slane %v1508, 5
      %v1515 = vrot.slane %v1508, 6
      %v1516 = vrot.slane %v1508, 7
      %v1517 = vperm.slane %v1508, 0
      %v1518 = vperm.slane %v1510, 0
      %v1519 = vperm.slane %v1511, 0
      %v1520 = vperm.slane %v1512, 0
      %v1521 = vperm.slane %v1513, 0
      %v1522 = vperm.slane %v1514, 0
      %v1523 = vperm.slane %v1515, 0
      %v1524 = vperm.slane %v1516, 0
      %v1533 = vmul.f32 %v1517, %v1504
      %v1534 = vmul.f32 %v1517, %v1505
      %v1535 = vmul.f32 %v1518, %v1504
      %v1536 = vmul.f32 %v1518, %v1505
      %v1537 = vmul.f32 %v1519, %v1504
      %v1538 = vmul.f32 %v1519, %v1505
      %v1539 = vmul.f32 %v1520, %v1504
      %v1540 = vmul.f32 %v1520, %v1505
      %v1541 = vmul.f32 %v1521, %v1504
      %v1542 = vmul.f32 %v1521, %v1505
      %v1543 = vmul.f32 %v1522, %v1504
      %v1544 = vmul.f32 %v1522, %v1505
      %v1545 = vmul.f32 %v1523, %v1504
      %v1546 = vmul.f32 %v1523, %v1505
      %v1547 = vmul.f32 %v1524, %v1504
      %v1548 = vmul.f32 %v1524, %v1505
      %v1549 = vadd.f32 %v1487, %v1533
      %v1550 = vadd.f32 %v1488, %v1534
      %v1551 = vadd.f32 %v1489, %v1535
      %v1552 = vadd.f32 %v1490, %v1536
      %v1553 = vadd.f32 %v1491, %v1537
      %v1554 = vadd.f32 %v1492, %v1538
      %v1555 = vadd.f32 %v1493, %v1539
      %v1556 = vadd.f32 %v1494, %v1540
      %v1557 = vadd.f32 %v1495, %v1541
      %v1558 = vadd.f32 %v1496, %v1542
      %v1559 = vadd.f32 %v1497, %v1543
      %v1560 = vadd.f32 %v1498, %v1544
      %v1561 = vadd.f32 %v1499, %v1545
      %v1562 = vadd.f32 %v1500, %v1546
      %v1563 = vadd.f32 %v1501, %v1547
      %v1564 = vadd.f32 %v1502, %v1548
      %s1565 = scalar_lea.vmem [#allocation2], 80
      %v1566 = vld [vmem:[%s1565] sm:$0xff]
      %v1567 = vld [vmem:[%s1565 + $0x8] sm:$0xff]
      %s1568 = sadd.s32 80, %s1255
      %s1569 = scalar_lea.vmem [#allocation3], %s1568
      %v1570 = vld [vmem:[%s1569] sm:$0xff]
      %v1572 = vrot.slane %v1570, 1
      %v1573 = vrot.slane %v1570, 2
      %v1574 = vrot.slane %v1570, 3
      %v1575 = vrot.slane %v1570, 4
      %v1576 = vrot.slane %v1570, 5
      %v1577 = vrot.slane %v1570, 6
      %v1578 = vrot.slane %v1570, 7
      %v1579 = vperm.slane %v1570, 0
      %v1580 = vperm.slane %v1572, 0
      %v1581 = vperm.slane %v1573, 0
      %v1582 = vperm.slane %v1574, 0
      %v1583 = vperm.slane %v1575, 0
      %v1584 = vperm.slane %v1576, 0
      %v1585 = vperm.slane %v1577, 0
      %v1586 = vperm.slane %v1578, 0
      %v1595 = vmul.f32 %v1579, %v1566
      %v1596 = vmul.f32 %v1579, %v1567
      %v1597 = vmul.f32 %v1580, %v1566
      %v1598 = vmul.f32 %v1580, %v1567
      %v1599 = vmul.f32 %v1581, %v1566
      %v1600 = vmul.f32 %v1581, %v1567
      %v1601 = vmul.f32 %v1582, %v1566
      %v1602 = vmul.f32 %v1582, %v1567
      %v1603 = vmul.f32 %v1583, %v1566
      %v1604 = vmul.f32 %v1583, %v1567
      %v1605 = vmul.f32 %v1584, %v1566
      %v1606 = vmul.f32 %v1584, %v1567
      %v1607 = vmul.f32 %v1585, %v1566
      %v1608 = vmul.f32 %v1585, %v1567
      %v1609 = vmul.f32 %v1586, %v1566
      %v1610 = vmul.f32 %v1586, %v1567
      %v1611 = vadd.f32 %v1549, %v1595
      %v1612 = vadd.f32 %v1550, %v1596
      %v1613 = vadd.f32 %v1551, %v1597
      %v1614 = vadd.f32 %v1552, %v1598
      %v1615 = vadd.f32 %v1553, %v1599
      %v1616 = vadd.f32 %v1554, %v1600
      %v1617 = vadd.f32 %v1555, %v1601
      %v1618 = vadd.f32 %v1556, %v1602
      %v1619 = vadd.f32 %v1557, %v1603
      %v1620 = vadd.f32 %v1558, %v1604
      %v1621 = vadd.f32 %v1559, %v1605
      %v1622 = vadd.f32 %v1560, %v1606
      %v1623 = vadd.f32 %v1561, %v1607
      %v1624 = vadd.f32 %v1562, %v1608
      %v1625 = vadd.f32 %v1563, %v1609
      %v1626 = vadd.f32 %v1564, %v1610
      %s1627 = scalar_lea.vmem [#allocation2], 96
      %v1628 = vld [vmem:[%s1627] sm:$0xff]
      %v1629 = vld [vmem:[%s1627 + $0x8] sm:$0xff]
      %s1630 = sadd.s32 96, %s1255
      %s1631 = scalar_lea.vmem [#allocation3], %s1630
      %v1632 = vld [vmem:[%s1631] sm:$0xff]
      %v1634 = vrot.slane %v1632, 1
      %v1635 = vrot.slane %v1632, 2
      %v1636 = vrot.slane %v1632, 3
      %v1637 = vrot.slane %v1632, 4
      %v1638 = vrot.slane %v1632, 5
      %v1639 = vrot.slane %v1632, 6
      %v1640 = vrot.slane %v1632, 7
      %v1641 = vperm.slane %v1632, 0
      %v1642 = vperm.slane %v1634, 0
      %v1643 = vperm.slane %v1635, 0
      %v1644 = vperm.slane %v1636, 0
      %v1645 = vperm.slane %v1637, 0
      %v1646 = vperm.slane %v1638, 0
      %v1647 = vperm.slane %v1639, 0
      %v1648 = vperm.slane %v1640, 0
      %v1657 = vmul.f32 %v1641, %v1628
      %v1658 = vmul.f32 %v1641, %v1629
      %v1659 = vmul.f32 %v1642, %v1628
      %v1660 = vmul.f32 %v1642, %v1629
      %v1661 = vmul.f32 %v1643, %v1628
      %v1662 = vmul.f32 %v1643, %v1629
      %v1663 = vmul.f32 %v1644, %v1628
      %v1664 = vmul.f32 %v1644, %v1629
      %v1665 = vmul.f32 %v1645, %v1628
      %v1666 = vmul.f32 %v1645, %v1629
      %v1667 = vmul.f32 %v1646, %v1628
      %v1668 = vmul.f32 %v1646, %v1629
      %v1669 = vmul.f32 %v1647, %v1628
      %v1670 = vmul.f32 %v1647, %v1629
      %v1671 = vmul.f32 %v1648, %v1628
      %v1672 = vmul.f32 %v1648, %v1629
      %v1673 = vadd.f32 %v1611, %v1657
      %v1674 = vadd.f32 %v1612, %v1658
      %v1675 = vadd.f32 %v1613, %v1659
      %v1676 = vadd.f32 %v1614, %v1660
      %v1677 = vadd.f32 %v1615, %v1661
      %v1678 = vadd.f32 %v1616, %v1662
      %v1679 = vadd.f32 %v1617, %v1663
      %v1680 = vadd.f32 %v1618, %v1664
      %v1681 = vadd.f32 %v1619, %v1665
      %v1682 = vadd.f32 %v1620, %v1666
      %v1683 = vadd.f32 %v1621, %v1667
      %v1684 = vadd.f32 %v1622, %v1668
      %v1685 = vadd.f32 %v1623, %v1669
      %v1686 = vadd.f32 %v1624, %v1670
      %v1687 = vadd.f32 %v1625, %v1671
      %v1688 = vadd.f32 %v1626, %v1672
      %s1689 = scalar_lea.vmem [#allocation2], 112
      %v1690 = vld [vmem:[%s1689] sm:$0xff]
      %v1691 = vld [vmem:[%s1689 + $0x8] sm:$0xff]
      %s1692 = sadd.s32 112, %s1255
      %s1693 = scalar_lea.vmem [#allocation3], %s1692
      %v1694 = vld [vmem:[%s1693] sm:$0xff]
      %v1696 = vrot.slane %v1694, 1
      %v1697 = vrot.slane %v1694, 2
      %v1698 = vrot.slane %v1694, 3
      %v1699 = vrot.slane %v1694, 4
      %v1700 = vrot.slane %v1694, 5
      %v1701 = vrot.slane %v1694, 6
      %v1702 = vrot.slane %v1694, 7
      %v1703 = vperm.slane %v1694, 0
      %v1704 = vperm.slane %v1696, 0
      %v1705 = vperm.slane %v1697, 0
      %v1706 = vperm.slane %v1698, 0
      %v1707 = vperm.slane %v1699, 0
      %v1708 = vperm.slane %v1700, 0
      %v1709 = vperm.slane %v1701, 0
      %v1710 = vperm.slane %v1702, 0
      %v1719 = vmul.f32 %v1703, %v1690
      %v1720 = vmul.f32 %v1703, %v1691
      %v1721 = vmul.f32 %v1704, %v1690
      %v1722 = vmul.f32 %v1704, %v1691
      %v1723 = vmul.f32 %v1705, %v1690
      %v1724 = vmul.f32 %v1705, %v1691
      %v1725 = vmul.f32 %v1706, %v1690
      %v1726 = vmul.f32 %v1706, %v1691
      %v1727 = vmul.f32 %v1707, %v1690
      %v1728 = vmul.f32 %v1707, %v1691
      %v1729 = vmul.f32 %v1708, %v1690
      %v1730 = vmul.f32 %v1708, %v1691
      %v1731 = vmul.f32 %v1709, %v1690
      %v1732 = vmul.f32 %v1709, %v1691
      %v1733 = vmul.f32 %v1710, %v1690
      %v1734 = vmul.f32 %v1710, %v1691
      %v1735 = vadd.f32 %v1673, %v1719
      %v1736 = vadd.f32 %v1674, %v1720
      %v1737 = vadd.f32 %v1675, %v1721
      %v1738 = vadd.f32 %v1676, %v1722
      %v1739 = vadd.f32 %v1677, %v1723
      %v1740 = vadd.f32 %v1678, %v1724
      %v1741 = vadd.f32 %v1679, %v1725
      %v1742 = vadd.f32 %v1680, %v1726
      %v1743 = vadd.f32 %v1681, %v1727
      %v1744 = vadd.f32 %v1682, %v1728
      %v1745 = vadd.f32 %v1683, %v1729
      %v1746 = vadd.f32 %v1684, %v1730
      %v1747 = vadd.f32 %v1685, %v1731
      %v1748 = vadd.f32 %v1686, %v1732
      %v1749 = vadd.f32 %v1687, %v1733
      %v1750 = vadd.f32 %v1688, %v1734
      %s1751 = scalar_lea.vmem [#allocation2], 128
      %v1752 = vld [vmem:[%s1751] sm:$0xff]
      %v1753 = vld [vmem:[%s1751 + $0x8] sm:$0xff]
      %s1754 = sadd.s32 128, %s1255
      %s1755 = scalar_lea.vmem [#allocation3], %s1754
      %v1756 = vld [vmem:[%s1755] sm:$0xff]
      %v1758 = vrot.slane %v1756, 1
      %v1759 = vrot.slane %v1756, 2
      %v1760 = vrot.slane %v1756, 3
      %v1761 = vrot.slane %v1756, 4
      %v1762 = vrot.slane %v1756, 5
      %v1763 = vrot.slane %v1756, 6
      %v1764 = vrot.slane %v1756, 7
      %v1765 = vperm.slane %v1756, 0
      %v1766 = vperm.slane %v1758, 0
      %v1767 = vperm.slane %v1759, 0
      %v1768 = vperm.slane %v1760, 0
      %v1769 = vperm.slane %v1761, 0
      %v1770 = vperm.slane %v1762, 0
      %v1771 = vperm.slane %v1763, 0
      %v1772 = vperm.slane %v1764, 0
      %v1781 = vmul.f32 %v1765, %v1752
      %v1782 = vmul.f32 %v1765, %v1753
      %v1783 = vmul.f32 %v1766, %v1752
      %v1784 = vmul.f32 %v1766, %v1753
      %v1785 = vmul.f32 %v1767, %v1752
      %v1786 = vmul.f32 %v1767, %v1753
      %v1787 = vmul.f32 %v1768, %v1752
      %v1788 = vmul.f32 %v1768, %v1753
      %v1789 = vmul.f32 %v1769, %v1752
      %v1790 = vmul.f32 %v1769, %v1753
      %v1791 = vmul.f32 %v1770, %v1752
      %v1792 = vmul.f32 %v1770, %v1753
      %v1793 = vmul.f32 %v1771, %v1752
      %v1794 = vmul.f32 %v1771, %v1753
      %v1795 = vmul.f32 %v1772, %v1752
      %v1796 = vmul.f32 %v1772, %v1753
      %v1797 = vadd.f32 %v1735, %v1781
      %v1798 = vadd.f32 %v1736, %v1782
      %v1799 = vadd.f32 %v1737, %v1783
      %v1800 = vadd.f32 %v1738, %v1784
      %v1801 = vadd.f32 %v1739, %v1785
      %v1802 = vadd.f32 %v1740, %v1786
      %v1803 = vadd.f32 %v1741, %v1787
      %v1804 = vadd.f32 %v1742, %v1788
      %v1805 = vadd.f32 %v1743, %v1789
      %v1806 = vadd.f32 %v1744, %v1790
      %v1807 = vadd.f32 %v1745, %v1791
      %v1808 = vadd.f32 %v1746, %v1792
      %v1809 = vadd.f32 %v1747, %v1793
      %v1810 = vadd.f32 %v1748, %v1794
      %v1811 = vadd.f32 %v1749, %v1795
      %v1812 = vadd.f32 %v1750, %v1796
      %s1813 = scalar_lea.vmem [#allocation2], 144
      %v1814 = vld [vmem:[%s1813] sm:$0xff]
      %v1815 = vld [vmem:[%s1813 + $0x8] sm:$0xff]
      %s1816 = sadd.s32 144, %s1255
      %s1817 = scalar_lea.vmem [#allocation3], %s1816
      %v1818 = vld [vmem:[%s1817] sm:$0xff]
      %v1820 = vrot.slane %v1818, 1
      %v1821 = vrot.slane %v1818, 2
      %v1822 = vrot.slane %v1818, 3
      %v1823 = vrot.slane %v1818, 4
      %v1824 = vrot.slane %v1818, 5
      %v1825 = vrot.slane %v1818, 6
      %v1826 = vrot.slane %v1818, 7
      %v1827 = vperm.slane %v1818, 0
      %v1828 = vperm.slane %v1820, 0
      %v1829 = vperm.slane %v1821, 0
      %v1830 = vperm.slane %v1822, 0
      %v1831 = vperm.slane %v1823, 0
      %v1832 = vperm.slane %v1824, 0
      %v1833 = vperm.slane %v1825, 0
      %v1834 = vperm.slane %v1826, 0
      %v1843 = vmul.f32 %v1827, %v1814
      %v1844 = vmul.f32 %v1827, %v1815
      %v1845 = vmul.f32 %v1828, %v1814
      %v1846 = vmul.f32 %v1828, %v1815
      %v1847 = vmul.f32 %v1829, %v1814
      %v1848 = vmul.f32 %v1829, %v1815
      %v1849 = vmul.f32 %v1830, %v1814
      %v1850 = vmul.f32 %v1830, %v1815
      %v1851 = vmul.f32 %v1831, %v1814
      %v1852 = vmul.f32 %v1831, %v1815
      %v1853 = vmul.f32 %v1832, %v1814
      %v1854 = vmul.f32 %v1832, %v1815
      %v1855 = vmul.f32 %v1833, %v1814
      %v1856 = vmul.f32 %v1833, %v1815
      %v1857 = vmul.f32 %v1834, %v1814
      %v1858 = vmul.f32 %v1834, %v1815
      %v1859 = vadd.f32 %v1797, %v1843
      %v1860 = vadd.f32 %v1798, %v1844
      %v1861 = vadd.f32 %v1799, %v1845
      %v1862 = vadd.f32 %v1800, %v1846
      %v1863 = vadd.f32 %v1801, %v1847
      %v1864 = vadd.f32 %v1802, %v1848
      %v1865 = vadd.f32 %v1803, %v1849
      %v1866 = vadd.f32 %v1804, %v1850
      %v1867 = vadd.f32 %v1805, %v1851
      %v1868 = vadd.f32 %v1806, %v1852
      %v1869 = vadd.f32 %v1807, %v1853
      %v1870 = vadd.f32 %v1808, %v1854
      %v1871 = vadd.f32 %v1809, %v1855
      %v1872 = vadd.f32 %v1810, %v1856
      %v1873 = vadd.f32 %v1811, %v1857
      %v1874 = vadd.f32 %v1812, %v1858
      %s1875 = scalar_lea.vmem [#allocation2], 160
      %v1876 = vld [vmem:[%s1875] sm:$0xff]
      %v1877 = vld [vmem:[%s1875 + $0x8] sm:$0xff]
      %s1878 = sadd.s32 160, %s1255
      %s1879 = scalar_lea.vmem [#allocation3], %s1878
      %v1880 = vld [vmem:[%s1879] sm:$0xff]
      %v1882 = vrot.slane %v1880, 1
      %v1883 = vrot.slane %v1880, 2
      %v1884 = vrot.slane %v1880, 3
      %v1885 = vrot.slane %v1880, 4
      %v1886 = vrot.slane %v1880, 5
      %v1887 = vrot.slane %v1880, 6
      %v1888 = vrot.slane %v1880, 7
      %v1889 = vperm.slane %v1880, 0
      %v1890 = vperm.slane %v1882, 0
      %v1891 = vperm.slane %v1883, 0
      %v1892 = vperm.slane %v1884, 0
      %v1893 = vperm.slane %v1885, 0
      %v1894 = vperm.slane %v1886, 0
      %v1895 = vperm.slane %v1887, 0
      %v1896 = vperm.slane %v1888, 0
      %v1905 = vmul.f32 %v1889, %v1876
      %v1906 = vmul.f32 %v1889, %v1877
      %v1907 = vmul.f32 %v1890, %v1876
      %v1908 = vmul.f32 %v1890, %v1877
      %v1909 = vmul.f32 %v1891, %v1876
      %v1910 = vmul.f32 %v1891, %v1877
      %v1911 = vmul.f32 %v1892, %v1876
      %v1912 = vmul.f32 %v1892, %v1877
      %v1913 = vmul.f32 %v1893, %v1876
      %v1914 = vmul.f32 %v1893, %v1877
      %v1915 = vmul.f32 %v1894, %v1876
      %v1916 = vmul.f32 %v1894, %v1877
      %v1917 = vmul.f32 %v1895, %v1876
      %v1918 = vmul.f32 %v1895, %v1877
      %v1919 = vmul.f32 %v1896, %v1876
      %v1920 = vmul.f32 %v1896, %v1877
      %v1921 = vadd.f32 %v1859, %v1905
      %v1922 = vadd.f32 %v1860, %v1906
      %v1923 = vadd.f32 %v1861, %v1907
      %v1924 = vadd.f32 %v1862, %v1908
      %v1925 = vadd.f32 %v1863, %v1909
      %v1926 = vadd.f32 %v1864, %v1910
      %v1927 = vadd.f32 %v1865, %v1911
      %v1928 = vadd.f32 %v1866, %v1912
      %v1929 = vadd.f32 %v1867, %v1913
      %v1930 = vadd.f32 %v1868, %v1914
      %v1931 = vadd.f32 %v1869, %v1915
      %v1932 = vadd.f32 %v1870, %v1916
      %v1933 = vadd.f32 %v1871, %v1917
      %v1934 = vadd.f32 %v1872, %v1918
      %v1935 = vadd.f32 %v1873, %v1919
      %v1936 = vadd.f32 %v1874, %v1920
      %s1937 = scalar_lea.vmem [#allocation2], 176
      %v1938 = vld [vmem:[%s1937] sm:$0xff]
      %v1939 = vld [vmem:[%s1937 + $0x8] sm:$0xff]
      %s1940 = sadd.s32 176, %s1255
      %s1941 = scalar_lea.vmem [#allocation3], %s1940
      %v1942 = vld [vmem:[%s1941] sm:$0xff]
      %v1944 = vrot.slane %v1942, 1
      %v1945 = vrot.slane %v1942, 2
      %v1946 = vrot.slane %v1942, 3
      %v1947 = vrot.slane %v1942, 4
      %v1948 = vrot.slane %v1942, 5
      %v1949 = vrot.slane %v1942, 6
      %v1950 = vrot.slane %v1942, 7
      %v1951 = vperm.slane %v1942, 0
      %v1952 = vperm.slane %v1944, 0
      %v1953 = vperm.slane %v1945, 0
      %v1954 = vperm.slane %v1946, 0
      %v1955 = vperm.slane %v1947, 0
      %v1956 = vperm.slane %v1948, 0
      %v1957 = vperm.slane %v1949, 0
      %v1958 = vperm.slane %v1950, 0
      %v1967 = vmul.f32 %v1951, %v1938
      %v1968 = vmul.f32 %v1951, %v1939
      %v1969 = vmul.f32 %v1952, %v1938
      %v1970 = vmul.f32 %v1952, %v1939
      %v1971 = vmul.f32 %v1953, %v1938
      %v1972 = vmul.f32 %v1953, %v1939
      %v1973 = vmul.f32 %v1954, %v1938
      %v1974 = vmul.f32 %v1954, %v1939
      %v1975 = vmul.f32 %v1955, %v1938
      %v1976 = vmul.f32 %v1955, %v1939
      %v1977 = vmul.f32 %v1956, %v1938
      %v1978 = vmul.f32 %v1956, %v1939
      %v1979 = vmul.f32 %v1957, %v1938
      %v1980 = vmul.f32 %v1957, %v1939
      %v1981 = vmul.f32 %v1958, %v1938
      %v1982 = vmul.f32 %v1958, %v1939
      %v1983 = vadd.f32 %v1921, %v1967
      %v1984 = vadd.f32 %v1922, %v1968
      %v1985 = vadd.f32 %v1923, %v1969
      %v1986 = vadd.f32 %v1924, %v1970
      %v1987 = vadd.f32 %v1925, %v1971
      %v1988 = vadd.f32 %v1926, %v1972
      %v1989 = vadd.f32 %v1927, %v1973
      %v1990 = vadd.f32 %v1928, %v1974
      %v1991 = vadd.f32 %v1929, %v1975
      %v1992 = vadd.f32 %v1930, %v1976
      %v1993 = vadd.f32 %v1931, %v1977
      %v1994 = vadd.f32 %v1932, %v1978
      %v1995 = vadd.f32 %v1933, %v1979
      %v1996 = vadd.f32 %v1934, %v1980
      %v1997 = vadd.f32 %v1935, %v1981
      %v1998 = vadd.f32 %v1936, %v1982
      %s1999 = scalar_lea.vmem [#allocation2], 192
      %v2000 = vld [vmem:[%s1999] sm:$0xff]
      %v2001 = vld [vmem:[%s1999 + $0x8] sm:$0xff]
      %s2002 = sadd.s32 192, %s1255
      %s2003 = scalar_lea.vmem [#allocation3], %s2002
      %v2004 = vld [vmem:[%s2003] sm:$0xff]
      %v2006 = vrot.slane %v2004, 1
      %v2007 = vrot.slane %v2004, 2
      %v2008 = vrot.slane %v2004, 3
      %v2009 = vrot.slane %v2004, 4
      %v2010 = vrot.slane %v2004, 5
      %v2011 = vrot.slane %v2004, 6
      %v2012 = vrot.slane %v2004, 7
      %v2013 = vperm.slane %v2004, 0
      %v2014 = vperm.slane %v2006, 0
      %v2015 = vperm.slane %v2007, 0
      %v2016 = vperm.slane %v2008, 0
      %v2017 = vperm.slane %v2009, 0
      %v2018 = vperm.slane %v2010, 0
      %v2019 = vperm.slane %v2011, 0
      %v2020 = vperm.slane %v2012, 0
      %v2029 = vmul.f32 %v2013, %v2000
      %v2030 = vmul.f32 %v2013, %v2001
      %v2031 = vmul.f32 %v2014, %v2000
      %v2032 = vmul.f32 %v2014, %v2001
      %v2033 = vmul.f32 %v2015, %v2000
      %v2034 = vmul.f32 %v2015, %v2001
      %v2035 = vmul.f32 %v2016, %v2000
      %v2036 = vmul.f32 %v2016, %v2001
      %v2037 = vmul.f32 %v2017, %v2000
      %v2038 = vmul.f32 %v2017, %v2001
      %v2039 = vmul.f32 %v2018, %v2000
      %v2040 = vmul.f32 %v2018, %v2001
      %v2041 = vmul.f32 %v2019, %v2000
      %v2042 = vmul.f32 %v2019, %v2001
      %v2043 = vmul.f32 %v2020, %v2000
      %v2044 = vmul.f32 %v2020, %v2001
      %v2045 = vadd.f32 %v1983, %v2029
      %v2046 = vadd.f32 %v1984, %v2030
      %v2047 = vadd.f32 %v1985, %v2031
      %v2048 = vadd.f32 %v1986, %v2032
      %v2049 = vadd.f32 %v1987, %v2033
      %v2050 = vadd.f32 %v1988, %v2034
      %v2051 = vadd.f32 %v1989, %v2035
      %v2052 = vadd.f32 %v1990, %v2036
      %v2053 = vadd.f32 %v1991, %v2037
      %v2054 = vadd.f32 %v1992, %v2038
      %v2055 = vadd.f32 %v1993, %v2039
      %v2056 = vadd.f32 %v1994, %v2040
      %v2057 = vadd.f32 %v1995, %v2041
      %v2058 = vadd.f32 %v1996, %v2042
      %v2059 = vadd.f32 %v1997, %v2043
      %v2060 = vadd.f32 %v1998, %v2044
      %s2061 = scalar_lea.vmem [#allocation2], 208
      %v2062 = vld [vmem:[%s2061] sm:$0xff]
      %v2063 = vld [vmem:[%s2061 + $0x8] sm:$0xff]
      %s2064 = sadd.s32 208, %s1255
      %s2065 = scalar_lea.vmem [#allocation3], %s2064
      %v2066 = vld [vmem:[%s2065] sm:$0xff]
      %v2068 = vrot.slane %v2066, 1
      %v2069 = vrot.slane %v2066, 2
      %v2070 = vrot.slane %v2066, 3
      %v2071 = vrot.slane %v2066, 4
      %v2072 = vrot.slane %v2066, 5
      %v2073 = vrot.slane %v2066, 6
      %v2074 = vrot.slane %v2066, 7
      %v2075 = vperm.slane %v2066, 0
      %v2076 = vperm.slane %v2068, 0
      %v2077 = vperm.slane %v2069, 0
      %v2078 = vperm.slane %v2070, 0
      %v2079 = vperm.slane %v2071, 0
      %v2080 = vperm.slane %v2072, 0
      %v2081 = vperm.slane %v2073, 0
      %v2082 = vperm.slane %v2074, 0
      %v2091 = vmul.f32 %v2075, %v2062
      %v2092 = vmul.f32 %v2075, %v2063
      %v2093 = vmul.f32 %v2076, %v2062
      %v2094 = vmul.f32 %v2076, %v2063
      %v2095 = vmul.f32 %v2077, %v2062
      %v2096 = vmul.f32 %v2077, %v2063
      %v2097 = vmul.f32 %v2078, %v2062
      %v2098 = vmul.f32 %v2078, %v2063
      %v2099 = vmul.f32 %v2079, %v2062
      %v2100 = vmul.f32 %v2079, %v2063
      %v2101 = vmul.f32 %v2080, %v2062
      %v2102 = vmul.f32 %v2080, %v2063
      %v2103 = vmul.f32 %v2081, %v2062
      %v2104 = vmul.f32 %v2081, %v2063
      %v2105 = vmul.f32 %v2082, %v2062
      %v2106 = vmul.f32 %v2082, %v2063
      %v2107 = vadd.f32 %v2045, %v2091
      %v2108 = vadd.f32 %v2046, %v2092
      %v2109 = vadd.f32 %v2047, %v2093
      %v2110 = vadd.f32 %v2048, %v2094
      %v2111 = vadd.f32 %v2049, %v2095
      %v2112 = vadd.f32 %v2050, %v2096
      %v2113 = vadd.f32 %v2051, %v2097
      %v2114 = vadd.f32 %v2052, %v2098
      %v2115 = vadd.f32 %v2053, %v2099
      %v2116 = vadd.f32 %v2054, %v2100
      %v2117 = vadd.f32 %v2055, %v2101
      %v2118 = vadd.f32 %v2056, %v2102
      %v2119 = vadd.f32 %v2057, %v2103
      %v2120 = vadd.f32 %v2058, %v2104
      %v2121 = vadd.f32 %v2059, %v2105
      %v2122 = vadd.f32 %v2060, %v2106
      %s2123 = scalar_lea.vmem [#allocation2], 224
      %v2124 = vld [vmem:[%s2123] sm:$0xff]
      %v2125 = vld [vmem:[%s2123 + $0x8] sm:$0xff]
      %s2126 = sadd.s32 224, %s1255
      %s2127 = scalar_lea.vmem [#allocation3], %s2126
      %v2128 = vld [vmem:[%s2127] sm:$0xff]
      %v2130 = vrot.slane %v2128, 1
      %v2131 = vrot.slane %v2128, 2
      %v2132 = vrot.slane %v2128, 3
      %v2133 = vrot.slane %v2128, 4
      %v2134 = vrot.slane %v2128, 5
      %v2135 = vrot.slane %v2128, 6
      %v2136 = vrot.slane %v2128, 7
      %v2137 = vperm.slane %v2128, 0
      %v2138 = vperm.slane %v2130, 0
      %v2139 = vperm.slane %v2131, 0
      %v2140 = vperm.slane %v2132, 0
      %v2141 = vperm.slane %v2133, 0
      %v2142 = vperm.slane %v2134, 0
      %v2143 = vperm.slane %v2135, 0
      %v2144 = vperm.slane %v2136, 0
      %v2153 = vmul.f32 %v2137, %v2124
      %v2154 = vmul.f32 %v2137, %v2125
      %v2155 = vmul.f32 %v2138, %v2124
      %v2156 = vmul.f32 %v2138, %v2125
      %v2157 = vmul.f32 %v2139, %v2124
      %v2158 = vmul.f32 %v2139, %v2125
      %v2159 = vmul.f32 %v2140, %v2124
      %v2160 = vmul.f32 %v2140, %v2125
      %v2161 = vmul.f32 %v2141, %v2124
      %v2162 = vmul.f32 %v2141, %v2125
      %v2163 = vmul.f32 %v2142, %v2124
      %v2164 = vmul.f32 %v2142, %v2125
      %v2165 = vmul.f32 %v2143, %v2124
      %v2166 = vmul.f32 %v2143, %v2125
      %v2167 = vmul.f32 %v2144, %v2124
      %v2168 = vmul.f32 %v2144, %v2125
      %v2169 = vadd.f32 %v2107, %v2153
      %v2170 = vadd.f32 %v2108, %v2154
      %v2171 = vadd.f32 %v2109, %v2155
      %v2172 = vadd.f32 %v2110, %v2156
      %v2173 = vadd.f32 %v2111, %v2157
      %v2174 = vadd.f32 %v2112, %v2158
      %v2175 = vadd.f32 %v2113, %v2159
      %v2176 = vadd.f32 %v2114, %v2160
      %v2177 = vadd.f32 %v2115, %v2161
      %v2178 = vadd.f32 %v2116, %v2162
      %v2179 = vadd.f32 %v2117, %v2163
      %v2180 = vadd.f32 %v2118, %v2164
      %v2181 = vadd.f32 %v2119, %v2165
      %v2182 = vadd.f32 %v2120, %v2166
      %v2183 = vadd.f32 %v2121, %v2167
      %v2184 = vadd.f32 %v2122, %v2168
      %s2185 = scalar_lea.vmem [#allocation2], 240
      %v2186 = vld [vmem:[%s2185] sm:$0xff]
      %v2187 = vld [vmem:[%s2185 + $0x8] sm:$0xff]
      %s2188 = sadd.s32 240, %s1255
      %s2189 = scalar_lea.vmem [#allocation3], %s2188
      %v2190 = vld [vmem:[%s2189] sm:$0xff]
      %v2192 = vrot.slane %v2190, 1
      %v2193 = vrot.slane %v2190, 2
      %v2194 = vrot.slane %v2190, 3
      %v2195 = vrot.slane %v2190, 4
      %v2196 = vrot.slane %v2190, 5
      %v2197 = vrot.slane %v2190, 6
      %v2198 = vrot.slane %v2190, 7
      %v2199 = vperm.slane %v2190, 0
      %v2200 = vperm.slane %v2192, 0
      %v2201 = vperm.slane %v2193, 0
      %v2202 = vperm.slane %v2194, 0
      %v2203 = vperm.slane %v2195, 0
      %v2204 = vperm.slane %v2196, 0
      %v2205 = vperm.slane %v2197, 0
      %v2206 = vperm.slane %v2198, 0
      %v2215 = vmul.f32 %v2199, %v2186
      %v2216 = vmul.f32 %v2199, %v2187
      %v2217 = vmul.f32 %v2200, %v2186
      %v2218 = vmul.f32 %v2200, %v2187
      %v2219 = vmul.f32 %v2201, %v2186
      %v2220 = vmul.f32 %v2201, %v2187
      %v2221 = vmul.f32 %v2202, %v2186
      %v2222 = vmul.f32 %v2202, %v2187
      %v2223 = vmul.f32 %v2203, %v2186
      %v2224 = vmul.f32 %v2203, %v2187
      %v2225 = vmul.f32 %v2204, %v2186
      %v2226 = vmul.f32 %v2204, %v2187
      %v2227 = vmul.f32 %v2205, %v2186
      %v2228 = vmul.f32 %v2205, %v2187
      %v2229 = vmul.f32 %v2206, %v2186
      %v2230 = vmul.f32 %v2206, %v2187
      %v2231 = vadd.f32 %v2169, %v2215
      %v2232 = vadd.f32 %v2170, %v2216
      %v2233 = vadd.f32 %v2171, %v2217
      %v2234 = vadd.f32 %v2172, %v2218
      %v2235 = vadd.f32 %v2173, %v2219
      %v2236 = vadd.f32 %v2174, %v2220
      %v2237 = vadd.f32 %v2175, %v2221
      %v2238 = vadd.f32 %v2176, %v2222
      %v2239 = vadd.f32 %v2177, %v2223
      %v2240 = vadd.f32 %v2178, %v2224
      %v2241 = vadd.f32 %v2179, %v2225
      %v2242 = vadd.f32 %v2180, %v2226
      %v2243 = vadd.f32 %v2181, %v2227
      %v2244 = vadd.f32 %v2182, %v2228
      %v2245 = vadd.f32 %v2183, %v2229
      %v2246 = vadd.f32 %v2184, %v2230
      %2247 = vadd.xlane.f32.xlu0 %v2231
      %v2248 = vpop.xlane.xlu0 %2247
      %2249 = vadd.xlane.f32.xlu0 %v2232
      %v2250 = vpop.xlane.xlu0 %2249
      %2251 = vadd.xlane.f32.xlu0 %v2233
      %v2252 = vpop.xlane.xlu0 %2251
      %2253 = vadd.xlane.f32.xlu0 %v2234
      %v2254 = vpop.xlane.xlu0 %2253
      %2255 = vadd.xlane.f32.xlu0 %v2235
      %v2256 = vpop.xlane.xlu0 %2255
      %2257 = vadd.xlane.f32.xlu0 %v2236
      %v2258 = vpop.xlane.xlu0 %2257
      %2259 = vadd.xlane.f32.xlu0 %v2237
      %v2260 = vpop.xlane.xlu0 %2259
      %2261 = vadd.xlane.f32.xlu0 %v2238
      %v2262 = vpop.xlane.xlu0 %2261
      %2263 = vadd.xlane.f32.xlu0 %v2239
      %v2264 = vpop.xlane.xlu0 %2263
      %2265 = vadd.xlane.f32.xlu0 %v2240
      %v2266 = vpop.xlane.xlu0 %2265
      %2267 = vadd.xlane.f32.xlu0 %v2241
      %v2268 = vpop.xlane.xlu0 %2267
      %2269 = vadd.xlane.f32.xlu0 %v2242
      %v2270 = vpop.xlane.xlu0 %2269
      %2271 = vadd.xlane.f32.xlu0 %v2243
      %v2272 = vpop.xlane.xlu0 %2271
      %2273 = vadd.xlane.f32.xlu0 %v2244
      %v2274 = vpop.xlane.xlu0 %2273
      %2275 = vadd.xlane.f32.xlu0 %v2245
      %v2276 = vpop.xlane.xlu0 %2275
      %2277 = vadd.xlane.f32.xlu0 %v2246
      %v2278 = vpop.xlane.xlu0 %2277
      %v2279 = vmul.f32 %v2248, 0.0078125
      %v2280 = vmul.f32 %v2250, 0.0078125
      %v2281 = vmul.f32 %v2252, 0.0078125
      %v2282 = vmul.f32 %v2254, 0.0078125
      %v2283 = vmul.f32 %v2256, 0.0078125
      %v2284 = vmul.f32 %v2258, 0.0078125
      %v2285 = vmul.f32 %v2260, 0.0078125
      %v2286 = vmul.f32 %v2262, 0.0078125
      %v2287 = vmul.f32 %v2264, 0.0078125
      %v2288 = vmul.f32 %v2266, 0.0078125
      %v2289 = vmul.f32 %v2268, 0.0078125
      %v2290 = vmul.f32 %v2270, 0.0078125
      %v2291 = vmul.f32 %v2272, 0.0078125
      %v2292 = vmul.f32 %v2274, 0.0078125
      %v2293 = vmul.f32 %v2276, 0.0078125
      %v2294 = vmul.f32 %v2278, 0.0078125
      %v2295 = vmul.f32 %v2231, %v2231
      %v2296 = vmul.f32 %v2232, %v2232
      %v2297 = vmul.f32 %v2233, %v2233
      %v2298 = vmul.f32 %v2234, %v2234
      %v2299 = vmul.f32 %v2235, %v2235
      %v2300 = vmul.f32 %v2236, %v2236
      %v2301 = vmul.f32 %v2237, %v2237
      %v2302 = vmul.f32 %v2238, %v2238
      %v2303 = vmul.f32 %v2239, %v2239
      %v2304 = vmul.f32 %v2240, %v2240
      %v2305 = vmul.f32 %v2241, %v2241
      %v2306 = vmul.f32 %v2242, %v2242
      %v2307 = vmul.f32 %v2243, %v2243
      %v2308 = vmul.f32 %v2244, %v2244
      %v2309 = vmul.f32 %v2245, %v2245
      %v2310 = vmul.f32 %v2246, %v2246
      %2311 = vadd.xlane.f32.xlu0 %v2295
      %v2312 = vpop.xlane.xlu0 %2311
      %2313 = vadd.xlane.f32.xlu0 %v2296
      %v2314 = vpop.xlane.xlu0 %2313
      %2315 = vadd.xlane.f32.xlu0 %v2297
      %v2316 = vpop.xlane.xlu0 %2315
      %2317 = vadd.xlane.f32.xlu0 %v2298
      %v2318 = vpop.xlane.xlu0 %2317
      %2319 = vadd.xlane.f32.xlu0 %v2299
      %v2320 = vpop.xlane.xlu0 %2319
      %2321 = vadd.xlane.f32.xlu0 %v2300
      %v2322 = vpop.xlane.xlu0 %2321
      %2323 = vadd.xlane.f32.xlu0 %v2301
      %v2324 = vpop.xlane.xlu0 %2323
      %2325 = vadd.xlane.f32.xlu0 %v2302
      %v2326 = vpop.xlane.xlu0 %2325
      %2327 = vadd.xlane.f32.xlu0 %v2303
      %v2328 = vpop.xlane.xlu0 %2327
      %2329 = vadd.xlane.f32.xlu0 %v2304
      %v2330 = vpop.xlane.xlu0 %2329
      %2331 = vadd.xlane.f32.xlu0 %v2305
      %v2332 = vpop.xlane.xlu0 %2331
      %2333 = vadd.xlane.f32.xlu0 %v2306
      %v2334 = vpop.xlane.xlu0 %2333
      %2335 = vadd.xlane.f32.xlu0 %v2307
      %v2336 = vpop.xlane.xlu0 %2335
      %2337 = vadd.xlane.f32.xlu0 %v2308
      %v2338 = vpop.xlane.xlu0 %2337
      %2339 = vadd.xlane.f32.xlu0 %v2309
      %v2340 = vpop.xlane.xlu0 %2339
      %2341 = vadd.xlane.f32.xlu0 %v2310
      %v2342 = vpop.xlane.xlu0 %2341
      %v2343 = vmul.f32 %v2312, 0.0078125
      %v2344 = vmul.f32 %v2314, 0.0078125
      %v2345 = vmul.f32 %v2316, 0.0078125
      %v2346 = vmul.f32 %v2318, 0.0078125
      %v2347 = vmul.f32 %v2320, 0.0078125
      %v2348 = vmul.f32 %v2322, 0.0078125
      %v2349 = vmul.f32 %v2324, 0.0078125
      %v2350 = vmul.f32 %v2326, 0.0078125
      %v2351 = vmul.f32 %v2328, 0.0078125
      %v2352 = vmul.f32 %v2330, 0.0078125
      %v2353 = vmul.f32 %v2332, 0.0078125
      %v2354 = vmul.f32 %v2334, 0.0078125
      %v2355 = vmul.f32 %v2336, 0.0078125
      %v2356 = vmul.f32 %v2338, 0.0078125
      %v2357 = vmul.f32 %v2340, 0.0078125
      %v2358 = vmul.f32 %v2342, 0.0078125
      %v2359 = vmul.f32 %v2279, %v2279
      %v2360 = vmul.f32 %v2280, %v2280
      %v2361 = vmul.f32 %v2281, %v2281
      %v2362 = vmul.f32 %v2282, %v2282
      %v2363 = vmul.f32 %v2283, %v2283
      %v2364 = vmul.f32 %v2284, %v2284
      %v2365 = vmul.f32 %v2285, %v2285
      %v2366 = vmul.f32 %v2286, %v2286
      %v2367 = vmul.f32 %v2287, %v2287
      %v2368 = vmul.f32 %v2288, %v2288
      %v2369 = vmul.f32 %v2289, %v2289
      %v2370 = vmul.f32 %v2290, %v2290
      %v2371 = vmul.f32 %v2291, %v2291
      %v2372 = vmul.f32 %v2292, %v2292
      %v2373 = vmul.f32 %v2293, %v2293
      %v2374 = vmul.f32 %v2294, %v2294
      %v2375 = vsub.f32 %v2343, %v2359
      %v2376 = vsub.f32 %v2344, %v2360
      %v2377 = vsub.f32 %v2345, %v2361
      %v2378 = vsub.f32 %v2346, %v2362
      %v2379 = vsub.f32 %v2347, %v2363
      %v2380 = vsub.f32 %v2348, %v2364
      %v2381 = vsub.f32 %v2349, %v2365
      %v2382 = vsub.f32 %v2350, %v2366
      %v2383 = vsub.f32 %v2351, %v2367
      %v2384 = vsub.f32 %v2352, %v2368
      %v2385 = vsub.f32 %v2353, %v2369
      %v2386 = vsub.f32 %v2354, %v2370
      %v2387 = vsub.f32 %v2355, %v2371
      %v2388 = vsub.f32 %v2356, %v2372
      %v2389 = vsub.f32 %v2357, %v2373
      %v2390 = vsub.f32 %v2358, %v2374
      %v2391 = vsub.f32 %v2231, %v2279
      %v2392 = vsub.f32 %v2232, %v2280
      %v2393 = vsub.f32 %v2233, %v2281
      %v2394 = vsub.f32 %v2234, %v2282
      %v2395 = vsub.f32 %v2235, %v2283
      %v2396 = vsub.f32 %v2236, %v2284
      %v2397 = vsub.f32 %v2237, %v2285
      %v2398 = vsub.f32 %v2238, %v2286
      %v2399 = vsub.f32 %v2239, %v2287
      %v2400 = vsub.f32 %v2240, %v2288
      %v2401 = vsub.f32 %v2241, %v2289
      %v2402 = vsub.f32 %v2242, %v2290
      %v2403 = vsub.f32 %v2243, %v2291
      %v2404 = vsub.f32 %v2244, %v2292
      %v2405 = vsub.f32 %v2245, %v2293
      %v2406 = vsub.f32 %v2246, %v2294
      %v2407 = vadd.f32 %v2375, 1e-05
      %v2408 = vadd.f32 %v2376, 1e-05
      %v2409 = vadd.f32 %v2377, 1e-05
      %v2410 = vadd.f32 %v2378, 1e-05
      %v2411 = vadd.f32 %v2379, 1e-05
      %v2412 = vadd.f32 %v2380, 1e-05
      %v2413 = vadd.f32 %v2381, 1e-05
      %v2414 = vadd.f32 %v2382, 1e-05
      %v2415 = vadd.f32 %v2383, 1e-05
      %v2416 = vadd.f32 %v2384, 1e-05
      %v2417 = vadd.f32 %v2385, 1e-05
      %v2418 = vadd.f32 %v2386, 1e-05
      %v2419 = vadd.f32 %v2387, 1e-05
      %v2420 = vadd.f32 %v2388, 1e-05
      %v2421 = vadd.f32 %v2389, 1e-05
      %v2422 = vadd.f32 %v2390, 1e-05
      %v2423 = vrsqrt.pop %v2407
      %v2424 = vmul.f32 %v2423, %v2407
      %v2425 = vmul.f32 %v2424, %v2423
      %v2426 = vmul.f32 0.5, %v2425
      %v2427 = vsub.f32 1.5, %v2426
      %v2428 = vmul.f32 %v2423, %v2427
      %vm2429 = vweird.f32 %v2407
      %vm2430 = vweird.f32 %v2423
      %vm2431 = vmor %vm2429, %vm2430
      %v2432 = vsel %vm2431, %v2423, %v2428
      %v2433 = vrsqrt.pop %v2408
      %v2434 = vmul.f32 %v2433, %v2408
      %v2435 = vmul.f32 %v2434, %v2433
      %v2436 = vmul.f32 0.5, %v2435
      %v2437 = vsub.f32 1.5, %v2436
      %v2438 = vmul.f32 %v2433, %v2437
      %vm2439 = vweird.f32 %v2408
      %vm2440 = vweird.f32 %v2433
      %vm2441 = vmor %vm2439, %vm2440
      %v2442 = vsel %vm2441, %v2433, %v2438
      %v2443 = vrsqrt.pop %v2409
      %v2444 = vmul.f32 %v2443, %v2409
      %v2445 = vmul.f32 %v2444, %v2443
      %v2446 = vmul.f32 0.5, %v2445
      %v2447 = vsub.f32 1.5, %v2446
      %v2448 = vmul.f32 %v2443, %v2447
      %vm2449 = vweird.f32 %v2409
      %vm2450 = vweird.f32 %v2443
      %vm2451 = vmor %vm2449, %vm2450
      %v2452 = vsel %vm2451, %v2443, %v2448
      %v2453 = vrsqrt.pop %v2410
      %v2454 = vmul.f32 %v2453, %v2410
      %v2455 = vmul.f32 %v2454, %v2453
      %v2456 = vmul.f32 0.5, %v2455
      %v2457 = vsub.f32 1.5, %v2456
      %v2458 = vmul.f32 %v2453, %v2457
      %vm2459 = vweird.f32 %v2410
      %vm2460 = vweird.f32 %v2453
      %vm2461 = vmor %vm2459, %vm2460
      %v2462 = vsel %vm2461, %v2453, %v2458
      %v2463 = vrsqrt.pop %v2411
      %v2464 = vmul.f32 %v2463, %v2411
      %v2465 = vmul.f32 %v2464, %v2463
      %v2466 = vmul.f32 0.5, %v2465
      %v2467 = vsub.f32 1.5, %v2466
      %v2468 = vmul.f32 %v2463, %v2467
      %vm2469 = vweird.f32 %v2411
      %vm2470 = vweird.f32 %v2463
      %vm2471 = vmor %vm2469, %vm2470
      %v2472 = vsel %vm2471, %v2463, %v2468
      %v2473 = vrsqrt.pop %v2412
      %v2474 = vmul.f32 %v2473, %v2412
      %v2475 = vmul.f32 %v2474, %v2473
      %v2476 = vmul.f32 0.5, %v2475
      %v2477 = vsub.f32 1.5, %v2476
      %v2478 = vmul.f32 %v2473, %v2477
      %vm2479 = vweird.f32 %v2412
      %vm2480 = vweird.f32 %v2473
      %vm2481 = vmor %vm2479, %vm2480
      %v2482 = vsel %vm2481, %v2473, %v2478
      %v2483 = vrsqrt.pop %v2413
      %v2484 = vmul.f32 %v2483, %v2413
      %v2485 = vmul.f32 %v2484, %v2483
      %v2486 = vmul.f32 0.5, %v2485
      %v2487 = vsub.f32 1.5, %v2486
      %v2488 = vmul.f32 %v2483, %v2487
      %vm2489 = vweird.f32 %v2413
      %vm2490 = vweird.f32 %v2483
      %vm2491 = vmor %vm2489, %vm2490
      %v2492 = vsel %vm2491, %v2483, %v2488
      %v2493 = vrsqrt.pop %v2414
      %v2494 = vmul.f32 %v2493, %v2414
      %v2495 = vmul.f32 %v2494, %v2493
      %v2496 = vmul.f32 0.5, %v2495
      %v2497 = vsub.f32 1.5, %v2496
      %v2498 = vmul.f32 %v2493, %v2497
      %vm2499 = vweird.f32 %v2414
      %vm2500 = vweird.f32 %v2493
      %vm2501 = vmor %vm2499, %vm2500
      %v2502 = vsel %vm2501, %v2493, %v2498
      %v2503 = vrsqrt.pop %v2415
      %v2504 = vmul.f32 %v2503, %v2415
      %v2505 = vmul.f32 %v2504, %v2503
      %v2506 = vmul.f32 0.5, %v2505
      %v2507 = vsub.f32 1.5, %v2506
      %v2508 = vmul.f32 %v2503, %v2507
      %vm2509 = vweird.f32 %v2415
      %vm2510 = vweird.f32 %v2503
      %vm2511 = vmor %vm2509, %vm2510
      %v2512 = vsel %vm2511, %v2503, %v2508
      %v2513 = vrsqrt.pop %v2416
      %v2514 = vmul.f32 %v2513, %v2416
      %v2515 = vmul.f32 %v2514, %v2513
      %v2516 = vmul.f32 0.5, %v2515
      %v2517 = vsub.f32 1.5, %v2516
      %v2518 = vmul.f32 %v2513, %v2517
      %vm2519 = vweird.f32 %v2416
      %vm2520 = vweird.f32 %v2513
      %vm2521 = vmor %vm2519, %vm2520
      %v2522 = vsel %vm2521, %v2513, %v2518
      %v2523 = vrsqrt.pop %v2417
      %v2524 = vmul.f32 %v2523, %v2417
      %v2525 = vmul.f32 %v2524, %v2523
      %v2526 = vmul.f32 0.5, %v2525
      %v2527 = vsub.f32 1.5, %v2526
      %v2528 = vmul.f32 %v2523, %v2527
      %vm2529 = vweird.f32 %v2417
      %vm2530 = vweird.f32 %v2523
      %vm2531 = vmor %vm2529, %vm2530
      %v2532 = vsel %vm2531, %v2523, %v2528
      %v2533 = vrsqrt.pop %v2418
      %v2534 = vmul.f32 %v2533, %v2418
      %v2535 = vmul.f32 %v2534, %v2533
      %v2536 = vmul.f32 0.5, %v2535
      %v2537 = vsub.f32 1.5, %v2536
      %v2538 = vmul.f32 %v2533, %v2537
      %vm2539 = vweird.f32 %v2418
      %vm2540 = vweird.f32 %v2533
      %vm2541 = vmor %vm2539, %vm2540
      %v2542 = vsel %vm2541, %v2533, %v2538
      %v2543 = vrsqrt.pop %v2419
      %v2544 = vmul.f32 %v2543, %v2419
      %v2545 = vmul.f32 %v2544, %v2543
      %v2546 = vmul.f32 0.5, %v2545
      %v2547 = vsub.f32 1.5, %v2546
      %v2548 = vmul.f32 %v2543, %v2547
      %vm2549 = vweird.f32 %v2419
      %vm2550 = vweird.f32 %v2543
      %vm2551 = vmor %vm2549, %vm2550
      %v2552 = vsel %vm2551, %v2543, %v2548
      %v2553 = vrsqrt.pop %v2420
      %v2554 = vmul.f32 %v2553, %v2420
      %v2555 = vmul.f32 %v2554, %v2553
      %v2556 = vmul.f32 0.5, %v2555
      %v2557 = vsub.f32 1.5, %v2556
      %v2558 = vmul.f32 %v2553, %v2557
      %vm2559 = vweird.f32 %v2420
      %vm2560 = vweird.f32 %v2553
      %vm2561 = vmor %vm2559, %vm2560
      %v2562 = vsel %vm2561, %v2553, %v2558
      %v2563 = vrsqrt.pop %v2421
      %v2564 = vmul.f32 %v2563, %v2421
      %v2565 = vmul.f32 %v2564, %v2563
      %v2566 = vmul.f32 0.5, %v2565
      %v2567 = vsub.f32 1.5, %v2566
      %v2568 = vmul.f32 %v2563, %v2567
      %vm2569 = vweird.f32 %v2421
      %vm2570 = vweird.f32 %v2563
      %vm2571 = vmor %vm2569, %vm2570
      %v2572 = vsel %vm2571, %v2563, %v2568
      %v2573 = vrsqrt.pop %v2422
      %v2574 = vmul.f32 %v2573, %v2422
      %v2575 = vmul.f32 %v2574, %v2573
      %v2576 = vmul.f32 0.5, %v2575
      %v2577 = vsub.f32 1.5, %v2576
      %v2578 = vmul.f32 %v2573, %v2577
      %vm2579 = vweird.f32 %v2422
      %vm2580 = vweird.f32 %v2573
      %vm2581 = vmor %vm2579, %vm2580
      %v2582 = vsel %vm2581, %v2573, %v2578
      %v2583 = vmul.f32 %v2391, %v2432
      %v2584 = vmul.f32 %v2392, %v2442
      %v2585 = vmul.f32 %v2393, %v2452
      %v2586 = vmul.f32 %v2394, %v2462
      %v2587 = vmul.f32 %v2395, %v2472
      %v2588 = vmul.f32 %v2396, %v2482
      %v2589 = vmul.f32 %v2397, %v2492
      %v2590 = vmul.f32 %v2398, %v2502
      %v2591 = vmul.f32 %v2399, %v2512
      %v2592 = vmul.f32 %v2400, %v2522
      %v2593 = vmul.f32 %v2401, %v2532
      %v2594 = vmul.f32 %v2402, %v2542
      %v2595 = vmul.f32 %v2403, %v2552
      %v2596 = vmul.f32 %v2404, %v2562
      %v2597 = vmul.f32 %v2405, %v2572
      %v2598 = vmul.f32 %v2406, %v2582
      %v2600 = vperm.slane %v1247, 0
      %v2602 = vmul.f32 %v2583, %v2600
      %v2603 = vmul.f32 %v2584, %v2600
      %v2604 = vmul.f32 %v2585, %v2600
      %v2605 = vmul.f32 %v2586, %v2600
      %v2606 = vmul.f32 %v2587, %v2600
      %v2607 = vmul.f32 %v2588, %v2600
      %v2608 = vmul.f32 %v2589, %v2600
      %v2609 = vmul.f32 %v2590, %v2600
      %v2610 = vmul.f32 %v2591, %v2600
      %v2611 = vmul.f32 %v2592, %v2600
      %v2612 = vmul.f32 %v2593, %v2600
      %v2613 = vmul.f32 %v2594, %v2600
      %v2614 = vmul.f32 %v2595, %v2600
      %v2615 = vmul.f32 %v2596, %v2600
      %v2616 = vmul.f32 %v2597, %v2600
      %v2617 = vmul.f32 %v2598, %v2600
      %v2619 = vperm.slane %v1248, 0
      %v2621 = vadd.f32 %v2602, %v2619
      %v2622 = vadd.f32 %v2603, %v2619
      %v2623 = vadd.f32 %v2604, %v2619
      %v2624 = vadd.f32 %v2605, %v2619
      %v2625 = vadd.f32 %v2606, %v2619
      %v2626 = vadd.f32 %v2607, %v2619
      %v2627 = vadd.f32 %v2608, %v2619
      %v2628 = vadd.f32 %v2609, %v2619
      %v2629 = vadd.f32 %v2610, %v2619
      %v2630 = vadd.f32 %v2611, %v2619
      %v2631 = vadd.f32 %v2612, %v2619
      %v2632 = vadd.f32 %v2613, %v2619
      %v2633 = vadd.f32 %v2614, %v2619
      %v2634 = vadd.f32 %v2615, %v2619
      %v2635 = vadd.f32 %v2616, %v2619
      %v2636 = vadd.f32 %v2617, %v2619
      %v2637 = vpack.c.bf16 %v2622, %v2621
      %v2638 = vpack.c.bf16 %v2624, %v2623
      %v2639 = vpack.c.bf16 %v2626, %v2625
      %v2640 = vpack.c.bf16 %v2628, %v2627
      %v2641 = vpack.c.bf16 %v2630, %v2629
      %v2642 = vpack.c.bf16 %v2632, %v2631
      %v2643 = vpack.c.bf16 %v2634, %v2633
      %v2644 = vpack.c.bf16 %v2636, %v2635
      %v2645 = vld [vmem:[#allocation8] sm:$0xf]
      %v2646 = vld [vmem:[#allocation8 + $0x4] sm:$0xf]
      %v2647 = vld [vmem:[#allocation8 + $0x8] sm:$0xf]
      %v2648 = vld [vmem:[#allocation8 + $0xc] sm:$0xf]
      %v2649 = vld [vmem:[#allocation8 + $0x10] sm:$0xf]
      %v2650 = vld [vmem:[#allocation8 + $0x14] sm:$0xf]
      %v2651 = vld [vmem:[#allocation8 + $0x18] sm:$0xf]
      %v2652 = vld [vmem:[#allocation8 + $0x1c] sm:$0xf]
      %v2653 = vld [vmem:[#allocation8 + $0x20] sm:$0xf]
      %v2654 = vld [vmem:[#allocation8 + $0x24] sm:$0xf]
      %v2655 = vld [vmem:[#allocation8 + $0x28] sm:$0xf]
      %v2656 = vld [vmem:[#allocation8 + $0x2c] sm:$0xf]
      %v2657 = vld [vmem:[#allocation8 + $0x30] sm:$0xf]
      %v2658 = vld [vmem:[#allocation8 + $0x34] sm:$0xf]
      %v2659 = vld [vmem:[#allocation8 + $0x38] sm:$0xf]
      %v2660 = vld [vmem:[#allocation8 + $0x3c] sm:$0xf]
      %v2677 = vunpack.c.l.b16 %v2645
      %v2678 = vunpack.c.l.b16 %v2646
      %v2679 = vunpack.c.l.b16 %v2647
      %v2680 = vunpack.c.l.b16 %v2648
      %v2681 = vunpack.c.l.b16 %v2649
      %v2682 = vunpack.c.l.b16 %v2650
      %v2683 = vunpack.c.l.b16 %v2651
      %v2684 = vunpack.c.l.b16 %v2652
      %v2685 = vunpack.c.l.b16 %v2653
      %v2686 = vunpack.c.l.b16 %v2654
      %v2687 = vunpack.c.l.b16 %v2655
      %v2688 = vunpack.c.l.b16 %v2656
      %v2689 = vunpack.c.l.b16 %v2657
      %v2690 = vunpack.c.l.b16 %v2658
      %v2691 = vunpack.c.l.b16 %v2659
      %v2692 = vunpack.c.l.b16 %v2660
      %v2693 = vpack.c.b16 %v2678, %v2677
      %v2694 = vpack.c.b16 %v2680, %v2679
      %v2695 = vpack.c.b16 %v2682, %v2681
      %v2696 = vpack.c.b16 %v2684, %v2683
      %v2697 = vpack.c.b16 %v2686, %v2685
      %v2698 = vpack.c.b16 %v2688, %v2687
      %v2699 = vpack.c.b16 %v2690, %v2689
      %v2700 = vpack.c.b16 %v2692, %v2691
      %2709 = vmatpush.bf16.msra.mxu0 %v2700
      %2710 = vmatpush.bf16.msra.mxu0 %v2699
      %2711 = vmatpush.bf16.msra.mxu0 %v2698
      %2712 = vmatpush.bf16.msra.mxu0 %v2697
      %2713 = vmatpush.bf16.msra.mxu0 %v2696
      %2714 = vmatpush.bf16.msra.mxu0 %v2695
      %2715 = vmatpush.bf16.msra.mxu0 %v2694
      %2716 = vmatpush.bf16.msra.mxu0 %v2693
      %2717 = vmatmul.bf16.gmra.mxu0 %v2637
      %v2718 = vpop.f32.mrf.mxu0
      %v2719 = vadd.f32 0.0, %v2718
      %v2720 = vpop.f32.mrf.mxu0
      %v2721 = vadd.f32 0.0, %v2720
      %2722 = vmatmul.bf16.gmra.mxu0 %v2638
      %v2723 = vpop.f32.mrf.mxu0
      %v2724 = vadd.f32 0.0, %v2723
      %v2725 = vpop.f32.mrf.mxu0
      %v2726 = vadd.f32 0.0, %v2725
      %2727 = vmatmul.bf16.gmra.mxu0 %v2639
      %v2728 = vpop.f32.mrf.mxu0
      %v2729 = vadd.f32 0.0, %v2728
      %v2730 = vpop.f32.mrf.mxu0
      %v2731 = vadd.f32 0.0, %v2730
      %2732 = vmatmul.bf16.gmra.mxu0 %v2640
      %v2733 = vpop.f32.mrf.mxu0
      %v2734 = vadd.f32 0.0, %v2733
      %v2735 = vpop.f32.mrf.mxu0
      %v2736 = vadd.f32 0.0, %v2735
      %2737 = vmatmul.bf16.gmra.mxu0 %v2641
      %v2738 = vpop.f32.mrf.mxu0
      %v2739 = vadd.f32 0.0, %v2738
      %v2740 = vpop.f32.mrf.mxu0
      %v2741 = vadd.f32 0.0, %v2740
      %2742 = vmatmul.bf16.gmra.mxu0 %v2642
      %v2743 = vpop.f32.mrf.mxu0
      %v2744 = vadd.f32 0.0, %v2743
      %v2745 = vpop.f32.mrf.mxu0
      %v2746 = vadd.f32 0.0, %v2745
      %2747 = vmatmul.bf16.gmra.mxu0 %v2643
      %v2748 = vpop.f32.mrf.mxu0
      %v2749 = vadd.f32 0.0, %v2748
      %v2750 = vpop.f32.mrf.mxu0
      %v2751 = vadd.f32 0.0, %v2750
      %2752 = vmatmul.bf16.gmra.mxu0 %v2644
      %v2753 = vpop.f32.mrf.mxu0
      %v2754 = vadd.f32 0.0, %v2753
      %v2755 = vpop.f32.mrf.mxu0
      %v2756 = vadd.f32 0.0, %v2755
      %2757 = vdwg.mxu0
      %s2758 = smul.u32 %s1250, 128
      %s2759 = scalar_lea.vmem [#allocation4], %s2758
      %v2760 = vld [vmem:[%s2759] sm:$0xff]
      %v2761 = vld [vmem:[%s2759 + $0x8] sm:$0xff]
      %v2762 = vld [vmem:[%s2759 + $0x10] sm:$0xff]
      %v2763 = vld [vmem:[%s2759 + $0x18] sm:$0xff]
      %v2764 = vld [vmem:[%s2759 + $0x20] sm:$0xff]
      %v2765 = vld [vmem:[%s2759 + $0x28] sm:$0xff]
      %v2766 = vld [vmem:[%s2759 + $0x30] sm:$0xff]
      %v2767 = vld [vmem:[%s2759 + $0x38] sm:$0xff]
      %v2768 = vld [vmem:[%s2759 + $0x40] sm:$0xff]
      %v2769 = vld [vmem:[%s2759 + $0x48] sm:$0xff]
      %v2770 = vld [vmem:[%s2759 + $0x50] sm:$0xff]
      %v2771 = vld [vmem:[%s2759 + $0x58] sm:$0xff]
      %v2772 = vld [vmem:[%s2759 + $0x60] sm:$0xff]
      %v2773 = vld [vmem:[%s2759 + $0x68] sm:$0xff]
      %v2774 = vld [vmem:[%s2759 + $0x70] sm:$0xff]
      %v2775 = vld [vmem:[%s2759 + $0x78] sm:$0xff]
      %v2776 = vmul.f32 %v2719, %v2760
      %v2777 = vmul.f32 %v2721, %v2761
      %v2778 = vmul.f32 %v2724, %v2762
      %v2779 = vmul.f32 %v2726, %v2763
      %v2780 = vmul.f32 %v2729, %v2764
      %v2781 = vmul.f32 %v2731, %v2765
      %v2782 = vmul.f32 %v2734, %v2766
      %v2783 = vmul.f32 %v2736, %v2767
      %v2784 = vmul.f32 %v2739, %v2768
      %v2785 = vmul.f32 %v2741, %v2769
      %v2786 = vmul.f32 %v2744, %v2770
      %v2787 = vmul.f32 %v2746, %v2771
      %v2788 = vmul.f32 %v2749, %v2772
      %v2789 = vmul.f32 %v2751, %v2773
      %v2790 = vmul.f32 %v2754, %v2774
      %v2791 = vmul.f32 %v2756, %v2775
      %s2792 = scalar_lea.vmem [#allocation10], %s2758
      %2793 = vst [vmem:[%s2792] sm:$0xff] %v2776
      %2794 = vst [vmem:[%s2792 + $0x8] sm:$0xff] %v2777
      %2795 = vst [vmem:[%s2792 + $0x10] sm:$0xff] %v2778
      %2796 = vst [vmem:[%s2792 + $0x18] sm:$0xff] %v2779
      %2797 = vst [vmem:[%s2792 + $0x20] sm:$0xff] %v2780
      %2798 = vst [vmem:[%s2792 + $0x28] sm:$0xff] %v2781
      %2799 = vst [vmem:[%s2792 + $0x30] sm:$0xff] %v2782
      %2800 = vst [vmem:[%s2792 + $0x38] sm:$0xff] %v2783
      %2801 = vst [vmem:[%s2792 + $0x40] sm:$0xff] %v2784
      %2802 = vst [vmem:[%s2792 + $0x48] sm:$0xff] %v2785
      %2803 = vst [vmem:[%s2792 + $0x50] sm:$0xff] %v2786
      %2804 = vst [vmem:[%s2792 + $0x58] sm:$0xff] %v2787
      %2805 = vst [vmem:[%s2792 + $0x60] sm:$0xff] %v2788
      %2806 = vst [vmem:[%s2792 + $0x68] sm:$0xff] %v2789
      %2807 = vst [vmem:[%s2792 + $0x70] sm:$0xff] %v2790
      %2808 = vst [vmem:[%s2792 + $0x78] sm:$0xff] %v2791
    $region53: #{tpu_custom_call.1} parent=1 // loop_footer
      %s1254 = sadd.s32 1, %s1250
    $region54: #{tpu_custom_call.1} parent=1 // loop_footer_branch
      %1249 = sbr.rel target = $region50
    $region55: #{tpu_custom_call.1} parent=1 // loop_exit
      _
    // Predicated region
    $region56: #{tpu_custom_call.1} parent=1 // pred_check
      _
    $region57: #{tpu_custom_call.1} parent=1 // pred_check_branch
      %2810 = sbr.rel (0) target = $region59
    $region58: #{tpu_custom_call.1} parent=1 // pred_region
      %2812 = vsyncadd [#allocation7], 0
      %s2813 = sshll.u32 [#allocation10], 4
      %s2814 = int_to_ptr.vmem [resolvable:$true] %s2813
      %s2815 = sshll.u32 %s8, 4
      %s2816 = int_to_ptr.hbm [resolvable:$true] %s2815
      %2821 = dma.vmem_to_hbm [thread:$0]  %s2814, 4096, %s2816, [#allocation7], 128, 128, 8
    $region59: #{tpu_custom_call.1} parent=1 // pred_fallthru
      _
    // Predicated region
    $region60: #{tpu_custom_call.1} parent=1 // pred_check
      _
    $region61: #{tpu_custom_call.1} parent=1 // pred_check_branch
      %2823 = sbr.rel (0) target = $region63
    $region62: #{tpu_custom_call.1} parent=1 // pred_region
      %2825 = dma.done [#allocation7], 4096
    $region63: #{tpu_custom_call.1} parent=1 // pred_fallthru
      _
    %2826 = vsyncpa [#allocation6], 1
    %2827 = vsyncpa [#allocation9], 1
    %2828 = vsyncpa [#allocation7], 1

</llo_original>
